<compile_context>
chip_gen: v5e
topology: v5e:2x2
jax: 0.10.0
libtpu: 0.0.40
codegen_flags: <defaults>
</compile_context>

<pallas_src>
import functools

import jax
import jax.numpy as jnp
from jax import lax
from jax.experimental import pallas as pl
from jax.experimental.pallas import tpu as pltpu


def _round_up(x, m):
    return ((x + m - 1) // m) * m


def _attention_cell_kernel(
    proj_ref,      # (Bt, T, H)   i2h(batch_H), stream dtype (bf16 by default)
    bh_ref,        # (Bt, T, D)   encoder features, stream dtype
    h_ref,         # (Bt, H)      previous LSTM hidden state (f32)
    c_ref,         # (Bt, H)      previous LSTM cell state (f32)
    oh_ref,        # (Bt, E)      char one-hots (MXU dtype)
    wh2h_ref,      # (H, H)       h2h weight^T (MXU dtype)
    bh2h_ref,      # (1, H)       h2h bias (f32)
    wscore_ref,    # (1, H)       score weight row (f32, VPU path)
    wih_ctx_ref,   # (D, 4H)      LSTM W_ih, context part^T (MXU dtype)
    wih_emb_ref,   # (E, 4H)      LSTM W_ih, one-hot part^T (MXU dtype)
    whh_ref,       # (H, 4H)      LSTM W_hh^T (MXU dtype)
    b_lstm_ref,    # (1, 4H)      b_ih + b_hh pre-summed (f32)
    h_out_ref,     # (Bt, H)
    c_out_ref,     # (Bt, H)
    alpha_ref,     # (Bt, T_out)  attention weights, T padded to a 128 multiple
    *,
    hidden_size,
    seq_len,
    mm_dtype,
):
    f32 = jnp.float32
    Hd = hidden_size
    T = seq_len

    h_prev_mm = h_ref[...].astype(mm_dtype)      # cast once, reused by two dots
    c_prev = c_ref[...].astype(f32)

    # prev_hidden_proj = h2h(h_prev): (Bt, H) batched MXU matmul.
    hp = (jnp.dot(h_prev_mm, wh2h_ref[...], preferred_element_type=f32)
          + bh2h_ref[...].astype(f32))

    # e = score(tanh(batch_H_proj + prev_hidden_proj)) -- the width-1 Linear is
    # a VPU multiply + lane reduce over H (keeps the MXU free).
    t = jnp.tanh(proj_ref[...].astype(f32) + hp[:, None, :])    # (Bt, T, H)
    w_row = wscore_ref[...].astype(f32).reshape(1, 1, Hd)
    e = jnp.sum(t * w_row, axis=-1)                             # (Bt, T)

    # softmax over T (T lives on the lane axis -> lane reduce).
    e_max = jnp.max(e, axis=-1, keepdims=True)
    p = jnp.exp(e - e_max)
    alpha = p / jnp.sum(p, axis=-1, keepdims=True)              # (Bt, T)

    # context = sum_t alpha_t * batch_H_t -- the q=1 bmm done as a VPU multiply
    # + sublane reduce over T instead of a degenerate MXU matmul.
    bh = bh_ref[...].astype(f32)                                # (Bt, T, D)
    ctx = jnp.sum(alpha[:, :, None] * bh, axis=1)               # (Bt, D)

    # LSTMCell on concat([context, char_onehots]); the concat is folded into two
    # matmuls against the split W_ih, and b_ih + b_hh is pre-summed.
    # TODO(synk): for large charsets, replace the one-hot matmul with an
    # embedding-row gather driven by int32 indices (scalar prefetch).
    gates = (
        jnp.dot(ctx.astype(mm_dtype), wih_ctx_ref[...], preferred_element_type=f32)
        + jnp.dot(oh_ref[...].astype(mm_dtype), wih_emb_ref[...],
                  preferred_element_type=f32)
        + jnp.dot(h_prev_mm, whh_ref[...], preferred_element_type=f32)
        + b_lstm_ref[...].astype(f32)
    )                                                           # (Bt, 4H)

    # TODO(synk): at production hidden sizes that are not multiples of 128, pad
    # H (and 4H) in the wrapper so these slices land on vreg lane boundaries.
    i_g = jax.nn.sigmoid(gates[:, 0 * Hd:1 * Hd])
    f_g = jax.nn.sigmoid(gates[:, 1 * Hd:2 * Hd])
    g_g = jnp.tanh(gates[:, 2 * Hd:3 * Hd])
    o_g = jax.nn.sigmoid(gates[:, 3 * Hd:4 * Hd])

    c_new = f_g * c_prev + i_g * g_g
    h_new = o_g * jnp.tanh(c_new)

    h_out_ref[...] = h_new.astype(h_out_ref.dtype)
    c_out_ref[...] = c_new.astype(c_out_ref.dtype)

    # Lane-dense alpha store: output block is T padded up to a 128 multiple so
    # the store is an unmasked vst; the wrapper slices [:, :T].
    t_out = alpha_ref.shape[-1]
    if t_out == T:
        alpha_ref[...] = alpha.astype(alpha_ref.dtype)
    else:
        pad = jnp.zeros((alpha.shape[0], t_out - T), dtype=alpha.dtype)
        alpha_ref[...] = jnp.concatenate([alpha, pad], axis=-1).astype(alpha_ref.dtype)


@functools.lru_cache(maxsize=1)
def _vmem_limit_bytes():
    """~75% of physical VMEM (96 MiB on v5e/v6e, 48 MiB on v7x); assumes a
    64 MiB part if the hardware query is unavailable."""
    phys = 64 * 1024 * 1024
    try:
        phys = int(pltpu.get_tpu_info().vmem_capacity_bytes)
    except Exception:
        pass
    limit = (phys * 3) // 4
    return int(min(max(limit, 32 * 1024 * 1024), 100 * 1024 * 1024))


def precompute_attention_streams(batch_H, params, *, stream_dtype=jnp.bfloat16):
    """Per-sequence prep (call ONCE before the per-token decode loop):
    casts batch_H to the streamed storage dtype and hoists i2h(batch_H)."""
    proj = jnp.einsum("btd,hd->bth", batch_H.astype(jnp.float32),
                      params["w_i2h"].astype(jnp.float32),
                      precision=lax.Precision.HIGHEST)
    return batch_H.astype(stream_dtype), proj.astype(stream_dtype)


def _choose_block_b(B, T, D, Hd, E, t_out, stream_bytes, mm_bytes,
                    vmem_limit, single_buffer_weights):
    if B <= 8:
        return B
    wbuf = 1 if single_buffer_weights else 2
    weight_bytes = wbuf * ((Hd * Hd + (D + E + Hd) * 4 * Hd) * mm_bytes
                           + 6 * Hd * 4)
    # Per-batch-row VMEM, double-buffered streams / states / outputs.
    per_row = (2 * T * (Hd + D) * stream_bytes          # proj + batch_H tiles
               + 2 * (2 * Hd + E) * 4                   # h, c, onehots
               + 2 * (2 * Hd + t_out) * 4)              # h_out, c_out, alpha
    budget = int(0.6 * vmem_limit) - weight_bytes
    block_b = max(8, min(256, budget // max(per_row, 1)))
    block_b = (block_b // 8) * 8
    # Keep >= 2 grid steps so the "parallel" batch axis can span both v7x
    # TensorCores (harmless on single-TC v5e/v6e).
    if block_b >= B and B >= 16:
        block_b = max(8, (((B + 1) // 2) // 8) * 8)
    return int(min(block_b, B))


def attention_cell(prev_hidden, batch_H, char_onehots, params, *,
                   batch_H_proj=None, block_b=None,
                   matmul_dtype=jnp.bfloat16, single_buffer_weights=True,
                   interpret=False):
    """prev_hidden = (h, c) each (B, H); batch_H (B, T, D); char_onehots (B, E).

    batch_H_proj: optional precomputed i2h(batch_H) (see
      precompute_attention_streams) -- in a decode loop compute it once and
      pass it (and the pre-cast batch_H) every step.
    matmul_dtype: MXU-operand and stream-storage dtype (bf16 default, f32 for
      bit-accurate checks); accumulation and elementwise math stay in f32.
    """
    h0, c0 = prev_hidden
    B, T, D = batch_H.shape
    Hd = h0.shape[1]
    E = char_onehots.shape[1]
    f32 = jnp.float32
    mm = jnp.dtype(matmul_dtype)
    stream_dtype = mm
    t_out = _round_up(T, 128)          # lane-dense alpha output width

    # --- constant weight prep (transposed to (in, out); biases folded) ---
    w_h2h_t = params["w_h2h"].T.astype(mm)                     # (H, H)
    b_h2h = params["b_h2h"].reshape(1, Hd).astype(f32)         # (1, H)
    w_score_row = params["w_score"].reshape(1, Hd).astype(f32)  # (1, H)
    w_ih = params["w_ih"]                                      # (4H, D+E)
    w_ih_ctx_t = w_ih[:, :D].T.astype(mm)                      # (D, 4H)
    w_ih_emb_t = w_ih[:, D:].T.astype(mm)                      # (E, 4H)
    w_hh_t = params["w_hh"].T.astype(mm)                       # (H, 4H)
    b_lstm = (params["b_ih"] + params["b_hh"]).reshape(1, 4 * Hd).astype(f32)

    # --- streamed inputs: bf16 storage by default, i2h hoisted out of the
    # recurrent kernel (compute once per sequence, not per token). ---
    if batch_H_proj is None:
        batch_H, batch_H_proj = precompute_attention_streams(
            batch_H, params, stream_dtype=stream_dtype)
    batch_H = batch_H.astype(stream_dtype)
    batch_H_proj = batch_H_proj.astype(stream_dtype)

    vmem_limit = _vmem_limit_bytes()
    if block_b is None:
        block_b = _choose_block_b(B, T, D, Hd, E, t_out,
                                  jnp.dtype(stream_dtype).itemsize, mm.itemsize,
                                  vmem_limit, single_buffer_weights)
    block_b = min(block_b, B)
    if block_b < B and block_b % 8 != 0:
        block_b = max(8, (block_b // 8) * 8)
    nb = -(-B // block_b)
    B_pad = nb * block_b

    def pad_b(x, dtype):
        x = x.astype(dtype)
        if B_pad == B:
            return x
        pad = [(0, B_pad - B)] + [(0, 0)] * (x.ndim - 1)
        return jnp.pad(x, pad)

    proj_p = pad_b(batch_H_proj, stream_dtype)
    bh_p = pad_b(batch_H, stream_dtype)
    h_p = pad_b(h0, f32)
    c_p = pad_b(c0, f32)
    oh_p = pad_b(char_onehots, mm)

    kernel = functools.partial(_attention_cell_kernel,
                               hidden_size=Hd, seq_len=T, mm_dtype=mm)

    def run(weight_pipeline_mode, alpha_width):
        def const_spec(shape):
            idx = lambda b: (0,) * len(shape)
            if weight_pipeline_mode is None:
                return pl.BlockSpec(shape, idx)
            return pl.BlockSpec(shape, idx, pipeline_mode=weight_pipeline_mode)

        grid_spec = pltpu.PrefetchScalarGridSpec(
            num_scalar_prefetch=0,
            grid=(nb,),
            in_specs=[
                pl.BlockSpec((block_b, T, Hd), lambda b: (b, 0, 0)),   # i2h(batch_H)
                pl.BlockSpec((block_b, T, D), lambda b: (b, 0, 0)),    # batch_H
                pl.BlockSpec((block_b, Hd), lambda b: (b, 0)),         # h_prev
                pl.BlockSpec((block_b, Hd), lambda b: (b, 0)),         # c_prev
                pl.BlockSpec((block_b, E), lambda b: (b, 0)),          # char_onehots
                const_spec((Hd, Hd)),                                  # w_h2h^T
                const_spec((1, Hd)),                                   # b_h2h
                const_spec((1, Hd)),                                   # w_score row
                const_spec((D, 4 * Hd)),                               # w_ih ctx^T
                const_spec((E, 4 * Hd)),                               # w_ih emb^T
                const_spec((Hd, 4 * Hd)),                              # w_hh^T
                const_spec((1, 4 * Hd)),                               # b_ih + b_hh
            ],
            out_specs=[
                pl.BlockSpec((block_b, Hd), lambda b: (b, 0)),         # h_new
                pl.BlockSpec((block_b, Hd), lambda b: (b, 0)),         # c_new
                pl.BlockSpec((block_b, alpha_width), lambda b: (b, 0)),  # alpha
            ],
        )
        return pl.pallas_call(
            kernel,
            out_shape=(
                jax.ShapeDtypeStruct((B_pad, Hd), f32),
                jax.ShapeDtypeStruct((B_pad, Hd), f32),
                jax.ShapeDtypeStruct((B_pad, alpha_width), f32),
            ),
            grid_spec=grid_spec,
            compiler_params=pltpu.CompilerParams(
                dimension_semantics=("parallel",),   # batch tiles -> both v7x TCs
                vmem_limit_bytes=vmem_limit,
            ),
            interpret=interpret,
        )(proj_p, bh_p, h_p, c_p, oh_p,
          w_h2h_t, b_h2h, w_score_row,
          w_ih_ctx_t, w_ih_emb_t, w_hh_t, b_lstm)

    pipeline_mode = None
    if single_buffer_weights:
        try:
            pipeline_mode = pl.Buffered(1)   # constants: 1 VMEM buffer, not 2
        except Exception:
            pipeline_mode = None

    try:
        h_new, c_new, alpha_bt = run(pipeline_mode, t_out)
    except Exception:
        if pipeline_mode is None and t_out == T:
            raise
        # TODO(synk): conservative fallback if this JAX build rejects
        # Buffered(1) or the unaligned lane concat; numerics are identical.
        h_new, c_new, alpha_bt = run(None, T)

    h_new = h_new[:B]
    c_new = c_new[:B]
    alpha = alpha_bt[:B, :T].reshape(B, T, 1)   # match the PyTorch output shape
    return (h_new, c_new), alpha


def attention_cell_ref(prev_hidden, batch_H, char_onehots, params):
    """Pure-JAX reference mirroring the PyTorch forward (HIGHEST precision)."""
    h0, c0 = prev_hidden
    hi = lax.Precision.HIGHEST
    batch_H_proj = jnp.einsum("btd,hd->bth", batch_H, params["w_i2h"], precision=hi)
    prev_hidden_proj = (jnp.dot(h0, params["w_h2h"].T, precision=hi)
                        + params["b_h2h"])[:, None, :]
    e = jnp.einsum("bth,oh->bto", jnp.tanh(batch_H_proj + prev_hidden_proj),
                   params["w_score"], precision=hi)            # (B, T, 1)
    alpha = jax.nn.softmax(e, axis=1)
    context = jnp.einsum("bot,btd->bod", jnp.transpose(alpha, (0, 2, 1)),
                         batch_H, precision=hi)[:, 0, :]       # (B, D)
    x = jnp.concatenate([context, char_onehots], axis=1)
    gates = (jnp.dot(x, params["w_ih"].T, precision=hi) + params["b_ih"]
             + jnp.dot(h0, params["w_hh"].T, precision=hi) + params["b_hh"])
    Hd = h0.shape[1]
    i_g = jax.nn.sigmoid(gates[:, 0 * Hd:1 * Hd])
    f_g = jax.nn.sigmoid(gates[:, 1 * Hd:2 * Hd])
    g_g = jnp.tanh(gates[:, 2 * Hd:3 * Hd])
    o_g = jax.nn.sigmoid(gates[:, 3 * Hd:4 * Hd])
    c_new = f_g * c0 + i_g * g_g
    h_new = o_g * jnp.tanh(c_new)
    return (h_new, c_new), alpha


if __name__ == "__main__":
    # Small shapes consistent with the module; B=16 gives a 2-step batch-tiled
    # grid with the default block_b selection (exercises tiling / megacore).
    B, T = 16, 8                 # batch, encoder sequence length
    D = 32                       # input_size
    Hd = 32                      # hidden_size
    E = 8                        # num_embeddings

    key = jax.random.PRNGKey(0)
    keys = jax.random.split(key, 12)

    params = {
        "w_i2h": 0.1 * jax.random.normal(keys[0], (Hd, D), jnp.float32),
        "w_h2h": 0.1 * jax.random.normal(keys[1], (Hd, Hd), jnp.float32),
        "b_h2h": 0.1 * jax.random.normal(keys[2], (Hd,), jnp.float32),
        "w_score": 0.1 * jax.random.normal(keys[3], (1, Hd), jnp.float32),
        "w_ih": 0.1 * jax.random.normal(keys[4], (4 * Hd, D + E), jnp.float32),
        "b_ih": 0.1 * jax.random.normal(keys[5], (4 * Hd,), jnp.float32),
        "w_hh": 0.1 * jax.random.normal(keys[6], (4 * Hd, Hd), jnp.float32),
        "b_hh": 0.1 * jax.random.normal(keys[7], (4 * Hd,), jnp.float32),
    }

    batch_H = jax.random.normal(keys[8], (B, T, D), jnp.float32)
    h0 = jax.random.normal(keys[9], (B, Hd), jnp.float32)
    c0 = jax.random.normal(keys[10], (B, Hd), jnp.float32)
    onehot_idx = jax.random.randint(keys[11], (B,), 0, E)
    char_onehots = jax.nn.one_hot(onehot_idx, E, dtype=jnp.float32)

    (h_ref, c_ref), a_ref = attention_cell_ref((h0, c0), batch_H,
                                               char_onehots, params)

    # 1) f32 MXU/stream path: near-exact check.
    (h_f32, c_f32), a_f32 = attention_cell(
        (h0, c0), batch_H, char_onehots, params, matmul_dtype=jnp.float32)
    jax.block_until_ready((h_f32, c_f32, a_f32))
    assert jnp.allclose(h_f32, h_ref, atol=5e-5, rtol=5e-5)
    assert jnp.allclose(c_f32, c_ref, atol=5e-5, rtol=5e-5)
    assert jnp.allclose(a_f32, a_ref, atol=5e-5, rtol=5e-5)

    # 2) default bf16 stream/MXU path (the performance configuration).
    (h_bf, c_bf), a_bf = attention_cell((h0, c0), batch_H, char_onehots, params)
    jax.block_until_ready((h_bf, c_bf, a_bf))
    assert jnp.allclose(h_bf, h_ref, atol=5e-2, rtol=5e-2)
    assert jnp.allclose(c_bf, c_ref, atol=5e-2, rtol=5e-2)
    assert jnp.allclose(a_bf, a_ref, atol=5e-2, rtol=5e-2)

    # 3) decode-loop usage: streams precomputed/cast once, passed back each step
    #    (no per-step pad/cast/projection of the big arrays in the wrapper).
    bh_stream, proj_stream = precompute_attention_streams(
        batch_H, params, stream_dtype=jnp.bfloat16)
    (h_pre, c_pre), a_pre = attention_cell(
        (h0, c0), bh_stream, char_onehots, params, batch_H_proj=proj_stream)
    jax.block_until_ready((h_pre, c_pre, a_pre))
    assert jnp.allclose(h_pre, h_bf, atol=1e-6, rtol=1e-6)
    assert jnp.allclose(c_pre, c_bf, atol=1e-6, rtol=1e-6)
    assert jnp.allclose(a_pre, a_bf, atol=1e-6, rtol=1e-6)

    print("KERNEL_OK")
</pallas_src>

<mosaic_0001>
module attributes {stable_mosaic.version = 11 : i64} {
  func.func @_attention_cell_kernel(%arg0: i32, %arg1: memref<8x8x32xf32, #tpu.memory_space<vmem>>, %arg2: memref<8x8x32xf32, #tpu.memory_space<vmem>>, %arg3: memref<8x32xf32, #tpu.memory_space<vmem>>, %arg4: memref<8x32xf32, #tpu.memory_space<vmem>>, %arg5: memref<8x8xf32, #tpu.memory_space<vmem>>, %arg6: memref<32x32xf32, #tpu.memory_space<vmem>>, %arg7: memref<1x32xf32, #tpu.memory_space<vmem>>, %arg8: memref<1x32xf32, #tpu.memory_space<vmem>>, %arg9: memref<32x128xf32, #tpu.memory_space<vmem>>, %arg10: memref<8x128xf32, #tpu.memory_space<vmem>>, %arg11: memref<32x128xf32, #tpu.memory_space<vmem>>, %arg12: memref<1x128xf32, #tpu.memory_space<vmem>>, %arg13: memref<8x32xf32, #tpu.memory_space<vmem>>, %arg14: memref<8x32xf32, #tpu.memory_space<vmem>>, %arg15: memref<8x128xf32, #tpu.memory_space<vmem>>) attributes {dimension_semantics = [#tpu.dimension_semantics<parallel>], iteration_bounds = array<i64: 2>, scalar_prefetch = 0 : i64, scratch_operands = 0 : i64, tpu.core_type = #tpu.core_type<tc>, window_params = [{transform_indices = @transform_0, window_bounds = array<i64: 8, 8, 32>}, {transform_indices = @transform_1, window_bounds = array<i64: 8, 8, 32>}, {transform_indices = @transform_2, window_bounds = array<i64: 8, 32>}, {transform_indices = @transform_3, window_bounds = array<i64: 8, 32>}, {transform_indices = @transform_4, window_bounds = array<i64: 8, 8>}, {pipeline_mode = #tpu.pipeline_mode<synchronous>, transform_indices = @transform_5, window_bounds = array<i64: 32, 32>}, {pipeline_mode = #tpu.pipeline_mode<synchronous>, transform_indices = @transform_6, window_bounds = array<i64: 1, 32>}, {pipeline_mode = #tpu.pipeline_mode<synchronous>, transform_indices = @transform_7, window_bounds = array<i64: 1, 32>}, {pipeline_mode = #tpu.pipeline_mode<synchronous>, transform_indices = @transform_8, window_bounds = array<i64: 32, 128>}, {pipeline_mode = #tpu.pipeline_mode<synchronous>, transform_indices = @transform_9, window_bounds = array<i64: 8, 128>}, {pipeline_mode = #tpu.pipeline_mode<synchronous>, transform_indices = @transform_10, window_bounds = array<i64: 32, 128>}, {pipeline_mode = #tpu.pipeline_mode<synchronous>, transform_indices = @transform_11, window_bounds = array<i64: 1, 128>}, {transform_indices = @transform_12, window_bounds = array<i64: 8, 32>}, {transform_indices = @transform_13, window_bounds = array<i64: 8, 32>}, {transform_indices = @transform_14, window_bounds = array<i64: 8, 128>}]} {
    %c0 = arith.constant 0 : index
    %c0_0 = arith.constant 0 : index
    %0 = vector.load %arg3[%c0, %c0_0] : memref<8x32xf32, #tpu.memory_space<vmem>>, vector<8x32xf32>
    %c0_1 = arith.constant 0 : index
    %c0_2 = arith.constant 0 : index
    %1 = vector.load %arg4[%c0_1, %c0_2] : memref<8x32xf32, #tpu.memory_space<vmem>>, vector<8x32xf32>
    %c0_3 = arith.constant 0 : index
    %c0_4 = arith.constant 0 : index
    %2 = vector.load %arg6[%c0_3, %c0_4] : memref<32x32xf32, #tpu.memory_space<vmem>>, vector<32x32xf32>
    %cst = arith.constant dense<0.000000e+00> : vector<8x32xf32>
    %3 = tpu.matmul %0, %2, %cst {dimension_numbers = #tpu.dot_dimension_numbers<[1], [0], [0], [1], [0, 0, 1, 1], [], []>} : vector<8x32xf32>, vector<32x32xf32>, vector<8x32xf32> -> vector<8x32xf32>
    %c0_5 = arith.constant 0 : index
    %c0_6 = arith.constant 0 : index
    %4 = vector.load %arg7[%c0_5, %c0_6] : memref<1x32xf32, #tpu.memory_space<vmem>>, vector<1x32xf32>
    %5 = vector.broadcast %4 : vector<1x32xf32> to vector<8x32xf32>
    %6 = arith.addf %3, %5 : vector<8x32xf32>
    %c0_7 = arith.constant 0 : index
    %c0_8 = arith.constant 0 : index
    %c0_9 = arith.constant 0 : index
    %7 = vector.load %arg1[%c0_7, %c0_8, %c0_9] : memref<8x8x32xf32, #tpu.memory_space<vmem>>, vector<8x8x32xf32>
    %8 = vector.shape_cast %6 : vector<8x32xf32> to vector<8x1x32xf32>
    %9 = vector.broadcast %8 : vector<8x1x32xf32> to vector<8x8x32xf32>
    %10 = arith.addf %7, %9 : vector<8x8x32xf32>
    %11 = math.tanh %10 : vector<8x8x32xf32>
    %c0_10 = arith.constant 0 : index
    %c0_11 = arith.constant 0 : index
    %12 = vector.load %arg8[%c0_10, %c0_11] : memref<1x32xf32, #tpu.memory_space<vmem>>, vector<1x32xf32>
    %13 = vector.shape_cast %12 : vector<1x32xf32> to vector<1x1x32xf32>
    %14 = vector.broadcast %13 : vector<1x1x32xf32> to vector<8x8x32xf32>
    %15 = arith.mulf %11, %14 : vector<8x8x32xf32>
    %cst_12 = arith.constant dense<0.000000e+00> : vector<8x8xf32>
    %16 = vector.multi_reduction <add>, %15, %cst_12 [2] : vector<8x8x32xf32> to vector<8x8xf32>
    %cst_13 = arith.constant dense<0xFF800000> : vector<8xf32>
    %17 = vector.multi_reduction <maximumf>, %16, %cst_13 [1] : vector<8x8xf32> to vector<8xf32>
    %18 = vector.shape_cast %17 : vector<8xf32> to vector<8x1xf32>
    %19 = vector.broadcast %18 : vector<8x1xf32> to vector<8x8xf32>
    %20 = arith.subf %16, %19 : vector<8x8xf32>
    %21 = math.exp %20 : vector<8x8xf32>
    %cst_14 = arith.constant dense<0.000000e+00> : vector<8xf32>
    %22 = vector.multi_reduction <add>, %21, %cst_14 [1] : vector<8x8xf32> to vector<8xf32>
    %23 = vector.shape_cast %22 : vector<8xf32> to vector<8x1xf32>
    %24 = vector.broadcast %23 : vector<8x1xf32> to vector<8x8xf32>
    %25 = arith.divf %21, %24 : vector<8x8xf32>
    %c0_15 = arith.constant 0 : index
    %c0_16 = arith.constant 0 : index
    %c0_17 = arith.constant 0 : index
    %26 = vector.load %arg2[%c0_15, %c0_16, %c0_17] : memref<8x8x32xf32, #tpu.memory_space<vmem>>, vector<8x8x32xf32>
    %27 = vector.shape_cast %25 : vector<8x8xf32> to vector<8x8x1xf32>
    %28 = vector.broadcast %27 : vector<8x8x1xf32> to vector<8x8x32xf32>
    %29 = arith.mulf %28, %26 : vector<8x8x32xf32>
    %cst_18 = arith.constant dense<0.000000e+00> : vector<8x32xf32>
    %30 = vector.multi_reduction <add>, %29, %cst_18 [1] : vector<8x8x32xf32> to vector<8x32xf32>
    %c0_19 = arith.constant 0 : index
    %c0_20 = arith.constant 0 : index
    %31 = vector.load %arg9[%c0_19, %c0_20] : memref<32x128xf32, #tpu.memory_space<vmem>>, vector<32x128xf32>
    %cst_21 = arith.constant dense<0.000000e+00> : vector<8x128xf32>
    %32 = tpu.matmul %30, %31, %cst_21 {dimension_numbers = #tpu.dot_dimension_numbers<[1], [0], [0], [1], [0, 0, 1, 1], [], []>} : vector<8x32xf32>, vector<32x128xf32>, vector<8x128xf32> -> vector<8x128xf32>
    %c0_22 = arith.constant 0 : index
    %c0_23 = arith.constant 0 : index
    %33 = vector.load %arg5[%c0_22, %c0_23] : memref<8x8xf32, #tpu.memory_space<vmem>>, vector<8x8xf32>
    %c0_24 = arith.constant 0 : index
    %c0_25 = arith.constant 0 : index
    %34 = vector.load %arg10[%c0_24, %c0_25] : memref<8x128xf32, #tpu.memory_space<vmem>>, vector<8x128xf32>
    %cst_26 = arith.constant dense<0.000000e+00> : vector<8x128xf32>
    %35 = tpu.matmul %33, %34, %cst_26 {dimension_numbers = #tpu.dot_dimension_numbers<[1], [0], [0], [1], [0, 0, 1, 1], [], []>} : vector<8x8xf32>, vector<8x128xf32>, vector<8x128xf32> -> vector<8x128xf32>
    %36 = arith.addf %32, %35 : vector<8x128xf32>
    %c0_27 = arith.constant 0 : index
    %c0_28 = arith.constant 0 : index
    %37 = vector.load %arg11[%c0_27, %c0_28] : memref<32x128xf32, #tpu.memory_space<vmem>>, vector<32x128xf32>
    %cst_29 = arith.constant dense<0.000000e+00> : vector<8x128xf32>
    %38 = tpu.matmul %0, %37, %cst_29 {dimension_numbers = #tpu.dot_dimension_numbers<[1], [0], [0], [1], [0, 0, 1, 1], [], []>} : vector<8x32xf32>, vector<32x128xf32>, vector<8x128xf32> -> vector<8x128xf32>
    %39 = arith.addf %36, %38 : vector<8x128xf32>
    %c0_30 = arith.constant 0 : index
    %c0_31 = arith.constant 0 : index
    %40 = vector.load %arg12[%c0_30, %c0_31] : memref<1x128xf32, #tpu.memory_space<vmem>>, vector<1x128xf32>
    %41 = vector.broadcast %40 : vector<1x128xf32> to vector<8x128xf32>
    %42 = arith.addf %39, %41 : vector<8x128xf32>
    %43 = vector.extract_strided_slice %42 {offsets = [0, 0], sizes = [8, 32], strides = [1, 1]} : vector<8x128xf32> to vector<8x32xf32>
    %44 = arith.negf %43 : vector<8x32xf32>
    %45 = math.exp %44 : vector<8x32xf32>
    %cst_32 = arith.constant 1.000000e+00 : f32
    %46 = vector.broadcast %cst_32 : f32 to vector<8x32xf32>
    %47 = arith.addf %46, %45 : vector<8x32xf32>
    %48 = arith.divf %46, %47 : vector<8x32xf32>
    %49 = vector.extract_strided_slice %42 {offsets = [0, 32], sizes = [8, 32], strides = [1, 1]} : vector<8x128xf32> to vector<8x32xf32>
    %50 = arith.negf %49 : vector<8x32xf32>
    %51 = math.exp %50 : vector<8x32xf32>
    %cst_33 = arith.constant 1.000000e+00 : f32
    %52 = vector.broadcast %cst_33 : f32 to vector<8x32xf32>
    %53 = arith.addf %52, %51 : vector<8x32xf32>
    %54 = arith.divf %52, %53 : vector<8x32xf32>
    %55 = vector.extract_strided_slice %42 {offsets = [0, 64], sizes = [8, 32], strides = [1, 1]} : vector<8x128xf32> to vector<8x32xf32>
    %56 = math.tanh %55 : vector<8x32xf32>
    %57 = vector.extract_strided_slice %42 {offsets = [0, 96], sizes = [8, 32], strides = [1, 1]} : vector<8x128xf32> to vector<8x32xf32>
    %58 = arith.negf %57 : vector<8x32xf32>
    %59 = math.exp %58 : vector<8x32xf32>
    %cst_34 = arith.constant 1.000000e+00 : f32
    %60 = vector.broadcast %cst_34 : f32 to vector<8x32xf32>
    %61 = arith.addf %60, %59 : vector<8x32xf32>
    %62 = arith.divf %60, %61 : vector<8x32xf32>
    %63 = arith.mulf %54, %1 : vector<8x32xf32>
    %64 = arith.mulf %48, %56 : vector<8x32xf32>
    %65 = arith.addf %63, %64 : vector<8x32xf32>
    %66 = math.tanh %65 : vector<8x32xf32>
    %67 = arith.mulf %62, %66 : vector<8x32xf32>
    %c0_35 = arith.constant 0 : index
    %c0_36 = arith.constant 0 : index
    %68 = vector.load %arg13[%c0_35, %c0_36] : memref<8x32xf32, #tpu.memory_space<vmem>>, vector<8x32xf32>
    tpu.vector_store %arg13[%c0_35, %c0_36], %67 {strides = array<i32>} : memref<8x32xf32, #tpu.memory_space<vmem>>, vector<8x32xf32>,
    %c0_37 = arith.constant 0 : index
    %c0_38 = arith.constant 0 : index
    %69 = vector.load %arg14[%c0_37, %c0_38] : memref<8x32xf32, #tpu.memory_space<vmem>>, vector<8x32xf32>
    tpu.vector_store %arg14[%c0_37, %c0_38], %65 {strides = array<i32>} : memref<8x32xf32, #tpu.memory_space<vmem>>, vector<8x32xf32>,
    %cst_39 = arith.constant 0.000000e+00 : f32
    %70 = vector.broadcast %cst_39 : f32 to vector<8x120xf32>
    %71 = tpu.concatenate %25, %70 in 1 : vector<8x8xf32>, vector<8x120xf32> -> vector<8x128xf32>
    %c0_40 = arith.constant 0 : index
    %c0_41 = arith.constant 0 : index
    %72 = vector.load %arg15[%c0_40, %c0_41] : memref<8x128xf32, #tpu.memory_space<vmem>>, vector<8x128xf32>
    tpu.vector_store %arg15[%c0_40, %c0_41], %71 {strides = array<i32>} : memref<8x128xf32, #tpu.memory_space<vmem>>, vector<8x128xf32>,
    return
  }
  func.func @transform_0(%arg0: i32) -> (i32, i32, i32) {
    %c0_i32 = arith.constant 0 : i32
    %c0_i32_0 = arith.constant 0 : i32
    %c0_i32_1 = arith.constant 0 : i32
    return %arg0, %c0_i32, %c0_i32_0 : i32, i32, i32
  }
  func.func @transform_1(%arg0: i32) -> (i32, i32, i32) {
    %c0_i32 = arith.constant 0 : i32
    %c0_i32_0 = arith.constant 0 : i32
    %c0_i32_1 = arith.constant 0 : i32
    return %arg0, %c0_i32, %c0_i32_0 : i32, i32, i32
  }
  func.func @transform_2(%arg0: i32) -> (i32, i32) {
    %c0_i32 = arith.constant 0 : i32
    %c0_i32_0 = arith.constant 0 : i32
    return %arg0, %c0_i32 : i32, i32
  }
  func.func @transform_3(%arg0: i32) -> (i32, i32) {
    %c0_i32 = arith.constant 0 : i32
    %c0_i32_0 = arith.constant 0 : i32
    return %arg0, %c0_i32 : i32, i32
  }
  func.func @transform_4(%arg0: i32) -> (i32, i32) {
    %c0_i32 = arith.constant 0 : i32
    %c0_i32_0 = arith.constant 0 : i32
    return %arg0, %c0_i32 : i32, i32
  }
  func.func @transform_5(%arg0: i32) -> (i32, i32) {
    %c0_i32 = arith.constant 0 : i32
    %c0_i32_0 = arith.constant 0 : i32
    %c0_i32_1 = arith.constant 0 : i32
    return %c0_i32, %c0_i32_0 : i32, i32
  }
  func.func @transform_6(%arg0: i32) -> (i32, i32) {
    %c0_i32 = arith.constant 0 : i32
    %c0_i32_0 = arith.constant 0 : i32
    %c0_i32_1 = arith.constant 0 : i32
    return %c0_i32, %c0_i32_0 : i32, i32
  }
  func.func @transform_7(%arg0: i32) -> (i32, i32) {
    %c0_i32 = arith.constant 0 : i32
    %c0_i32_0 = arith.constant 0 : i32
    %c0_i32_1 = arith.constant 0 : i32
    return %c0_i32, %c0_i32_0 : i32, i32
  }
  func.func @transform_8(%arg0: i32) -> (i32, i32) {
    %c0_i32 = arith.constant 0 : i32
    %c0_i32_0 = arith.constant 0 : i32
    %c0_i32_1 = arith.constant 0 : i32
    return %c0_i32, %c0_i32_0 : i32, i32
  }
  func.func @transform_9(%arg0: i32) -> (i32, i32) {
    %c0_i32 = arith.constant 0 : i32
    %c0_i32_0 = arith.constant 0 : i32
    %c0_i32_1 = arith.constant 0 : i32
    return %c0_i32, %c0_i32_0 : i32, i32
  }
  func.func @transform_10(%arg0: i32) -> (i32, i32) {
    %c0_i32 = arith.constant 0 : i32
    %c0_i32_0 = arith.constant 0 : i32
    %c0_i32_1 = arith.constant 0 : i32
    return %c0_i32, %c0_i32_0 : i32, i32
  }
  func.func @transform_11(%arg0: i32) -> (i32, i32) {
    %c0_i32 = arith.constant 0 : i32
    %c0_i32_0 = arith.constant 0 : i32
    %c0_i32_1 = arith.constant 0 : i32
    return %c0_i32, %c0_i32_0 : i32, i32
  }
  func.func @transform_12(%arg0: i32) -> (i32, i32) {
    %c0_i32 = arith.constant 0 : i32
    %c0_i32_0 = arith.constant 0 : i32
    return %arg0, %c0_i32 : i32, i32
  }
  func.func @transform_13(%arg0: i32) -> (i32, i32) {
    %c0_i32 = arith.constant 0 : i32
    %c0_i32_0 = arith.constant 0 : i32
    return %arg0, %c0_i32 : i32, i32
  }
  func.func @transform_14(%arg0: i32) -> (i32, i32) {
    %c0_i32 = arith.constant 0 : i32
    %c0_i32_0 = arith.constant 0 : i32
    return %arg0, %c0_i32 : i32, i32
  }
}

module attributes {stable_mosaic.version = 11 : i64} {
  func.func @_attention_cell_kernel(%arg0: i32, %arg1: memref<8x8x32xf32, #tpu.memory_space<vmem>>, %arg2: memref<8x8x32xf32, #tpu.memory_space<vmem>>, %arg3: memref<8x32xf32, #tpu.memory_space<vmem>>, %arg4: memref<8x32xf32, #tpu.memory_space<vmem>>, %arg5: memref<8x8xf32, #tpu.memory_space<vmem>>, %arg6: memref<32x32xf32, #tpu.memory_space<vmem>>, %arg7: memref<1x32xf32, #tpu.memory_space<vmem>>, %arg8: memref<1x32xf32, #tpu.memory_space<vmem>>, %arg9: memref<32x128xf32, #tpu.memory_space<vmem>>, %arg10: memref<8x128xf32, #tpu.memory_space<vmem>>, %arg11: memref<32x128xf32, #tpu.memory_space<vmem>>, %arg12: memref<1x128xf32, #tpu.memory_space<vmem>>, %arg13: memref<8x32xf32, #tpu.memory_space<vmem>>, %arg14: memref<8x32xf32, #tpu.memory_space<vmem>>, %arg15: memref<8x8xf32, #tpu.memory_space<vmem>>) attributes {dimension_semantics = [#tpu.dimension_semantics<parallel>], iteration_bounds = array<i64: 2>, scalar_prefetch = 0 : i64, scratch_operands = 0 : i64, tpu.core_type = #tpu.core_type<tc>, window_params = [{transform_indices = @transform_0, window_bounds = array<i64: 8, 8, 32>}, {transform_indices = @transform_1, window_bounds = array<i64: 8, 8, 32>}, {transform_indices = @transform_2, window_bounds = array<i64: 8, 32>}, {transform_indices = @transform_3, window_bounds = array<i64: 8, 32>}, {transform_indices = @transform_4, window_bounds = array<i64: 8, 8>}, {pipeline_mode = #tpu.pipeline_mode<synchronous>, transform_indices = @transform_5, window_bounds = array<i64: 32, 32>}, {pipeline_mode = #tpu.pipeline_mode<synchronous>, transform_indices = @transform_6, window_bounds = array<i64: 1, 32>}, {pipeline_mode = #tpu.pipeline_mode<synchronous>, transform_indices = @transform_7, window_bounds = array<i64: 1, 32>}, {pipeline_mode = #tpu.pipeline_mode<synchronous>, transform_indices = @transform_8, window_bounds = array<i64: 32, 128>}, {pipeline_mode = #tpu.pipeline_mode<synchronous>, transform_indices = @transform_9, window_bounds = array<i64: 8, 128>}, {pipeline_mode = #tpu.pipeline_mode<synchronous>, transform_indices = @transform_10, window_bounds = array<i64: 32, 128>}, {pipeline_mode = #tpu.pipeline_mode<synchronous>, transform_indices = @transform_11, window_bounds = array<i64: 1, 128>}, {transform_indices = @transform_12, window_bounds = array<i64: 8, 32>}, {transform_indices = @transform_13, window_bounds = array<i64: 8, 32>}, {transform_indices = @transform_14, window_bounds = array<i64: 8, 8>}]} {
    %c0 = arith.constant 0 : index
    %c0_0 = arith.constant 0 : index
    %0 = vector.load %arg3[%c0, %c0_0] : memref<8x32xf32, #tpu.memory_space<vmem>>, vector<8x32xf32>
    %c0_1 = arith.constant 0 : index
    %c0_2 = arith.constant 0 : index
    %1 = vector.load %arg4[%c0_1, %c0_2] : memref<8x32xf32, #tpu.memory_space<vmem>>, vector<8x32xf32>
    %c0_3 = arith.constant 0 : index
    %c0_4 = arith.constant 0 : index
    %2 = vector.load %arg6[%c0_3, %c0_4] : memref<32x32xf32, #tpu.memory_space<vmem>>, vector<32x32xf32>
    %cst = arith.constant dense<0.000000e+00> : vector<8x32xf32>
    %3 = tpu.matmul %0, %2, %cst {dimension_numbers = #tpu.dot_dimension_numbers<[1], [0], [0], [1], [0, 0, 1, 1], [], []>} : vector<8x32xf32>, vector<32x32xf32>, vector<8x32xf32> -> vector<8x32xf32>
    %c0_5 = arith.constant 0 : index
    %c0_6 = arith.constant 0 : index
    %4 = vector.load %arg7[%c0_5, %c0_6] : memref<1x32xf32, #tpu.memory_space<vmem>>, vector<1x32xf32>
    %5 = vector.broadcast %4 : vector<1x32xf32> to vector<8x32xf32>
    %6 = arith.addf %3, %5 : vector<8x32xf32>
    %c0_7 = arith.constant 0 : index
    %c0_8 = arith.constant 0 : index
    %c0_9 = arith.constant 0 : index
    %7 = vector.load %arg1[%c0_7, %c0_8, %c0_9] : memref<8x8x32xf32, #tpu.memory_space<vmem>>, vector<8x8x32xf32>
    %8 = vector.shape_cast %6 : vector<8x32xf32> to vector<8x1x32xf32>
    %9 = vector.broadcast %8 : vector<8x1x32xf32> to vector<8x8x32xf32>
    %10 = arith.addf %7, %9 : vector<8x8x32xf32>
    %11 = math.tanh %10 : vector<8x8x32xf32>
    %c0_10 = arith.constant 0 : index
    %c0_11 = arith.constant 0 : index
    %12 = vector.load %arg8[%c0_10, %c0_11] : memref<1x32xf32, #tpu.memory_space<vmem>>, vector<1x32xf32>
    %13 = vector.shape_cast %12 : vector<1x32xf32> to vector<1x1x32xf32>
    %14 = vector.broadcast %13 : vector<1x1x32xf32> to vector<8x8x32xf32>
    %15 = arith.mulf %11, %14 : vector<8x8x32xf32>
    %cst_12 = arith.constant dense<0.000000e+00> : vector<8x8xf32>
    %16 = vector.multi_reduction <add>, %15, %cst_12 [2] : vector<8x8x32xf32> to vector<8x8xf32>
    %cst_13 = arith.constant dense<0xFF800000> : vector<8xf32>
    %17 = vector.multi_reduction <maximumf>, %16, %cst_13 [1] : vector<8x8xf32> to vector<8xf32>
    %18 = vector.shape_cast %17 : vector<8xf32> to vector<8x1xf32>
    %19 = vector.broadcast %18 : vector<8x1xf32> to vector<8x8xf32>
    %20 = arith.subf %16, %19 : vector<8x8xf32>
    %21 = math.exp %20 : vector<8x8xf32>
    %cst_14 = arith.constant dense<0.000000e+00> : vector<8xf32>
    %22 = vector.multi_reduction <add>, %21, %cst_14 [1] : vector<8x8xf32> to vector<8xf32>
    %23 = vector.shape_cast %22 : vector<8xf32> to vector<8x1xf32>
    %24 = vector.broadcast %23 : vector<8x1xf32> to vector<8x8xf32>
    %25 = arith.divf %21, %24 : vector<8x8xf32>
    %c0_15 = arith.constant 0 : index
    %c0_16 = arith.constant 0 : index
    %c0_17 = arith.constant 0 : index
    %26 = vector.load %arg2[%c0_15, %c0_16, %c0_17] : memref<8x8x32xf32, #tpu.memory_space<vmem>>, vector<8x8x32xf32>
    %27 = vector.shape_cast %25 : vector<8x8xf32> to vector<8x8x1xf32>
    %28 = vector.broadcast %27 : vector<8x8x1xf32> to vector<8x8x32xf32>
    %29 = arith.mulf %28, %26 : vector<8x8x32xf32>
    %cst_18 = arith.constant dense<0.000000e+00> : vector<8x32xf32>
    %30 = vector.multi_reduction <add>, %29, %cst_18 [1] : vector<8x8x32xf32> to vector<8x32xf32>
    %c0_19 = arith.constant 0 : index
    %c0_20 = arith.constant 0 : index
    %31 = vector.load %arg9[%c0_19, %c0_20] : memref<32x128xf32, #tpu.memory_space<vmem>>, vector<32x128xf32>
    %cst_21 = arith.constant dense<0.000000e+00> : vector<8x128xf32>
    %32 = tpu.matmul %30, %31, %cst_21 {dimension_numbers = #tpu.dot_dimension_numbers<[1], [0], [0], [1], [0, 0, 1, 1], [], []>} : vector<8x32xf32>, vector<32x128xf32>, vector<8x128xf32> -> vector<8x128xf32>
    %c0_22 = arith.constant 0 : index
    %c0_23 = arith.constant 0 : index
    %33 = vector.load %arg5[%c0_22, %c0_23] : memref<8x8xf32, #tpu.memory_space<vmem>>, vector<8x8xf32>
    %c0_24 = arith.constant 0 : index
    %c0_25 = arith.constant 0 : index
    %34 = vector.load %arg10[%c0_24, %c0_25] : memref<8x128xf32, #tpu.memory_space<vmem>>, vector<8x128xf32>
    %cst_26 = arith.constant dense<0.000000e+00> : vector<8x128xf32>
    %35 = tpu.matmul %33, %34, %cst_26 {dimension_numbers = #tpu.dot_dimension_numbers<[1], [0], [0], [1], [0, 0, 1, 1], [], []>} : vector<8x8xf32>, vector<8x128xf32>, vector<8x128xf32> -> vector<8x128xf32>
    %36 = arith.addf %32, %35 : vector<8x128xf32>
    %c0_27 = arith.constant 0 : index
    %c0_28 = arith.constant 0 : index
    %37 = vector.load %arg11[%c0_27, %c0_28] : memref<32x128xf32, #tpu.memory_space<vmem>>, vector<32x128xf32>
    %cst_29 = arith.constant dense<0.000000e+00> : vector<8x128xf32>
    %38 = tpu.matmul %0, %37, %cst_29 {dimension_numbers = #tpu.dot_dimension_numbers<[1], [0], [0], [1], [0, 0, 1, 1], [], []>} : vector<8x32xf32>, vector<32x128xf32>, vector<8x128xf32> -> vector<8x128xf32>
    %39 = arith.addf %36, %38 : vector<8x128xf32>
    %c0_30 = arith.constant 0 : index
    %c0_31 = arith.constant 0 : index
    %40 = vector.load %arg12[%c0_30, %c0_31] : memref<1x128xf32, #tpu.memory_space<vmem>>, vector<1x128xf32>
    %41 = vector.broadcast %40 : vector<1x128xf32> to vector<8x128xf32>
    %42 = arith.addf %39, %41 : vector<8x128xf32>
    %43 = vector.extract_strided_slice %42 {offsets = [0, 0], sizes = [8, 32], strides = [1, 1]} : vector<8x128xf32> to vector<8x32xf32>
    %44 = arith.negf %43 : vector<8x32xf32>
    %45 = math.exp %44 : vector<8x32xf32>
    %cst_32 = arith.constant 1.000000e+00 : f32
    %46 = vector.broadcast %cst_32 : f32 to vector<8x32xf32>
    %47 = arith.addf %46, %45 : vector<8x32xf32>
    %48 = arith.divf %46, %47 : vector<8x32xf32>
    %49 = vector.extract_strided_slice %42 {offsets = [0, 32], sizes = [8, 32], strides = [1, 1]} : vector<8x128xf32> to vector<8x32xf32>
    %50 = arith.negf %49 : vector<8x32xf32>
    %51 = math.exp %50 : vector<8x32xf32>
    %cst_33 = arith.constant 1.000000e+00 : f32
    %52 = vector.broadcast %cst_33 : f32 to vector<8x32xf32>
    %53 = arith.addf %52, %51 : vector<8x32xf32>
    %54 = arith.divf %52, %53 : vector<8x32xf32>
    %55 = vector.extract_strided_slice %42 {offsets = [0, 64], sizes = [8, 32], strides = [1, 1]} : vector<8x128xf32> to vector<8x32xf32>
    %56 = math.tanh %55 : vector<8x32xf32>
    %57 = vector.extract_strided_slice %42 {offsets = [0, 96], sizes = [8, 32], strides = [1, 1]} : vector<8x128xf32> to vector<8x32xf32>
    %58 = arith.negf %57 : vector<8x32xf32>
    %59 = math.exp %58 : vector<8x32xf32>
    %cst_34 = arith.constant 1.000000e+00 : f32
    %60 = vector.broadcast %cst_34 : f32 to vector<8x32xf32>
    %61 = arith.addf %60, %59 : vector<8x32xf32>
    %62 = arith.divf %60, %61 : vector<8x32xf32>
    %63 = arith.mulf %54, %1 : vector<8x32xf32>
    %64 = arith.mulf %48, %56 : vector<8x32xf32>
    %65 = arith.addf %63, %64 : vector<8x32xf32>
    %66 = math.tanh %65 : vector<8x32xf32>
    %67 = arith.mulf %62, %66 : vector<8x32xf32>
    %c0_35 = arith.constant 0 : index
    %c0_36 = arith.constant 0 : index
    %68 = vector.load %arg13[%c0_35, %c0_36] : memref<8x32xf32, #tpu.memory_space<vmem>>, vector<8x32xf32>
    tpu.vector_store %arg13[%c0_35, %c0_36], %67 {strides = array<i32>} : memref<8x32xf32, #tpu.memory_space<vmem>>, vector<8x32xf32>,
    %c0_37 = arith.constant 0 : index
    %c0_38 = arith.constant 0 : index
    %69 = vector.load %arg14[%c0_37, %c0_38] : memref<8x32xf32, #tpu.memory_space<vmem>>, vector<8x32xf32>
    tpu.vector_store %arg14[%c0_37, %c0_38], %65 {strides = array<i32>} : memref<8x32xf32, #tpu.memory_space<vmem>>, vector<8x32xf32>,
    %c0_39 = arith.constant 0 : index
    %c0_40 = arith.constant 0 : index
    %70 = vector.load %arg15[%c0_39, %c0_40] : memref<8x8xf32, #tpu.memory_space<vmem>>, vector<8x8xf32>
    tpu.vector_store %arg15[%c0_39, %c0_40], %25 {strides = array<i32>} : memref<8x8xf32, #tpu.memory_space<vmem>>, vector<8x8xf32>,
    return
  }
  func.func @transform_0(%arg0: i32) -> (i32, i32, i32) {
    %c0_i32 = arith.constant 0 : i32
    %c0_i32_0 = arith.constant 0 : i32
    %c0_i32_1 = arith.constant 0 : i32
    return %arg0, %c0_i32, %c0_i32_0 : i32, i32, i32
  }
  func.func @transform_1(%arg0: i32) -> (i32, i32, i32) {
    %c0_i32 = arith.constant 0 : i32
    %c0_i32_0 = arith.constant 0 : i32
    %c0_i32_1 = arith.constant 0 : i32
    return %arg0, %c0_i32, %c0_i32_0 : i32, i32, i32
  }
  func.func @transform_2(%arg0: i32) -> (i32, i32) {
    %c0_i32 = arith.constant 0 : i32
    %c0_i32_0 = arith.constant 0 : i32
    return %arg0, %c0_i32 : i32, i32
  }
  func.func @transform_3(%arg0: i32) -> (i32, i32) {
    %c0_i32 = arith.constant 0 : i32
    %c0_i32_0 = arith.constant 0 : i32
    return %arg0, %c0_i32 : i32, i32
  }
  func.func @transform_4(%arg0: i32) -> (i32, i32) {
    %c0_i32 = arith.constant 0 : i32
    %c0_i32_0 = arith.constant 0 : i32
    return %arg0, %c0_i32 : i32, i32
  }
  func.func @transform_5(%arg0: i32) -> (i32, i32) {
    %c0_i32 = arith.constant 0 : i32
    %c0_i32_0 = arith.constant 0 : i32
    %c0_i32_1 = arith.constant 0 : i32
    return %c0_i32, %c0_i32_0 : i32, i32
  }
  func.func @transform_6(%arg0: i32) -> (i32, i32) {
    %c0_i32 = arith.constant 0 : i32
    %c0_i32_0 = arith.constant 0 : i32
    %c0_i32_1 = arith.constant 0 : i32
    return %c0_i32, %c0_i32_0 : i32, i32
  }
  func.func @transform_7(%arg0: i32) -> (i32, i32) {
    %c0_i32 = arith.constant 0 : i32
    %c0_i32_0 = arith.constant 0 : i32
    %c0_i32_1 = arith.constant 0 : i32
    return %c0_i32, %c0_i32_0 : i32, i32
  }
  func.func @transform_8(%arg0: i32) -> (i32, i32) {
    %c0_i32 = arith.constant 0 : i32
    %c0_i32_0 = arith.constant 0 : i32
    %c0_i32_1 = arith.constant 0 : i32
    return %c0_i32, %c0_i32_0 : i32, i32
  }
  func.func @transform_9(%arg0: i32) -> (i32, i32) {
    %c0_i32 = arith.constant 0 : i32
    %c0_i32_0 = arith.constant 0 : i32
    %c0_i32_1 = arith.constant 0 : i32
    return %c0_i32, %c0_i32_0 : i32, i32
  }
  func.func @transform_10(%arg0: i32) -> (i32, i32) {
    %c0_i32 = arith.constant 0 : i32
    %c0_i32_0 = arith.constant 0 : i32
    %c0_i32_1 = arith.constant 0 : i32
    return %c0_i32, %c0_i32_0 : i32, i32
  }
  func.func @transform_11(%arg0: i32) -> (i32, i32) {
    %c0_i32 = arith.constant 0 : i32
    %c0_i32_0 = arith.constant 0 : i32
    %c0_i32_1 = arith.constant 0 : i32
    return %c0_i32, %c0_i32_0 : i32, i32
  }
  func.func @transform_12(%arg0: i32) -> (i32, i32) {
    %c0_i32 = arith.constant 0 : i32
    %c0_i32_0 = arith.constant 0 : i32
    return %arg0, %c0_i32 : i32, i32
  }
  func.func @transform_13(%arg0: i32) -> (i32, i32) {
    %c0_i32 = arith.constant 0 : i32
    %c0_i32_0 = arith.constant 0 : i32
    return %arg0, %c0_i32 : i32, i32
  }
  func.func @transform_14(%arg0: i32) -> (i32, i32) {
    %c0_i32 = arith.constant 0 : i32
    %c0_i32_0 = arith.constant 0 : i32
    return %arg0, %c0_i32 : i32, i32
  }
}

</mosaic_0001>

<llo_original>
// kernel: tpu_custom_call.1
$region0: #{tpu_custom_call.1}
  #allocation0 [shape = 'u32[]', space=smem, size = 0x4, offset = 0x4, fixed_abs, tag = 'smem constant byte address 0x4 - core index']
  #allocation1 [shape = 'u32[72,128]{1,0:T(1,128)}', space=vmem, size = 0x9000, scoped, tag = 'internal scratch']
  %s0 = inlined_call_operand.hbm [shape: f32[16,8,32], index: 0, kind: input, shape index: {}]
  %s1 = inlined_call_operand.hbm [shape: f32[16,8,32], index: 1, kind: input, shape index: {}]
  %s2 = inlined_call_operand.hbm [shape: f32[16,32], index: 2, kind: input, shape index: {}]
  %s3 = inlined_call_operand.hbm [shape: f32[16,32], index: 3, kind: input, shape index: {}]
  %s4 = inlined_call_operand.vmem [shape: f32[16,8], index: 4, kind: input, shape index: {}]
  %s5 = inlined_call_operand.hbm [shape: f32[32,32], index: 5, kind: input, shape index: {}]
  %s6 = inlined_call_operand.vmem [shape: f32[1,32], index: 6, kind: input, shape index: {}]
  %s7 = inlined_call_operand.hbm [shape: f32[1,32], index: 7, kind: input, shape index: {}]
  %s8 = inlined_call_operand.hbm [shape: f32[32,128], index: 8, kind: input, shape index: {}]
  %s9 = inlined_call_operand.hbm [shape: f32[8,128], index: 9, kind: input, shape index: {}]
  %s10 = inlined_call_operand.vmem [shape: f32[32,128], index: 10, kind: input, shape index: {}]
  %s11 = inlined_call_operand.vmem [shape: f32[1,128], index: 11, kind: input, shape index: {}]
  %s12 = inlined_call_operand.hbm [shape: f32[16,32], index: 12, kind: output, shape index: {0}]
  %s13 = inlined_call_operand.hbm [shape: f32[16,32], index: 13, kind: output, shape index: {1}]
  %s14 = inlined_call_operand.hbm [shape: f32[16,128], index: 14, kind: output, shape index: {2}]
  %15 = xla_tuple %s12, %s13, %s14
  %s16 = sld [smem:[#allocation0]]
  $region129: #{tpu_custom_call.1} parent=0
    _
  %s18 = ssub.s32 1, %s16
  %s19 = scalar_select 0, %s18, %s16
  $region1: #{tpu_custom_call.1} parent=0
    #allocation2 [shape = 'u8[65536]{0}', space=vmem, size = 0x10000, scoped, tag = 'input window, operand 0']
    #allocation3 [shape = 's32[2]{0}', space=sflag, size = 0x8, scoped, tag = 'scoped memory for tpu_custom_call.1']
    #allocation4 [shape = 's32[2]{0}', space=sflag, size = 0x8, scoped, tag = 'scoped memory for tpu_custom_call.1']
    #allocation5 [shape = 'u8[65536]{0}', space=vmem, size = 0x10000, scoped, tag = 'input window, operand 1']
    #allocation6 [shape = 's32[2]{0}', space=sflag, size = 0x8, scoped, tag = 'scoped memory for tpu_custom_call.1']
    #allocation7 [shape = 'u8[8192]{0}', space=vmem, size = 0x2000, scoped, tag = 'input window, operand 2']
    #allocation8 [shape = 'u8[8192]{0}', space=vmem, size = 0x2000, scoped, tag = 'input window, operand 3']
    #allocation9 [shape = 's32[2]{0}', space=sflag, size = 0x8, scoped, tag = 'scoped memory for tpu_custom_call.1']
    #allocation10 [shape = 'u8[16384]{0}', space=vmem, size = 0x4000, scoped, tag = 'input window, operand 5, single buffered']
    #allocation11 [shape = 'u8[512]{0}', space=vmem, size = 0x400, scoped, tag = 'input window, operand 7, single buffered']
    #allocation12 [shape = 's32[1]{0}', space=sflag, size = 0x4, scoped, tag = 'scoped memory for tpu_custom_call.1']
    #allocation13 [shape = 'u8[16384]{0}', space=vmem, size = 0x4000, scoped, tag = 'input window, operand 8, single buffered']
    #allocation14 [shape = 'u8[4096]{0}', space=vmem, size = 0x1000, scoped, tag = 'input window, operand 9, single buffered']
    #allocation15 [shape = 's32[1]{0}', space=sflag, size = 0x4, scoped, tag = 'scoped memory for tpu_custom_call.1']
    #allocation16 [shape = 'u8[8192]{0}', space=vmem, size = 0x2000, scoped, tag = 'output window, operand 0']
    #allocation17 [shape = 'u8[8192]{0}', space=vmem, size = 0x2000, scoped, tag = 'output window, operand 1']
    #allocation18 [shape = 's32[2]{0}', space=sflag, size = 0x8, scoped, tag = 'scoped memory for tpu_custom_call.1']
    #allocation19 [shape = 'u8[8192]{0}', space=vmem, size = 0x2000, scoped, tag = 'output window, operand 2']
    %20 = vsyncpa [#allocation3], 0
    %s21 = scalar_lea.sflag [#allocation3], 1
    %22 = vsyncpa %s21, 0
    %23 = vsyncpa [#allocation6], 0
    %s24 = scalar_lea.sflag [#allocation6], 1
    %25 = vsyncpa %s24, 0
    %26 = vsyncpa [#allocation9], 0
    %s27 = scalar_lea.sflag [#allocation9], 1
    %28 = vsyncpa %s27, 0
    %29 = vsyncpa [#allocation12], 0
    %30 = vsyncpa [#allocation15], 0
    %31 = vsyncpa [#allocation4], 0
    %s32 = scalar_lea.sflag [#allocation4], 1
    %33 = vsyncpa %s32, 0
    %34 = vsyncpa [#allocation18], 0
    %s35 = scalar_lea.sflag [#allocation18], 1
    %36 = vsyncpa %s35, 0
    loop: start=0, step=1, limit=4
    $region2: #{tpu_custom_call.1} parent=1 // loop_pre_header
      _
    $region3: #{tpu_custom_call.1} parent=1 // loop_header
      %s38 = sphi 0, %s42
      %p39 = scmp.ge.s32.totalorder %s38, 4
      %s48 = sphi 0, %s50
      %s51 = sphi 0, %s48
      %s52 = sphi 0, %s51
      %s68 = sphi 0, %s52
      %s74 = sphi 0, %s76
      %s77 = sphi 0, %s74
      %s78 = sphi 0, %s77
      %s94 = sphi 0, %s78
      %s100 = sphi 0, %s102
      %s103 = sphi 0, %s100
      %s104 = sphi 0, %s103
      %s120 = sphi 0, %s104
      %s126 = sphi 0, %s128
      %s129 = sphi 0, %s126
      %s130 = sphi 0, %s129
      %s146 = sphi 0, %s130
      %s152 = sphi 0, %s154
      %s155 = sphi 0, %s152
      %s156 = sphi 0, %s155
      %s172 = sphi 0, %s156
      %s176 = sphi 0, %s176
      %s178 = sphi 0, %s176
      %s179 = sphi 0, %s178
      %s193 = sphi 0, %s179
      %s197 = sphi 0, %s197
      %s199 = sphi 0, %s197
      %s200 = sphi 0, %s199
      %s214 = sphi 0, %s200
      %s218 = sphi 0, %s218
      %s220 = sphi 0, %s218
      %s221 = sphi 0, %s220
      %s235 = sphi 0, %s221
      %s239 = sphi 0, %s239
      %s241 = sphi 0, %s239
      %s242 = sphi 0, %s241
      %s256 = sphi 0, %s242
      %s260 = sphi 0, %s260
      %s262 = sphi 0, %s260
      %s263 = sphi 0, %s262
      %s277 = sphi 0, %s263
      %s281 = sphi 0, %s281
      %s283 = sphi 0, %s281
      %s284 = sphi 0, %s283
      %s298 = sphi 0, %s284
      %s302 = sphi 0, %s302
      %s304 = sphi 0, %s302
      %s305 = sphi 0, %s304
      %s319 = sphi 0, %s305
      %s325 = sphi 0, %s327
      %s328 = sphi 0, %s325
      %s329 = sphi 0, %s328
      %s345 = sphi 0, %s329
      %s351 = sphi 0, %s353
      %s354 = sphi 0, %s351
      %s355 = sphi 0, %s354
      %s371 = sphi 0, %s355
      %s377 = sphi 0, %s379
      %s380 = sphi 0, %s377
      %s381 = sphi 0, %s380
      %s397 = sphi 0, %s381
    $region4: #{tpu_custom_call.1} parent=1 // loop_header_branch
      %41 = sbr.rel (%p39) target = $region8
    $region5: #{tpu_custom_call.1} parent=1 // loop_body
      %s43 = ssub.s32 %s38, 1
      %s44 = ssub.s32 %s38, 2
      %s45 = sadd.s32 %s38, 1
      %s46 = ssub.s32 %s38, %s45
      %p47 = scmp.eq.s32.totalorder %s46, 0
      %s49 = sadd.s32 %s48, 1
      %s50 = scalar_select %p47, %s48, %s49
      %p53 = pneg %p47
      %p54 = scmp.eq.s32.totalorder %s38, 1
      %p55 = por %p53, %p54
      %p56 = scmp.ne.s32.totalorder %s48, %s51
      %p57 = scmp.eq.s32.totalorder %s38, 0
      %p58 = por %p56, %p57
      %p59 = scmp.ne.s32.totalorder %s48, %s51
      %p60 = scmp.eq.s32.totalorder %s43, 1
      %p61 = por %p59, %p60
      %p62 = scmp.ne.s32.totalorder %s51, %s52
      %p63 = scmp.eq.s32.totalorder %s43, 0
      %p64 = por %p62, %p63
      %p65 = scmp.ne.s32.totalorder %s51, %s52
      %p66 = scmp.eq.s32.totalorder %s44, 1
      %p67 = por %p65, %p66
      %p69 = scmp.ne.s32.totalorder %s52, %s68
      %p70 = scmp.eq.s32.totalorder %s44, 0
      %p71 = por %p69, %p70
      %s72 = ssub.s32 %s38, %s45
      %p73 = scmp.eq.s32.totalorder %s72, 0
      %s75 = sadd.s32 %s74, 1
      %s76 = scalar_select %p73, %s74, %s75
      %p79 = pneg %p73
      %p80 = scmp.eq.s32.totalorder %s38, 1
      %p81 = por %p79, %p80
      %p82 = scmp.ne.s32.totalorder %s74, %s77
      %p83 = scmp.eq.s32.totalorder %s38, 0
      %p84 = por %p82, %p83
      %p85 = scmp.ne.s32.totalorder %s74, %s77
      %p86 = scmp.eq.s32.totalorder %s43, 1
      %p87 = por %p85, %p86
      %p88 = scmp.ne.s32.totalorder %s77, %s78
      %p89 = scmp.eq.s32.totalorder %s43, 0
      %p90 = por %p88, %p89
      %p91 = scmp.ne.s32.totalorder %s77, %s78
      %p92 = scmp.eq.s32.totalorder %s44, 1
      %p93 = por %p91, %p92
      %p95 = scmp.ne.s32.totalorder %s78, %s94
      %p96 = scmp.eq.s32.totalorder %s44, 0
      %p97 = por %p95, %p96
      %s98 = ssub.s32 %s38, %s45
      %p99 = scmp.eq.s32.totalorder %s98, 0
      %s101 = sadd.s32 %s100, 1
      %s102 = scalar_select %p99, %s100, %s101
      %p105 = pneg %p99
      %p106 = scmp.eq.s32.totalorder %s38, 1
      %p107 = por %p105, %p106
      %p108 = scmp.ne.s32.totalorder %s100, %s103
      %p109 = scmp.eq.s32.totalorder %s38, 0
      %p110 = por %p108, %p109
      %p111 = scmp.ne.s32.totalorder %s100, %s103
      %p112 = scmp.eq.s32.totalorder %s43, 1
      %p113 = por %p111, %p112
      %p114 = scmp.ne.s32.totalorder %s103, %s104
      %p115 = scmp.eq.s32.totalorder %s43, 0
      %p116 = por %p114, %p115
      %p117 = scmp.ne.s32.totalorder %s103, %s104
      %p118 = scmp.eq.s32.totalorder %s44, 1
      %p119 = por %p117, %p118
      %p121 = scmp.ne.s32.totalorder %s104, %s120
      %p122 = scmp.eq.s32.totalorder %s44, 0
      %p123 = por %p121, %p122
      %s124 = ssub.s32 %s38, %s45
      %p125 = scmp.eq.s32.totalorder %s124, 0
      %s127 = sadd.s32 %s126, 1
      %s128 = scalar_select %p125, %s126, %s127
      %p131 = pneg %p125
      %p132 = scmp.eq.s32.totalorder %s38, 1
      %p133 = por %p131, %p132
      %p134 = scmp.ne.s32.totalorder %s126, %s129
      %p135 = scmp.eq.s32.totalorder %s38, 0
      %p136 = por %p134, %p135
      %p137 = scmp.ne.s32.totalorder %s126, %s129
      %p138 = scmp.eq.s32.totalorder %s43, 1
      %p139 = por %p137, %p138
      %p140 = scmp.ne.s32.totalorder %s129, %s130
      %p141 = scmp.eq.s32.totalorder %s43, 0
      %p142 = por %p140, %p141
      %p143 = scmp.ne.s32.totalorder %s129, %s130
      %p144 = scmp.eq.s32.totalorder %s44, 1
      %p145 = por %p143, %p144
      %p147 = scmp.ne.s32.totalorder %s130, %s146
      %p148 = scmp.eq.s32.totalorder %s44, 0
      %p149 = por %p147, %p148
      %s150 = ssub.s32 %s38, %s45
      %p151 = scmp.eq.s32.totalorder %s150, 0
      %s153 = sadd.s32 %s152, 1
      %s154 = scalar_select %p151, %s152, %s153
      %p157 = pneg %p151
      %p158 = scmp.eq.s32.totalorder %s38, 1
      %p159 = por %p157, %p158
      %p160 = scmp.ne.s32.totalorder %s152, %s155
      %p161 = scmp.eq.s32.totalorder %s38, 0
      %p162 = por %p160, %p161
      %p163 = scmp.ne.s32.totalorder %s152, %s155
      %p164 = scmp.eq.s32.totalorder %s43, 1
      %p165 = por %p163, %p164
      %p166 = scmp.ne.s32.totalorder %s155, %s156
      %p167 = scmp.eq.s32.totalorder %s43, 0
      %p168 = por %p166, %p167
      %p169 = scmp.ne.s32.totalorder %s155, %s156
      %p170 = scmp.eq.s32.totalorder %s44, 1
      %p171 = por %p169, %p170
      %p173 = scmp.ne.s32.totalorder %s156, %s172
      %p174 = scmp.eq.s32.totalorder %s44, 0
      %p175 = por %p173, %p174
      %s177 = sadd.s32 %s176, 1
      %p180 = scmp.eq.s32.totalorder %s38, 1
      %p181 = scmp.ne.s32.totalorder %s176, %s178
      %p182 = scmp.eq.s32.totalorder %s38, 0
      %p183 = por %p181, %p182
      %p184 = scmp.ne.s32.totalorder %s176, %s178
      %p185 = scmp.eq.s32.totalorder %s43, 1
      %p186 = por %p184, %p185
      %p187 = scmp.ne.s32.totalorder %s178, %s179
      %p188 = scmp.eq.s32.totalorder %s43, 0
      %p189 = por %p187, %p188
      %p190 = scmp.ne.s32.totalorder %s178, %s179
      %p191 = scmp.eq.s32.totalorder %s44, 1
      %p192 = por %p190, %p191
      %p194 = scmp.ne.s32.totalorder %s179, %s193
      %p195 = scmp.eq.s32.totalorder %s44, 0
      %p196 = por %p194, %p195
      %s198 = sadd.s32 %s197, 1
      %p201 = scmp.eq.s32.totalorder %s38, 1
      %p202 = scmp.ne.s32.totalorder %s197, %s199
      %p203 = scmp.eq.s32.totalorder %s38, 0
      %p204 = por %p202, %p203
      %p205 = scmp.ne.s32.totalorder %s197, %s199
      %p206 = scmp.eq.s32.totalorder %s43, 1
      %p207 = por %p205, %p206
      %p208 = scmp.ne.s32.totalorder %s199, %s200
      %p209 = scmp.eq.s32.totalorder %s43, 0
      %p210 = por %p208, %p209
      %p211 = scmp.ne.s32.totalorder %s199, %s200
      %p212 = scmp.eq.s32.totalorder %s44, 1
      %p213 = por %p211, %p212
      %p215 = scmp.ne.s32.totalorder %s200, %s214
      %p216 = scmp.eq.s32.totalorder %s44, 0
      %p217 = por %p215, %p216
      %s219 = sadd.s32 %s218, 1
      %p222 = scmp.eq.s32.totalorder %s38, 1
      %p223 = scmp.ne.s32.totalorder %s218, %s220
      %p224 = scmp.eq.s32.totalorder %s38, 0
      %p225 = por %p223, %p224
      %p226 = scmp.ne.s32.totalorder %s218, %s220
      %p227 = scmp.eq.s32.totalorder %s43, 1
      %p228 = por %p226, %p227
      %p229 = scmp.ne.s32.totalorder %s220, %s221
      %p230 = scmp.eq.s32.totalorder %s43, 0
      %p231 = por %p229, %p230
      %p232 = scmp.ne.s32.totalorder %s220, %s221
      %p233 = scmp.eq.s32.totalorder %s44, 1
      %p234 = por %p232, %p233
      %p236 = scmp.ne.s32.totalorder %s221, %s235
      %p237 = scmp.eq.s32.totalorder %s44, 0
      %p238 = por %p236, %p237
      %s240 = sadd.s32 %s239, 1
      %p243 = scmp.eq.s32.totalorder %s38, 1
      %p244 = scmp.ne.s32.totalorder %s239, %s241
      %p245 = scmp.eq.s32.totalorder %s38, 0
      %p246 = por %p244, %p245
      %p247 = scmp.ne.s32.totalorder %s239, %s241
      %p248 = scmp.eq.s32.totalorder %s43, 1
      %p249 = por %p247, %p248
      %p250 = scmp.ne.s32.totalorder %s241, %s242
      %p251 = scmp.eq.s32.totalorder %s43, 0
      %p252 = por %p250, %p251
      %p253 = scmp.ne.s32.totalorder %s241, %s242
      %p254 = scmp.eq.s32.totalorder %s44, 1
      %p255 = por %p253, %p254
      %p257 = scmp.ne.s32.totalorder %s242, %s256
      %p258 = scmp.eq.s32.totalorder %s44, 0
      %p259 = por %p257, %p258
      %s261 = sadd.s32 %s260, 1
      %p264 = scmp.eq.s32.totalorder %s38, 1
      %p265 = scmp.ne.s32.totalorder %s260, %s262
      %p266 = scmp.eq.s32.totalorder %s38, 0
      %p267 = por %p265, %p266
      %p268 = scmp.ne.s32.totalorder %s260, %s262
      %p269 = scmp.eq.s32.totalorder %s43, 1
      %p270 = por %p268, %p269
      %p271 = scmp.ne.s32.totalorder %s262, %s263
      %p272 = scmp.eq.s32.totalorder %s43, 0
      %p273 = por %p271, %p272
      %p274 = scmp.ne.s32.totalorder %s262, %s263
      %p275 = scmp.eq.s32.totalorder %s44, 1
      %p276 = por %p274, %p275
      %p278 = scmp.ne.s32.totalorder %s263, %s277
      %p279 = scmp.eq.s32.totalorder %s44, 0
      %p280 = por %p278, %p279
      %s282 = sadd.s32 %s281, 1
      %p285 = scmp.eq.s32.totalorder %s38, 1
      %p286 = scmp.ne.s32.totalorder %s281, %s283
      %p287 = scmp.eq.s32.totalorder %s38, 0
      %p288 = por %p286, %p287
      %p289 = scmp.ne.s32.totalorder %s281, %s283
      %p290 = scmp.eq.s32.totalorder %s43, 1
      %p291 = por %p289, %p290
      %p292 = scmp.ne.s32.totalorder %s283, %s284
      %p293 = scmp.eq.s32.totalorder %s43, 0
      %p294 = por %p292, %p293
      %p295 = scmp.ne.s32.totalorder %s283, %s284
      %p296 = scmp.eq.s32.totalorder %s44, 1
      %p297 = por %p295, %p296
      %p299 = scmp.ne.s32.totalorder %s284, %s298
      %p300 = scmp.eq.s32.totalorder %s44, 0
      %p301 = por %p299, %p300
      %s303 = sadd.s32 %s302, 1
      %p306 = scmp.eq.s32.totalorder %s38, 1
      %p307 = scmp.ne.s32.totalorder %s302, %s304
      %p308 = scmp.eq.s32.totalorder %s38, 0
      %p309 = por %p307, %p308
      %p310 = scmp.ne.s32.totalorder %s302, %s304
      %p311 = scmp.eq.s32.totalorder %s43, 1
      %p312 = por %p310, %p311
      %p313 = scmp.ne.s32.totalorder %s304, %s305
      %p314 = scmp.eq.s32.totalorder %s43, 0
      %p315 = por %p313, %p314
      %p316 = scmp.ne.s32.totalorder %s304, %s305
      %p317 = scmp.eq.s32.totalorder %s44, 1
      %p318 = por %p316, %p317
      %p320 = scmp.ne.s32.totalorder %s305, %s319
      %p321 = scmp.eq.s32.totalorder %s44, 0
      %p322 = por %p320, %p321
      %s323 = ssub.s32 %s38, %s45
      %p324 = scmp.eq.s32.totalorder %s323, 0
      %s326 = sadd.s32 %s325, 1
      %s327 = scalar_select %p324, %s325, %s326
      %p330 = pneg %p324
      %p331 = scmp.eq.s32.totalorder %s38, 1
      %p332 = por %p330, %p331
      %p333 = scmp.ne.s32.totalorder %s325, %s328
      %p334 = scmp.eq.s32.totalorder %s38, 0
      %p335 = por %p333, %p334
      %p336 = scmp.ne.s32.totalorder %s325, %s328
      %p337 = scmp.eq.s32.totalorder %s43, 1
      %p338 = por %p336, %p337
      %p339 = scmp.ne.s32.totalorder %s328, %s329
      %p340 = scmp.eq.s32.totalorder %s43, 0
      %p341 = por %p339, %p340
      %p342 = scmp.ne.s32.totalorder %s328, %s329
      %p343 = scmp.eq.s32.totalorder %s44, 1
      %p344 = por %p342, %p343
      %p346 = scmp.ne.s32.totalorder %s329, %s345
      %p347 = scmp.eq.s32.totalorder %s44, 0
      %p348 = por %p346, %p347
      %s349 = ssub.s32 %s38, %s45
      %p350 = scmp.eq.s32.totalorder %s349, 0
      %s352 = sadd.s32 %s351, 1
      %s353 = scalar_select %p350, %s351, %s352
      %p356 = pneg %p350
      %p357 = scmp.eq.s32.totalorder %s38, 1
      %p358 = por %p356, %p357
      %p359 = scmp.ne.s32.totalorder %s351, %s354
      %p360 = scmp.eq.s32.totalorder %s38, 0
      %p361 = por %p359, %p360
      %p362 = scmp.ne.s32.totalorder %s351, %s354
      %p363 = scmp.eq.s32.totalorder %s43, 1
      %p364 = por %p362, %p363
      %p365 = scmp.ne.s32.totalorder %s354, %s355
      %p366 = scmp.eq.s32.totalorder %s43, 0
      %p367 = por %p365, %p366
      %p368 = scmp.ne.s32.totalorder %s354, %s355
      %p369 = scmp.eq.s32.totalorder %s44, 1
      %p370 = por %p368, %p369
      %p372 = scmp.ne.s32.totalorder %s355, %s371
      %p373 = scmp.eq.s32.totalorder %s44, 0
      %p374 = por %p372, %p373
      %s375 = ssub.s32 %s38, %s45
      %p376 = scmp.eq.s32.totalorder %s375, 0
      %s378 = sadd.s32 %s377, 1
      %s379 = scalar_select %p376, %s377, %s378
      %p382 = pneg %p376
      %p383 = scmp.eq.s32.totalorder %s38, 1
      %p384 = por %p382, %p383
      %p385 = scmp.ne.s32.totalorder %s377, %s380
      %p386 = scmp.eq.s32.totalorder %s38, 0
      %p387 = por %p385, %p386
      %p388 = scmp.ne.s32.totalorder %s377, %s380
      %p389 = scmp.eq.s32.totalorder %s43, 1
      %p390 = por %p388, %p389
      %p391 = scmp.ne.s32.totalorder %s380, %s381
      %p392 = scmp.eq.s32.totalorder %s43, 0
      %p393 = por %p391, %p392
      %p394 = scmp.ne.s32.totalorder %s380, %s381
      %p395 = scmp.eq.s32.totalorder %s44, 1
      %p396 = por %p394, %p395
      %p398 = scmp.ne.s32.totalorder %s381, %s397
      %p399 = scmp.eq.s32.totalorder %s44, 0
      %p400 = por %p398, %p399
      %p401 = scmp.le.s32.totalorder 1, %s38
      %p402 = scmp.lt.s32.totalorder %s38, 3
      %p403 = pnand %p401, %p402
      %p404 = pneg %p403
      // Predicated region
      $region9: #{tpu_custom_call.1} parent=5 // pred_check
        _
      $region10: #{tpu_custom_call.1} parent=5 // pred_check_branch
        %406 = sbr.rel (%p403) target = $region12
      $region11: #{tpu_custom_call.1} parent=5 // pred_region
        %s407 = ssub.s32 %s38, 1
        // Predicated region
        $region13: #{tpu_custom_call.1} parent=11 // pred_check
          %p408 = pneg %p189
        $region14: #{tpu_custom_call.1} parent=11 // pred_check_branch
          %410 = sbr.rel (%p408) target = $region16
        $region15: #{tpu_custom_call.1} parent=11 // pred_region
          %412 = vsyncadd [#allocation9], 0
          %s413 = sshll.u32 %s5, 4
          %s414 = int_to_ptr.hbm [resolvable:$true] %s413
          %s415 = sshll.u32 [#allocation10], 4
          %s416 = int_to_ptr.vmem [resolvable:$true] %s415
          %421 = dma.hbm_to_vmem [thread:$0]  %s414, 512, %s416, [#allocation9], 128, 128, 8
        $region16: #{tpu_custom_call.1} parent=11 // pred_fallthru
          _
        // Predicated region
        $region17: #{tpu_custom_call.1} parent=11 // pred_check
          %p422 = pneg %p210
        $region18: #{tpu_custom_call.1} parent=11 // pred_check_branch
          %424 = sbr.rel (%p422) target = $region20
        $region19: #{tpu_custom_call.1} parent=11 // pred_region
          _
        $region20: #{tpu_custom_call.1} parent=11 // pred_fallthru
          _
        // Predicated region
        $region21: #{tpu_custom_call.1} parent=11 // pred_check
          %p425 = pneg %p231
        $region22: #{tpu_custom_call.1} parent=11 // pred_check_branch
          %427 = sbr.rel (%p425) target = $region24
        $region23: #{tpu_custom_call.1} parent=11 // pred_region
          %429 = vsyncadd [#allocation12], 0
          %s431 = sshll.u32 %s7, 4
          %s432 = int_to_ptr.hbm [resolvable:$true] %s431
          %s433 = sshll.u32 [#allocation11], 4
          %s434 = int_to_ptr.vmem [resolvable:$true] %s433
          %436 = dma.hbm_to_vmem [thread:$0]  %s432, 16, %s434, [#allocation12]
        $region24: #{tpu_custom_call.1} parent=11 // pred_fallthru
          _
        // Predicated region
        $region25: #{tpu_custom_call.1} parent=11 // pred_check
          %p437 = pneg %p252
        $region26: #{tpu_custom_call.1} parent=11 // pred_check_branch
          %439 = sbr.rel (%p437) target = $region28
        $region27: #{tpu_custom_call.1} parent=11 // pred_region
          %441 = vsyncadd [#allocation12], 0
          %s442 = sshll.u32 %s8, 4
          %s443 = int_to_ptr.hbm [resolvable:$true] %s442
          %s444 = sshll.u32 [#allocation13], 4
          %s445 = int_to_ptr.vmem [resolvable:$true] %s444
          %450 = dma.hbm_to_vmem [thread:$0]  %s443, 512, %s445, [#allocation12], 128, 128, 8
        $region28: #{tpu_custom_call.1} parent=11 // pred_fallthru
          _
        // Predicated region
        $region29: #{tpu_custom_call.1} parent=11 // pred_check
          %p451 = pneg %p273
        $region30: #{tpu_custom_call.1} parent=11 // pred_check_branch
          %453 = sbr.rel (%p451) target = $region32
        $region31: #{tpu_custom_call.1} parent=11 // pred_region
          %455 = vsyncadd [#allocation15], 0
          %s457 = sshll.u32 %s9, 4
          %s458 = int_to_ptr.hbm [resolvable:$true] %s457
          %s459 = sshll.u32 [#allocation14], 4
          %s460 = int_to_ptr.vmem [resolvable:$true] %s459
          %462 = dma.hbm_to_vmem [thread:$0]  %s458, 128, %s460, [#allocation15]
        $region32: #{tpu_custom_call.1} parent=11 // pred_fallthru
          _
        // Predicated region
        $region33: #{tpu_custom_call.1} parent=11 // pred_check
          %p463 = pneg %p294
        $region34: #{tpu_custom_call.1} parent=11 // pred_check_branch
          %465 = sbr.rel (%p463) target = $region36
        $region35: #{tpu_custom_call.1} parent=11 // pred_region
          _
        $region36: #{tpu_custom_call.1} parent=11 // pred_fallthru
          _
        // Predicated region
        $region37: #{tpu_custom_call.1} parent=11 // pred_check
          %p466 = pneg %p315
        $region38: #{tpu_custom_call.1} parent=11 // pred_check_branch
          %468 = sbr.rel (%p466) target = $region40
        $region39: #{tpu_custom_call.1} parent=11 // pred_region
          _
        $region40: #{tpu_custom_call.1} parent=11 // pred_fallthru
          _
      $region12: #{tpu_custom_call.1} parent=5 // pred_fallthru
        _
      %p469 = scmp.lt.s32.totalorder %s38, 2
      // Predicated region
      $region41: #{tpu_custom_call.1} parent=5 // pred_check
        %p470 = pneg %p469
      $region42: #{tpu_custom_call.1} parent=5 // pred_check_branch
        %472 = sbr.rel (%p470) target = $region44
      $region43: #{tpu_custom_call.1} parent=5 // pred_region
        // Predicated region
        $region45: #{tpu_custom_call.1} parent=43 // pred_check
          %p473 = pneg %p58
        $region46: #{tpu_custom_call.1} parent=43 // pred_check_branch
          %475 = sbr.rel (%p473) target = $region48
        $region47: #{tpu_custom_call.1} parent=43 // pred_region
          %s476 = sand.u32 %s48, 1
          %s477 = scalar_lea.sflag [#allocation3], %s476
          %s478 = sand.u32 %s48, 1
          %s479 = smul.addr %s478, 64
          %s480 = scalar_lea.vmem [#allocation2], %s479
          %s481 = smul.u32 8, %s38
          %483 = vsyncadd %s477, 0
          %s484 = smul.addr %s481, 8
          %s485 = scalar_lea.hbm %s0, %s484
          %s486 = sshll.u32 %s485, 4
          %s487 = int_to_ptr.hbm [resolvable:$true] %s486
          %s488 = sshll.u32 %s480, 4
          %s489 = int_to_ptr.vmem [resolvable:$true] %s488
          %494 = dma.hbm_to_vmem [thread:$0]  %s487, 1024, %s489, %s477, 128, 128, 8
        $region48: #{tpu_custom_call.1} parent=43 // pred_fallthru
          _
        // Predicated region
        $region49: #{tpu_custom_call.1} parent=43 // pred_check
          %p495 = pneg %p84
        $region50: #{tpu_custom_call.1} parent=43 // pred_check_branch
          %497 = sbr.rel (%p495) target = $region52
        $region51: #{tpu_custom_call.1} parent=43 // pred_region
          %s498 = sand.u32 %s38, 1
          %s499 = scalar_lea.sflag [#allocation6], %s498
          %s500 = sand.u32 %s74, 1
          %s501 = smul.addr %s500, 64
          %s502 = scalar_lea.vmem [#allocation5], %s501
          %s503 = smul.u32 8, %s38
          %505 = vsyncadd %s499, 0
          %s506 = smul.addr %s503, 8
          %s507 = scalar_lea.hbm %s1, %s506
          %s508 = sshll.u32 %s507, 4
          %s509 = int_to_ptr.hbm [resolvable:$true] %s508
          %s510 = sshll.u32 %s502, 4
          %s511 = int_to_ptr.vmem [resolvable:$true] %s510
          %516 = dma.hbm_to_vmem [thread:$0]  %s509, 1024, %s511, %s499, 128, 128, 8
        $region52: #{tpu_custom_call.1} parent=43 // pred_fallthru
          _
        // Predicated region
        $region53: #{tpu_custom_call.1} parent=43 // pred_check
          %p517 = pneg %p110
        $region54: #{tpu_custom_call.1} parent=43 // pred_check_branch
          %519 = sbr.rel (%p517) target = $region56
        $region55: #{tpu_custom_call.1} parent=43 // pred_region
          %s520 = sand.u32 %s38, 1
          %s521 = scalar_lea.sflag [#allocation6], %s520
          %s522 = sand.u32 %s100, 1
          %s523 = smul.addr %s522, 8
          %s524 = scalar_lea.vmem [#allocation7], %s523
          %526 = vsyncadd %s521, 0
          %s527 = smul.addr %s38, 8
          %s528 = scalar_lea.hbm %s2, %s527
          %s530 = sshll.u32 %s528, 4
          %s531 = int_to_ptr.hbm [resolvable:$true] %s530
          %s532 = sshll.u32 %s524, 4
          %s533 = int_to_ptr.vmem [resolvable:$true] %s532
          %535 = dma.hbm_to_vmem [thread:$0]  %s531, 128, %s533, %s521
        $region56: #{tpu_custom_call.1} parent=43 // pred_fallthru
          _
        // Predicated region
        $region57: #{tpu_custom_call.1} parent=43 // pred_check
          %p536 = pneg %p136
        $region58: #{tpu_custom_call.1} parent=43 // pred_check_branch
          %538 = sbr.rel (%p536) target = $region60
        $region59: #{tpu_custom_call.1} parent=43 // pred_region
          %s539 = sand.u32 %s38, 1
          %s540 = scalar_lea.sflag [#allocation9], %s539
          %s541 = sand.u32 %s126, 1
          %s542 = smul.addr %s541, 8
          %s543 = scalar_lea.vmem [#allocation8], %s542
          %545 = vsyncadd %s540, 0
          %s546 = smul.addr %s38, 8
          %s547 = scalar_lea.hbm %s3, %s546
          %s549 = sshll.u32 %s547, 4
          %s550 = int_to_ptr.hbm [resolvable:$true] %s549
          %s551 = sshll.u32 %s543, 4
          %s552 = int_to_ptr.vmem [resolvable:$true] %s551
          %554 = dma.hbm_to_vmem [thread:$0]  %s550, 128, %s552, %s540
        $region60: #{tpu_custom_call.1} parent=43 // pred_fallthru
          _
        // Predicated region
        $region61: #{tpu_custom_call.1} parent=43 // pred_check
          %p555 = pneg %p162
        $region62: #{tpu_custom_call.1} parent=43 // pred_check_branch
          %557 = sbr.rel (%p555) target = $region64
        $region63: #{tpu_custom_call.1} parent=43 // pred_region
          %p558 = scmp.lt.s32.totalorder %s38, 1
          %s559 = scalar_select %p558, %s38, 1
          %s560 = smul.addr %s559, 8
          %s561 = scalar_lea.vmem %s4, %s560
        $region64: #{tpu_custom_call.1} parent=43 // pred_fallthru
          _
      $region44: #{tpu_custom_call.1} parent=5 // pred_fallthru
        _
      %p562 = scmp.le.s32.totalorder 1, %s38
      %p563 = scmp.lt.s32.totalorder %s38, 3
      %p564 = pnand %p562, %p563
      %p565 = pneg %p564
      // Predicated region
      $region65: #{tpu_custom_call.1} parent=5 // pred_check
        _
      $region66: #{tpu_custom_call.1} parent=5 // pred_check_branch
        %567 = sbr.rel (%p564) target = $region68
      $region67: #{tpu_custom_call.1} parent=5 // pred_region
        %s568 = ssub.s32 %s38, 1
        %s569 = sand.u32 %s51, 1
        %s570 = scalar_lea.sflag [#allocation3], %s569
        %s571 = sand.u32 %s51, 1
        %s572 = smul.addr %s571, 64
        %s573 = scalar_lea.vmem [#allocation2], %s572
        // Predicated region
        $region69: #{tpu_custom_call.1} parent=67 // pred_check
          %p574 = pneg %p64
        $region70: #{tpu_custom_call.1} parent=67 // pred_check_branch
          %576 = sbr.rel (%p574) target = $region72
        $region71: #{tpu_custom_call.1} parent=67 // pred_region
          %578 = dma.done %s570, 1024
        $region72: #{tpu_custom_call.1} parent=67 // pred_fallthru
          _
        %s579 = sand.u32 %s43, 1
        %s580 = scalar_lea.sflag [#allocation6], %s579
        %s581 = sand.u32 %s77, 1
        %s582 = smul.addr %s581, 64
        %s583 = scalar_lea.vmem [#allocation5], %s582
        // Predicated region
        $region73: #{tpu_custom_call.1} parent=67 // pred_check
          %p584 = pneg %p90
        $region74: #{tpu_custom_call.1} parent=67 // pred_check_branch
          %586 = sbr.rel (%p584) target = $region76
        $region75: #{tpu_custom_call.1} parent=67 // pred_region
          %588 = dma.done %s580, 1024
        $region76: #{tpu_custom_call.1} parent=67 // pred_fallthru
          _
        %s589 = sand.u32 %s43, 1
        %s590 = scalar_lea.sflag [#allocation6], %s589
        %s591 = sand.u32 %s103, 1
        %s592 = smul.addr %s591, 8
        %s593 = scalar_lea.vmem [#allocation7], %s592
        // Predicated region
        $region77: #{tpu_custom_call.1} parent=67 // pred_check
          %p594 = pneg %p116
        $region78: #{tpu_custom_call.1} parent=67 // pred_check_branch
          %596 = sbr.rel (%p594) target = $region80
        $region79: #{tpu_custom_call.1} parent=67 // pred_region
          %598 = dma.done %s590, 128
        $region80: #{tpu_custom_call.1} parent=67 // pred_fallthru
          _
        %s599 = sand.u32 %s43, 1
        %s600 = scalar_lea.sflag [#allocation9], %s599
        %s601 = sand.u32 %s129, 1
        %s602 = smul.addr %s601, 8
        %s603 = scalar_lea.vmem [#allocation8], %s602
        // Predicated region
        $region81: #{tpu_custom_call.1} parent=67 // pred_check
          %p604 = pneg %p142
        $region82: #{tpu_custom_call.1} parent=67 // pred_check_branch
          %606 = sbr.rel (%p604) target = $region84
        $region83: #{tpu_custom_call.1} parent=67 // pred_region
          %608 = dma.done %s600, 128
        $region84: #{tpu_custom_call.1} parent=67 // pred_fallthru
          _
        // Predicated region
        $region85: #{tpu_custom_call.1} parent=67 // pred_check
          %p609 = pneg %p189
        $region86: #{tpu_custom_call.1} parent=67 // pred_check_branch
          %611 = sbr.rel (%p609) target = $region88
        $region87: #{tpu_custom_call.1} parent=67 // pred_region
          %613 = dma.done [#allocation9], 512
        $region88: #{tpu_custom_call.1} parent=67 // pred_fallthru
          _
        // Predicated region
        $region89: #{tpu_custom_call.1} parent=67 // pred_check
          %p614 = pneg %p231
        $region90: #{tpu_custom_call.1} parent=67 // pred_check_branch
          %616 = sbr.rel (%p614) target = $region92
        $region91: #{tpu_custom_call.1} parent=67 // pred_region
          %618 = dma.done [#allocation12], 16
        $region92: #{tpu_custom_call.1} parent=67 // pred_fallthru
          _
        // Predicated region
        $region93: #{tpu_custom_call.1} parent=67 // pred_check
          %p619 = pneg %p252
        $region94: #{tpu_custom_call.1} parent=67 // pred_check_branch
          %621 = sbr.rel (%p619) target = $region96
        $region95: #{tpu_custom_call.1} parent=67 // pred_region
          %623 = dma.done [#allocation12], 512
        $region96: #{tpu_custom_call.1} parent=67 // pred_fallthru
          _
        // Predicated region
        $region97: #{tpu_custom_call.1} parent=67 // pred_check
          %p624 = pneg %p273
        $region98: #{tpu_custom_call.1} parent=67 // pred_check_branch
          %626 = sbr.rel (%p624) target = $region100
        $region99: #{tpu_custom_call.1} parent=67 // pred_region
          %628 = dma.done [#allocation15], 128
        $region100: #{tpu_custom_call.1} parent=67 // pred_fallthru
          _
        %s629 = sand.u32 %s51, 1
        %s630 = scalar_lea.sflag [#allocation3], %s629
        %s631 = sand.u32 %s51, 1
        %s632 = smul.addr %s631, 64
        %s633 = scalar_lea.vmem [#allocation2], %s632
        %p634 = pneg %p64
        %p635 = pneg %p61
        %s636 = sand.u32 %s43, 1
        %s637 = scalar_lea.sflag [#allocation6], %s636
        %s638 = sand.u32 %s77, 1
        %s639 = smul.addr %s638, 64
        %s640 = scalar_lea.vmem [#allocation5], %s639
        %p641 = pneg %p90
        %p642 = pneg %p87
        %s643 = sand.u32 %s43, 1
        %s644 = scalar_lea.sflag [#allocation6], %s643
        %s645 = sand.u32 %s103, 1
        %s646 = smul.addr %s645, 8
        %s647 = scalar_lea.vmem [#allocation7], %s646
        %p648 = pneg %p116
        %p649 = pneg %p113
        %s650 = sand.u32 %s43, 1
        %s651 = scalar_lea.sflag [#allocation9], %s650
        %s652 = sand.u32 %s129, 1
        %s653 = smul.addr %s652, 8
        %s654 = scalar_lea.vmem [#allocation8], %s653
        %p655 = pneg %p142
        %p656 = pneg %p139
        %p657 = scmp.lt.s32.totalorder %s43, 1
        %s658 = scalar_select %p657, %s43, 1
        %s659 = smul.addr %s658, 8
        %s660 = scalar_lea.vmem %s4, %s659
        %p661 = pneg %p168
        %p662 = pneg %p165
        %p663 = pneg %p189
        %p664 = pneg %p186
        %p665 = pneg %p210
        %p666 = pneg %p207
        %p667 = pneg %p231
        %p668 = pneg %p228
        %p669 = pneg %p252
        %p670 = pneg %p249
        %p671 = pneg %p273
        %p672 = pneg %p270
        %p673 = pneg %p294
        %p674 = pneg %p291
        %p675 = pneg %p315
        %p676 = pneg %p312
        %p677 = pneg %p341
        %p678 = pneg %p338
        %s679 = sand.u32 %s328, 1
        %s680 = scalar_lea.sflag [#allocation4], %s679
        %s681 = sand.u32 %s328, 1
        %s682 = smul.addr %s681, 8
        %s683 = scalar_lea.vmem [#allocation16], %s682
        %p684 = pneg %p367
        %p685 = pneg %p364
        %s686 = sand.u32 %s43, 1
        %s687 = scalar_lea.sflag [#allocation18], %s686
        %s688 = sand.u32 %s354, 1
        %s689 = smul.addr %s688, 8
        %s690 = scalar_lea.vmem [#allocation17], %s689
        %p691 = pneg %p393
        %p692 = pneg %p390
        %s693 = sand.u32 %s43, 1
        %s694 = scalar_lea.sflag [#allocation18], %s693
        %s695 = sand.u32 %s380, 1
        %s696 = smul.addr %s695, 8
        %s697 = scalar_lea.vmem [#allocation19], %s696
        %s698 = smul.u32 8, %s43
        %s699 = smul.u32 8, %s43
        %p700 = scmp.lt.s32.totalorder %s43, 1
        %s701 = scalar_select %p700, %s43, 1
        %s702 = smul.addr %s701, 8
        %s703 = scalar_lea.vmem %s4, %s702
        %v704 = vld [vmem:[%s593] sm:$0xff]
        %v705 = vld [vmem:[%s603] sm:$0xff]
        %v706 = vld [vmem:[#allocation10] sm:$0xff]
        %v707 = vld [vmem:[#allocation10 + $0x8] sm:$0xff]
        %v708 = vld [vmem:[#allocation10 + $0x10] sm:$0xff]
        %v709 = vld [vmem:[#allocation10 + $0x18] sm:$0xff]
        %v710 = vld [vmem:[%s6] sm:$0x1]
        %v712 = vperm.slane %v710, 0
        %vm714 = vcmask 261120
        %v716 = vsel %vm714, %v704, 0
        %718 = vmatpush.msra.mxu0 0.0
        %719 = vmatpush.msra.mxu0 0.0
        %720 = vmatpush.msra.mxu0 0.0
        %721 = vmatpush.msra.mxu0 0.0
        %722 = vmatpush.msra.mxu0 0.0
        %723 = vmatpush.msra.mxu0 0.0
        %724 = vmatpush.msra.mxu0 0.0
        %725 = vmatpush.msra.mxu0 0.0
        %726 = vmatpush.msra.mxu0 0.0
        %727 = vmatpush.msra.mxu0 0.0
        %728 = vmatpush.msra.mxu0 0.0
        %729 = vmatpush.msra.mxu0 0.0
        %730 = vmatpush.msra.mxu0 %v709
        %731 = vmatpush.msra.mxu0 %v708
        %732 = vmatpush.msra.mxu0 %v707
        %733 = vmatpush.msra.mxu0 %v706
        %734 = vmatmul.f32.gmra.mxu0 %v716
        %v735 = vpop.f32.mrf.mxu0
        %v736 = vadd.f32 %v712, %v735
        %737 = vdwg.mxu0
        %v738 = vld [vmem:[%s573] sm:$0xff]
        %v739 = vld [vmem:[%s573 + $0x8] sm:$0xff]
        %v740 = vld [vmem:[%s573 + $0x10] sm:$0xff]
        %v741 = vld [vmem:[%s573 + $0x18] sm:$0xff]
        %v742 = vld [vmem:[%s573 + $0x20] sm:$0xff]
        %v743 = vld [vmem:[%s573 + $0x28] sm:$0xff]
        %v744 = vld [vmem:[%s573 + $0x30] sm:$0xff]
        %v745 = vld [vmem:[%s573 + $0x38] sm:$0xff]
        %v747 = vrot.slane %v736, 1
        %v748 = vrot.slane %v736, 2
        %v749 = vrot.slane %v736, 3
        %v750 = vrot.slane %v736, 4
        %v751 = vrot.slane %v736, 5
        %v752 = vrot.slane %v736, 6
        %v753 = vrot.slane %v736, 7
        %v754 = vperm.slane %v736, 0
        %v755 = vperm.slane %v747, 0
        %v756 = vperm.slane %v748, 0
        %v757 = vperm.slane %v749, 0
        %v758 = vperm.slane %v750, 0
        %v759 = vperm.slane %v751, 0
        %v760 = vperm.slane %v752, 0
        %v761 = vperm.slane %v753, 0
        %v770 = vadd.f32 %v738, %v754
        %v771 = vadd.f32 %v739, %v755
        %v772 = vadd.f32 %v740, %v756
        %v773 = vadd.f32 %v741, %v757
        %v774 = vadd.f32 %v742, %v758
        %v775 = vadd.f32 %v743, %v759
        %v776 = vadd.f32 %v744, %v760
        %v777 = vadd.f32 %v745, %v761
        %v778 = vtanh.pop %v770
        %v779 = vtanh.pop %v771
        %v780 = vtanh.pop %v772
        %v781 = vtanh.pop %v773
        %v782 = vtanh.pop %v774
        %v783 = vtanh.pop %v775
        %v784 = vtanh.pop %v776
        %v785 = vtanh.pop %v777
        %v786 = vld [vmem:[#allocation11] sm:$0x1]
        %v788 = vperm.slane %v786, 0
        %v790 = vmul.f32 %v778, %v788
        %v791 = vmul.f32 %v779, %v788
        %v792 = vmul.f32 %v780, %v788
        %v793 = vmul.f32 %v781, %v788
        %v794 = vmul.f32 %v782, %v788
        %v795 = vmul.f32 %v783, %v788
        %v796 = vmul.f32 %v784, %v788
        %v797 = vmul.f32 %v785, %v788
        %v798 = vsel %vm714, %v790, 0.0
        %799 = vadd.xlane.f32.xlu0 %v798
        %v800 = vpop.xlane.xlu0 %799
        %v801 = vsel %vm714, %v791, 0.0
        %802 = vadd.xlane.f32.xlu0 %v801
        %v803 = vpop.xlane.xlu0 %802
        %v804 = vsel %vm714, %v792, 0.0
        %805 = vadd.xlane.f32.xlu0 %v804
        %v806 = vpop.xlane.xlu0 %805
        %v807 = vsel %vm714, %v793, 0.0
        %808 = vadd.xlane.f32.xlu0 %v807
        %v809 = vpop.xlane.xlu0 %808
        %v810 = vsel %vm714, %v794, 0.0
        %811 = vadd.xlane.f32.xlu0 %v810
        %v812 = vpop.xlane.xlu0 %811
        %v813 = vsel %vm714, %v795, 0.0
        %814 = vadd.xlane.f32.xlu0 %v813
        %v815 = vpop.xlane.xlu0 %814
        %v816 = vsel %vm714, %v796, 0.0
        %817 = vadd.xlane.f32.xlu0 %v816
        %v818 = vpop.xlane.xlu0 %817
        %v819 = vsel %vm714, %v797, 0.0
        %820 = vadd.xlane.f32.xlu0 %v819
        %v821 = vpop.xlane.xlu0 %820
        %v830 = vlaneseq
        %v831 = vand.u32 %v830, 127
        %v832 = vperm.slane %v800, %v831
        %v833 = vperm.slane %v803, %v831
        %v834 = vperm.slane %v806, %v831
        %v835 = vperm.slane %v809, %v831
        %v836 = vperm.slane %v812, %v831
        %v837 = vperm.slane %v815, %v831
        %v838 = vperm.slane %v818, %v831
        %v839 = vperm.slane %v821, %v831
        %vm840 = vcmask 1041409
        %v841 = vsel %vm840, %v833, %v832
        %vm842 = vcmask 1042434
        %v843 = vsel %vm842, %v834, %v841
        %vm844 = vcmask 1043459
        %v845 = vsel %vm844, %v835, %v843
        %vm846 = vcmask 1044484
        %v847 = vsel %vm846, %v836, %v845
        %vm848 = vcmask 1045509
        %v849 = vsel %vm848, %v837, %v847
        %vm850 = vcmask 1046534
        %v851 = vsel %vm850, %v838, %v849
        %vm852 = vcmask 1047559
        %v853 = vsel %vm852, %v839, %v851
        %vm855 = vcmask 64512
        %v856 = vsel %vm855, %v853, -inf
        %857 = vmax.xlane.f32.xlu0 %v856
        %v858 = vpop.xlane.xlu0 %857
        %v860 = vperm.slane %v858, 0
        %v861 = vperm.slane %v858, 1
        %v862 = vperm.slane %v858, 2
        %v863 = vperm.slane %v858, 3
        %v864 = vperm.slane %v858, 4
        %v865 = vperm.slane %v858, 5
        %v866 = vperm.slane %v858, 6
        %v867 = vperm.slane %v858, 7
        %v876 = vsub.f32 %v800, %v860
        %v877 = vsub.f32 %v803, %v861
        %v878 = vsub.f32 %v806, %v862
        %v879 = vsub.f32 %v809, %v863
        %v880 = vsub.f32 %v812, %v864
        %v881 = vsub.f32 %v815, %v865
        %v882 = vsub.f32 %v818, %v866
        %v883 = vsub.f32 %v821, %v867
        %v884 = vmul.f32 %v876, 1.442695
        %v885 = vpow.pop %v884
        %v886 = vmul.f32 %v877, 1.442695
        %v887 = vpow.pop %v886
        %v888 = vmul.f32 %v878, 1.442695
        %v889 = vpow.pop %v888
        %v890 = vmul.f32 %v879, 1.442695
        %v891 = vpow.pop %v890
        %v892 = vmul.f32 %v880, 1.442695
        %v893 = vpow.pop %v892
        %v894 = vmul.f32 %v881, 1.442695
        %v895 = vpow.pop %v894
        %v896 = vmul.f32 %v882, 1.442695
        %v897 = vpow.pop %v896
        %v898 = vmul.f32 %v883, 1.442695
        %v899 = vpow.pop %v898
        %908 = vset.pattern.permute.xlu0 0
        %909 = vperm.xlu0 %908, %v885
        %v910 = vpop.permute.xlu0 %909
        %911 = vset.pattern.permute.xlu0 0
        %912 = vperm.xlu0 %911, %v887
        %v913 = vpop.permute.xlu0 %912
        %914 = vset.pattern.permute.xlu0 0
        %915 = vperm.xlu0 %914, %v889
        %v916 = vpop.permute.xlu0 %915
        %917 = vset.pattern.permute.xlu0 0
        %918 = vperm.xlu0 %917, %v891
        %v919 = vpop.permute.xlu0 %918
        %920 = vset.pattern.permute.xlu0 0
        %921 = vperm.xlu0 %920, %v893
        %v922 = vpop.permute.xlu0 %921
        %923 = vset.pattern.permute.xlu0 0
        %924 = vperm.xlu0 %923, %v895
        %v925 = vpop.permute.xlu0 %924
        %926 = vset.pattern.permute.xlu0 0
        %927 = vperm.xlu0 %926, %v897
        %v928 = vpop.permute.xlu0 %927
        %929 = vset.pattern.permute.xlu0 0
        %930 = vperm.xlu0 %929, %v899
        %v931 = vpop.permute.xlu0 %930
        %v932 = vperm.slane %v910, %v831
        %v933 = vperm.slane %v913, %v831
        %v934 = vperm.slane %v916, %v831
        %v935 = vperm.slane %v919, %v831
        %v936 = vperm.slane %v922, %v831
        %v937 = vperm.slane %v925, %v831
        %v938 = vperm.slane %v928, %v831
        %v939 = vperm.slane %v931, %v831
        %v940 = vsel %vm840, %v933, %v932
        %v941 = vsel %vm842, %v934, %v940
        %v942 = vsel %vm844, %v935, %v941
        %v943 = vsel %vm846, %v936, %v942
        %v944 = vsel %vm848, %v937, %v943
        %v945 = vsel %vm850, %v938, %v944
        %v946 = vsel %vm852, %v939, %v945
        %v948 = vsel %vm855, %v946, 0.0
        %949 = vadd.xlane.f32.xlu0 %v948
        %v950 = vpop.xlane.xlu0 %949
        %v952 = vperm.slane %v950, 0
        %v953 = vperm.slane %v950, 1
        %v954 = vperm.slane %v950, 2
        %v955 = vperm.slane %v950, 3
        %v956 = vperm.slane %v950, 4
        %v957 = vperm.slane %v950, 5
        %v958 = vperm.slane %v950, 6
        %v959 = vperm.slane %v950, 7
        %v968 = vrcp.pop %v952
        %v969 = vmul.f32 %v952, %v968
        %v970 = vsub.f32 1.0, %v969
        %v971 = vmul.f32 %v968, %v970
        %v972 = vadd.f32 %v968, %v971
        %vm973 = vweird.f32 %v952
        %vm974 = vweird.f32 %v968
        %vm975 = vmor %vm973, %vm974
        %v976 = vsel %vm975, %v968, %v972
        %v977 = vand.u32 2147483647, %v952
        %vm978 = vcmp.eq.f32.partialorder %v977, 8.507059e+37
        %v979 = vand.u32 %v952, 2147483648
        %v980 = vor.u32 1.1754944e-38, %v979
        %v981 = vsel %vm978, %v980, %v976
        %v982 = vmul.f32 %v885, %v981
        %v983 = vrcp.pop %v953
        %v984 = vmul.f32 %v953, %v983
        %v985 = vsub.f32 1.0, %v984
        %v986 = vmul.f32 %v983, %v985
        %v987 = vadd.f32 %v983, %v986
        %vm988 = vweird.f32 %v953
        %vm989 = vweird.f32 %v983
        %vm990 = vmor %vm988, %vm989
        %v991 = vsel %vm990, %v983, %v987
        %v992 = vand.u32 2147483647, %v953
        %vm993 = vcmp.eq.f32.partialorder %v992, 8.507059e+37
        %v994 = vand.u32 %v953, 2147483648
        %v995 = vor.u32 1.1754944e-38, %v994
        %v996 = vsel %vm993, %v995, %v991
        %v997 = vmul.f32 %v887, %v996
        %v998 = vrcp.pop %v954
        %v999 = vmul.f32 %v954, %v998
        %v1000 = vsub.f32 1.0, %v999
        %v1001 = vmul.f32 %v998, %v1000
        %v1002 = vadd.f32 %v998, %v1001
        %vm1003 = vweird.f32 %v954
        %vm1004 = vweird.f32 %v998
        %vm1005 = vmor %vm1003, %vm1004
        %v1006 = vsel %vm1005, %v998, %v1002
        %v1007 = vand.u32 2147483647, %v954
        %vm1008 = vcmp.eq.f32.partialorder %v1007, 8.507059e+37
        %v1009 = vand.u32 %v954, 2147483648
        %v1010 = vor.u32 1.1754944e-38, %v1009
        %v1011 = vsel %vm1008, %v1010, %v1006
        %v1012 = vmul.f32 %v889, %v1011
        %v1013 = vrcp.pop %v955
        %v1014 = vmul.f32 %v955, %v1013
        %v1015 = vsub.f32 1.0, %v1014
        %v1016 = vmul.f32 %v1013, %v1015
        %v1017 = vadd.f32 %v1013, %v1016
        %vm1018 = vweird.f32 %v955
        %vm1019 = vweird.f32 %v1013
        %vm1020 = vmor %vm1018, %vm1019
        %v1021 = vsel %vm1020, %v1013, %v1017
        %v1022 = vand.u32 2147483647, %v955
        %vm1023 = vcmp.eq.f32.partialorder %v1022, 8.507059e+37
        %v1024 = vand.u32 %v955, 2147483648
        %v1025 = vor.u32 1.1754944e-38, %v1024
        %v1026 = vsel %vm1023, %v1025, %v1021
        %v1027 = vmul.f32 %v891, %v1026
        %v1028 = vrcp.pop %v956
        %v1029 = vmul.f32 %v956, %v1028
        %v1030 = vsub.f32 1.0, %v1029
        %v1031 = vmul.f32 %v1028, %v1030
        %v1032 = vadd.f32 %v1028, %v1031
        %vm1033 = vweird.f32 %v956
        %vm1034 = vweird.f32 %v1028
        %vm1035 = vmor %vm1033, %vm1034
        %v1036 = vsel %vm1035, %v1028, %v1032
        %v1037 = vand.u32 2147483647, %v956
        %vm1038 = vcmp.eq.f32.partialorder %v1037, 8.507059e+37
        %v1039 = vand.u32 %v956, 2147483648
        %v1040 = vor.u32 1.1754944e-38, %v1039
        %v1041 = vsel %vm1038, %v1040, %v1036
        %v1042 = vmul.f32 %v893, %v1041
        %v1043 = vrcp.pop %v957
        %v1044 = vmul.f32 %v957, %v1043
        %v1045 = vsub.f32 1.0, %v1044
        %v1046 = vmul.f32 %v1043, %v1045
        %v1047 = vadd.f32 %v1043, %v1046
        %vm1048 = vweird.f32 %v957
        %vm1049 = vweird.f32 %v1043
        %vm1050 = vmor %vm1048, %vm1049
        %v1051 = vsel %vm1050, %v1043, %v1047
        %v1052 = vand.u32 2147483647, %v957
        %vm1053 = vcmp.eq.f32.partialorder %v1052, 8.507059e+37
        %v1054 = vand.u32 %v957, 2147483648
        %v1055 = vor.u32 1.1754944e-38, %v1054
        %v1056 = vsel %vm1053, %v1055, %v1051
        %v1057 = vmul.f32 %v895, %v1056
        %v1058 = vrcp.pop %v958
        %v1059 = vmul.f32 %v958, %v1058
        %v1060 = vsub.f32 1.0, %v1059
        %v1061 = vmul.f32 %v1058, %v1060
        %v1062 = vadd.f32 %v1058, %v1061
        %vm1063 = vweird.f32 %v958
        %vm1064 = vweird.f32 %v1058
        %vm1065 = vmor %vm1063, %vm1064
        %v1066 = vsel %vm1065, %v1058, %v1062
        %v1067 = vand.u32 2147483647, %v958
        %vm1068 = vcmp.eq.f32.partialorder %v1067, 8.507059e+37
        %v1069 = vand.u32 %v958, 2147483648
        %v1070 = vor.u32 1.1754944e-38, %v1069
        %v1071 = vsel %vm1068, %v1070, %v1066
        %v1072 = vmul.f32 %v897, %v1071
        %v1073 = vrcp.pop %v959
        %v1074 = vmul.f32 %v959, %v1073
        %v1075 = vsub.f32 1.0, %v1074
        %v1076 = vmul.f32 %v1073, %v1075
        %v1077 = vadd.f32 %v1073, %v1076
        %vm1078 = vweird.f32 %v959
        %vm1079 = vweird.f32 %v1073
        %vm1080 = vmor %vm1078, %vm1079
        %v1081 = vsel %vm1080, %v1073, %v1077
        %v1082 = vand.u32 2147483647, %v959
        %vm1083 = vcmp.eq.f32.partialorder %v1082, 8.507059e+37
        %v1084 = vand.u32 %v959, 2147483648
        %v1085 = vor.u32 1.1754944e-38, %v1084
        %v1086 = vsel %vm1083, %v1085, %v1081
        %v1087 = vmul.f32 %v899, %v1086
        %v1088 = vld [vmem:[%s583] sm:$0xff]
        %v1089 = vld [vmem:[%s583 + $0x8] sm:$0xff]
        %v1090 = vld [vmem:[%s583 + $0x10] sm:$0xff]
        %v1091 = vld [vmem:[%s583 + $0x18] sm:$0xff]
        %v1092 = vld [vmem:[%s583 + $0x20] sm:$0xff]
        %v1093 = vld [vmem:[%s583 + $0x28] sm:$0xff]
        %v1094 = vld [vmem:[%s583 + $0x30] sm:$0xff]
        %v1095 = vld [vmem:[%s583 + $0x38] sm:$0xff]
        %1097 = vset.pattern.permute.xlu0 0
        %1098 = vperm.xlu0 %1097, %v982
        %v1099 = vpop.permute.xlu0 %1098
        %1102 = vset.pattern.permute.xlu0 0
        %1103 = vperm.xlu0 %1102, %v997
        %v1104 = vpop.permute.xlu0 %1103
        %1107 = vset.pattern.permute.xlu0 0
        %1108 = vperm.xlu0 %1107, %v1012
        %v1109 = vpop.permute.xlu0 %1108
        %1112 = vset.pattern.permute.xlu0 0
        %1113 = vperm.xlu0 %1112, %v1027
        %v1114 = vpop.permute.xlu0 %1113
        %1117 = vset.pattern.permute.xlu0 0
        %1118 = vperm.xlu0 %1117, %v1042
        %v1119 = vpop.permute.xlu0 %1118
        %1122 = vset.pattern.permute.xlu0 0
        %1123 = vperm.xlu0 %1122, %v1057
        %v1124 = vpop.permute.xlu0 %1123
        %1127 = vset.pattern.permute.xlu0 0
        %1128 = vperm.xlu0 %1127, %v1072
        %v1129 = vpop.permute.xlu0 %1128
        %1132 = vset.pattern.permute.xlu0 0
        %1133 = vperm.xlu0 %1132, %v1087
        %v1134 = vpop.permute.xlu0 %1133
        %v1136 = vmul.f32 %v1099, %v1088
        %v1137 = vmul.f32 %v1104, %v1089
        %v1138 = vmul.f32 %v1109, %v1090
        %v1139 = vmul.f32 %v1114, %v1091
        %v1140 = vmul.f32 %v1119, %v1092
        %v1141 = vmul.f32 %v1124, %v1093
        %v1142 = vmul.f32 %v1129, %v1094
        %v1143 = vmul.f32 %v1134, %v1095
        %v1144 = vsel %vm714, %v1136, 0.0
        %v1145 = vrot.slane %v1144, 4
        %v1146 = vadd.f32 %v1144, %v1145
        %v1147 = vrot.slane %v1146, 2
        %v1148 = vadd.f32 %v1146, %v1147
        %v1149 = vrot.slane %v1148, 1
        %v1150 = vadd.f32 %v1148, %v1149
        %v1151 = vsel %vm714, %v1137, 0.0
        %v1152 = vrot.slane %v1151, 4
        %v1153 = vadd.f32 %v1151, %v1152
        %v1154 = vrot.slane %v1153, 2
        %v1155 = vadd.f32 %v1153, %v1154
        %v1156 = vrot.slane %v1155, 1
        %v1157 = vadd.f32 %v1155, %v1156
        %v1158 = vsel %vm714, %v1138, 0.0
        %v1159 = vrot.slane %v1158, 4
        %v1160 = vadd.f32 %v1158, %v1159
        %v1161 = vrot.slane %v1160, 2
        %v1162 = vadd.f32 %v1160, %v1161
        %v1163 = vrot.slane %v1162, 1
        %v1164 = vadd.f32 %v1162, %v1163
        %v1165 = vsel %vm714, %v1139, 0.0
        %v1166 = vrot.slane %v1165, 4
        %v1167 = vadd.f32 %v1165, %v1166
        %v1168 = vrot.slane %v1167, 2
        %v1169 = vadd.f32 %v1167, %v1168
        %v1170 = vrot.slane %v1169, 1
        %v1171 = vadd.f32 %v1169, %v1170
        %v1172 = vsel %vm714, %v1140, 0.0
        %v1173 = vrot.slane %v1172, 4
        %v1174 = vadd.f32 %v1172, %v1173
        %v1175 = vrot.slane %v1174, 2
        %v1176 = vadd.f32 %v1174, %v1175
        %v1177 = vrot.slane %v1176, 1
        %v1178 = vadd.f32 %v1176, %v1177
        %v1179 = vsel %vm714, %v1141, 0.0
        %v1180 = vrot.slane %v1179, 4
        %v1181 = vadd.f32 %v1179, %v1180
        %v1182 = vrot.slane %v1181, 2
        %v1183 = vadd.f32 %v1181, %v1182
        %v1184 = vrot.slane %v1183, 1
        %v1185 = vadd.f32 %v1183, %v1184
        %v1186 = vsel %vm714, %v1142, 0.0
        %v1187 = vrot.slane %v1186, 4
        %v1188 = vadd.f32 %v1186, %v1187
        %v1189 = vrot.slane %v1188, 2
        %v1190 = vadd.f32 %v1188, %v1189
        %v1191 = vrot.slane %v1190, 1
        %v1192 = vadd.f32 %v1190, %v1191
        %v1193 = vsel %vm714, %v1143, 0.0
        %v1194 = vrot.slane %v1193, 4
        %v1195 = vadd.f32 %v1193, %v1194
        %v1196 = vrot.slane %v1195, 2
        %v1197 = vadd.f32 %v1195, %v1196
        %v1198 = vrot.slane %v1197, 1
        %v1199 = vadd.f32 %v1197, %v1198
        %v1200 = vld [vmem:[#allocation13] sm:$0xff]
        %v1201 = vld [vmem:[#allocation13 + $0x8] sm:$0xff]
        %v1202 = vld [vmem:[#allocation13 + $0x10] sm:$0xff]
        %v1203 = vld [vmem:[#allocation13 + $0x18] sm:$0xff]
        %v1204 = vld [vmem:[%s703] sm:$0xff]
        %v1205 = vld [vmem:[#allocation14] sm:$0xff]
        %v1207 = vsel %vm855, %v1204, 0
        %1209 = vmatpush.msra.mxu0 0.0
        %1210 = vmatpush.msra.mxu0 0.0
        %1211 = vmatpush.msra.mxu0 0.0
        %1212 = vmatpush.msra.mxu0 0.0
        %1213 = vmatpush.msra.mxu0 0.0
        %1214 = vmatpush.msra.mxu0 0.0
        %1215 = vmatpush.msra.mxu0 0.0
        %1216 = vmatpush.msra.mxu0 0.0
        %1217 = vmatpush.msra.mxu0 0.0
        %1218 = vmatpush.msra.mxu0 0.0
        %1219 = vmatpush.msra.mxu0 0.0
        %1220 = vmatpush.msra.mxu0 0.0
        %1221 = vmatpush.msra.mxu0 0.0
        %1222 = vmatpush.msra.mxu0 0.0
        %1223 = vmatpush.msra.mxu0 0.0
        %1224 = vmatpush.msra.mxu0 %v1205
        %1225 = vmatmul.f32.gmra.mxu0 %v1207
        %v1226 = vpop.f32.mrf.mxu0
        %v1227 = vadd.f32 0.0, %v1226
        %1228 = vdwg.mxu0
        %v1237 = vsel %vm840, %v1157, %v1150
        %v1238 = vsel %vm842, %v1164, %v1237
        %v1239 = vsel %vm844, %v1171, %v1238
        %v1240 = vsel %vm846, %v1178, %v1239
        %v1241 = vsel %vm848, %v1185, %v1240
        %v1242 = vsel %vm850, %v1192, %v1241
        %v1243 = vsel %vm852, %v1199, %v1242
        %v1244 = vsel %vm714, %v1243, 0
        %1246 = vmatpush.msra.mxu0 0.0
        %1247 = vmatpush.msra.mxu0 0.0
        %1248 = vmatpush.msra.mxu0 0.0
        %1249 = vmatpush.msra.mxu0 0.0
        %1250 = vmatpush.msra.mxu0 0.0
        %1251 = vmatpush.msra.mxu0 0.0
        %1252 = vmatpush.msra.mxu0 0.0
        %1253 = vmatpush.msra.mxu0 0.0
        %1254 = vmatpush.msra.mxu0 0.0
        %1255 = vmatpush.msra.mxu0 0.0
        %1256 = vmatpush.msra.mxu0 0.0
        %1257 = vmatpush.msra.mxu0 0.0
        %1258 = vmatpush.msra.mxu0 %v1203
        %1259 = vmatpush.msra.mxu0 %v1202
        %1260 = vmatpush.msra.mxu0 %v1201
        %1261 = vmatpush.msra.mxu0 %v1200
        %1262 = vmatmul.f32.gmra.mxu0 %v1244
        %v1263 = vpop.f32.mrf.mxu0
        %v1264 = vadd.f32 %v1227, %v1263
        %1265 = vdwg.mxu0
        %v1266 = vld [vmem:[%s10] sm:$0xff]
        %v1267 = vld [vmem:[%s10 + $0x8] sm:$0xff]
        %v1268 = vld [vmem:[%s10 + $0x10] sm:$0xff]
        %v1269 = vld [vmem:[%s10 + $0x18] sm:$0xff]
        %1270 = vmatpush.msra.mxu0 0.0
        %1271 = vmatpush.msra.mxu0 0.0
        %1272 = vmatpush.msra.mxu0 0.0
        %1273 = vmatpush.msra.mxu0 0.0
        %1274 = vmatpush.msra.mxu0 0.0
        %1275 = vmatpush.msra.mxu0 0.0
        %1276 = vmatpush.msra.mxu0 0.0
        %1277 = vmatpush.msra.mxu0 0.0
        %1278 = vmatpush.msra.mxu0 0.0
        %1279 = vmatpush.msra.mxu0 0.0
        %1280 = vmatpush.msra.mxu0 0.0
        %1281 = vmatpush.msra.mxu0 0.0
        %1282 = vmatpush.msra.mxu0 %v1269
        %1283 = vmatpush.msra.mxu0 %v1268
        %1284 = vmatpush.msra.mxu0 %v1267
        %1285 = vmatpush.msra.mxu0 %v1266
        %1286 = vmatmul.f32.gmra.mxu0 %v716
        %v1287 = vpop.f32.mrf.mxu0
        %v1288 = vadd.f32 0.0, %v1287
        %1289 = vdwg.mxu0
        %v1290 = vadd.f32 %v1264, %v1288
        %v1291 = vld [vmem:[%s11] sm:$0x1]
        %v1293 = vperm.slane %v1291, 0
        %v1295 = vadd.f32 %v1290, %v1293
        %v1296 = vxor.u32 %v1295, 2147483648
        %v1297 = vmul.f32 %v1296, 1.442695
        %v1298 = vpow.pop %v1297
        %v1299 = vadd.f32 %v1298, 1.0
        %v1300 = vrcp.pop %v1299
        %v1301 = vmul.f32 %v1299, %v1300
        %v1302 = vsub.f32 1.0, %v1301
        %v1303 = vmul.f32 %v1300, %v1302
        %v1304 = vadd.f32 %v1300, %v1303
        %vm1305 = vweird.f32 %v1299
        %vm1306 = vweird.f32 %v1300
        %vm1307 = vmor %vm1305, %vm1306
        %v1308 = vsel %vm1307, %v1300, %v1304
        %v1309 = vand.u32 2147483647, %v1299
        %vm1310 = vcmp.eq.f32.partialorder %v1309, 8.507059e+37
        %v1311 = vand.u32 %v1299, 2147483648
        %v1312 = vor.u32 1.1754944e-38, %v1311
        %v1313 = vsel %vm1310, %v1312, %v1308
        %v1314 = vmul.f32 1.0, %v1313
        %v1315 = vtanh.pop %v1295
        %1317 = vrot.lane.b32.xlu0 %v705, 32
        %v1318 = vpop.permute.xlu0 %1317
        %v1320 = vmul.f32 %v1314, %v1318
        %1322 = vrot.lane.b32.xlu0 %v1315, 64
        %v1323 = vpop.permute.xlu0 %1322
        %v1325 = vmul.f32 %v1314, %v1323
        %1327 = vrot.lane.b32.xlu0 %v1325, 32
        %v1328 = vpop.permute.xlu0 %1327
        %v1330 = vadd.f32 %v1320, %v1328
        %v1331 = vtanh.pop %v1330
        %1333 = vrot.lane.b32.xlu0 %v1331, 64
        %v1334 = vpop.permute.xlu0 %1333
        %v1336 = vmul.f32 %v1314, %v1334
        %1338 = vrot.lane.b32.xlu0 %v1336, 32
        %v1339 = vpop.permute.xlu0 %1338
        %1341 = vst.msk [vmem:[%s683] sm:$0xff] %vm714, %v1339
        %1343 = vrot.lane.b32.xlu0 %v1330, 96
        %v1344 = vpop.permute.xlu0 %1343
        %1346 = vst.msk [vmem:[%s690] sm:$0xff] %vm714, %v1344
        %v1347 = vperm.slane %v1099, %v831
        %v1348 = vperm.slane %v1104, %v831
        %v1349 = vperm.slane %v1109, %v831
        %v1350 = vperm.slane %v1114, %v831
        %v1351 = vperm.slane %v1119, %v831
        %v1352 = vperm.slane %v1124, %v831
        %v1353 = vperm.slane %v1129, %v831
        %v1354 = vperm.slane %v1134, %v831
        %v1355 = vsel %vm840, %v1348, %v1347
        %v1356 = vsel %vm842, %v1349, %v1355
        %v1357 = vsel %vm844, %v1350, %v1356
        %v1358 = vsel %vm846, %v1351, %v1357
        %v1359 = vsel %vm848, %v1352, %v1358
        %v1360 = vsel %vm850, %v1353, %v1359
        %v1361 = vsel %vm852, %v1354, %v1360
        %v1363 = vsel %vm855, %v1361, 0.0
        %1364 = vst [vmem:[%s697] sm:$0xff] %v1363
        %s1365 = sand.u32 %s328, 1
        %s1366 = scalar_lea.sflag [#allocation4], %s1365
        %s1367 = sand.u32 %s328, 1
        %s1368 = smul.addr %s1367, 8
        %s1369 = scalar_lea.vmem [#allocation16], %s1368
        %s1370 = sand.u32 %s43, 1
        %s1371 = scalar_lea.sflag [#allocation18], %s1370
        %s1372 = sand.u32 %s354, 1
        %s1373 = smul.addr %s1372, 8
        %s1374 = scalar_lea.vmem [#allocation17], %s1373
        %s1375 = sand.u32 %s43, 1
        %s1376 = scalar_lea.sflag [#allocation18], %s1375
        %s1377 = sand.u32 %s380, 1
        %s1378 = smul.addr %s1377, 8
        %s1379 = scalar_lea.vmem [#allocation19], %s1378
        // Predicated region
        $region101: #{tpu_custom_call.1} parent=67 // pred_check
          %p1380 = pneg %p338
        $region102: #{tpu_custom_call.1} parent=67 // pred_check_branch
          %1382 = sbr.rel (%p1380) target = $region104
        $region103: #{tpu_custom_call.1} parent=67 // pred_region
          %1384 = vsyncadd %s1366, 0
          %s1385 = smul.addr %s43, 8
          %s1386 = scalar_lea.hbm %s12, %s1385
          %s1388 = sshll.u32 %s1369, 4
          %s1389 = int_to_ptr.vmem [resolvable:$true] %s1388
          %s1390 = sshll.u32 %s1386, 4
          %s1391 = int_to_ptr.hbm [resolvable:$true] %s1390
          %1393 = dma.vmem_to_hbm [thread:$0]  %s1389, 128, %s1391, %s1366
        $region104: #{tpu_custom_call.1} parent=67 // pred_fallthru
          _
        // Predicated region
        $region105: #{tpu_custom_call.1} parent=67 // pred_check
          %p1394 = pneg %p364
        $region106: #{tpu_custom_call.1} parent=67 // pred_check_branch
          %1396 = sbr.rel (%p1394) target = $region108
        $region107: #{tpu_custom_call.1} parent=67 // pred_region
          %1398 = vsyncadd %s1371, 0
          %s1399 = smul.addr %s43, 8
          %s1400 = scalar_lea.hbm %s13, %s1399
          %s1402 = sshll.u32 %s1374, 4
          %s1403 = int_to_ptr.vmem [resolvable:$true] %s1402
          %s1404 = sshll.u32 %s1400, 4
          %s1405 = int_to_ptr.hbm [resolvable:$true] %s1404
          %1407 = dma.vmem_to_hbm [thread:$0]  %s1403, 128, %s1405, %s1371
        $region108: #{tpu_custom_call.1} parent=67 // pred_fallthru
          _
        // Predicated region
        $region109: #{tpu_custom_call.1} parent=67 // pred_check
          %p1408 = pneg %p390
        $region110: #{tpu_custom_call.1} parent=67 // pred_check_branch
          %1410 = sbr.rel (%p1408) target = $region112
        $region111: #{tpu_custom_call.1} parent=67 // pred_region
          %1412 = vsyncadd %s1376, 0
          %s1413 = smul.addr %s43, 8
          %s1414 = scalar_lea.hbm %s14, %s1413
          %s1416 = sshll.u32 %s1379, 4
          %s1417 = int_to_ptr.vmem [resolvable:$true] %s1416
          %s1418 = sshll.u32 %s1414, 4
          %s1419 = int_to_ptr.hbm [resolvable:$true] %s1418
          %1421 = dma.vmem_to_hbm [thread:$0]  %s1417, 128, %s1419, %s1376
        $region112: #{tpu_custom_call.1} parent=67 // pred_fallthru
          _
      $region68: #{tpu_custom_call.1} parent=5 // pred_fallthru
        _
      %p1422 = scmp.le.s32.totalorder 2, %s38
      // Predicated region
      $region113: #{tpu_custom_call.1} parent=5 // pred_check
        %p1423 = pneg %p1422
      $region114: #{tpu_custom_call.1} parent=5 // pred_check_branch
        %1425 = sbr.rel (%p1423) target = $region116
      $region115: #{tpu_custom_call.1} parent=5 // pred_region
        %s1426 = ssub.s32 %s38, 2
        // Predicated region
        $region117: #{tpu_custom_call.1} parent=115 // pred_check
          %p1427 = pneg %p344
        $region118: #{tpu_custom_call.1} parent=115 // pred_check_branch
          %1429 = sbr.rel (%p1427) target = $region120
        $region119: #{tpu_custom_call.1} parent=115 // pred_region
          %s1430 = sand.u32 %s329, 1
          %s1431 = scalar_lea.sflag [#allocation4], %s1430
          %s1432 = sand.u32 %s329, 1
          %s1433 = smul.addr %s1432, 8
          %s1434 = scalar_lea.vmem [#allocation16], %s1433
          %1436 = dma.done %s1431, 128
        $region120: #{tpu_custom_call.1} parent=115 // pred_fallthru
          _
        // Predicated region
        $region121: #{tpu_custom_call.1} parent=115 // pred_check
          %p1437 = pneg %p370
        $region122: #{tpu_custom_call.1} parent=115 // pred_check_branch
          %1439 = sbr.rel (%p1437) target = $region124
        $region123: #{tpu_custom_call.1} parent=115 // pred_region
          %s1440 = sand.u32 %s44, 1
          %s1441 = scalar_lea.sflag [#allocation18], %s1440
          %s1442 = sand.u32 %s355, 1
          %s1443 = smul.addr %s1442, 8
          %s1444 = scalar_lea.vmem [#allocation17], %s1443
          %1446 = dma.done %s1441, 128
        $region124: #{tpu_custom_call.1} parent=115 // pred_fallthru
          _
        // Predicated region
        $region125: #{tpu_custom_call.1} parent=115 // pred_check
          %p1447 = pneg %p396
        $region126: #{tpu_custom_call.1} parent=115 // pred_check_branch
          %1449 = sbr.rel (%p1447) target = $region128
        $region127: #{tpu_custom_call.1} parent=115 // pred_region
          %s1450 = sand.u32 %s44, 1
          %s1451 = scalar_lea.sflag [#allocation18], %s1450
          %s1452 = sand.u32 %s381, 1
          %s1453 = smul.addr %s1452, 8
          %s1454 = scalar_lea.vmem [#allocation19], %s1453
          %1456 = dma.done %s1451, 128
        $region128: #{tpu_custom_call.1} parent=115 // pred_fallthru
          _
      $region116: #{tpu_custom_call.1} parent=5 // pred_fallthru
        _
    $region6: #{tpu_custom_call.1} parent=1 // loop_footer
      %s42 = sadd.s32 1, %s38
    $region7: #{tpu_custom_call.1} parent=1 // loop_footer_branch
      %37 = sbr.rel target = $region3
    $region8: #{tpu_custom_call.1} parent=1 // loop_exit
      _
    %1457 = vsyncpa [#allocation3], 1
    %s1458 = scalar_lea.sflag [#allocation3], 1
    %1459 = vsyncpa %s1458, 1
    %1460 = vsyncpa [#allocation6], 1
    %s1461 = scalar_lea.sflag [#allocation6], 1
    %1462 = vsyncpa %s1461, 1
    %1463 = vsyncpa [#allocation9], 1
    %s1464 = scalar_lea.sflag [#allocation9], 1
    %1465 = vsyncpa %s1464, 1
    %1466 = vsyncpa [#allocation12], 1
    %1467 = vsyncpa [#allocation15], 1
    %1468 = vsyncpa [#allocation4], 1
    %s1469 = scalar_lea.sflag [#allocation4], 1
    %1470 = vsyncpa %s1469, 1
    %1471 = vsyncpa [#allocation18], 1
    %s1472 = scalar_lea.sflag [#allocation18], 1
    %1473 = vsyncpa %s1472, 1

// kernel: tpu_custom_call.1
$region0: #{tpu_custom_call.1}
  #allocation0 [shape = 'u32[]', space=smem, size = 0x4, offset = 0x4, fixed_abs, tag = 'smem constant byte address 0x4 - core index']
  #allocation1 [shape = 'u32[72,128]{1,0:T(1,128)}', space=vmem, size = 0x9000, scoped, tag = 'internal scratch']
  %s0 = inlined_call_operand.hbm [shape: f32[16,8,32], index: 0, kind: input, shape index: {}]
  %s1 = inlined_call_operand.hbm [shape: f32[16,8,32], index: 1, kind: input, shape index: {}]
  %s2 = inlined_call_operand.hbm [shape: f32[16,32], index: 2, kind: input, shape index: {}]
  %s3 = inlined_call_operand.hbm [shape: f32[16,32], index: 3, kind: input, shape index: {}]
  %s4 = inlined_call_operand.vmem [shape: f32[16,8], index: 4, kind: input, shape index: {}]
  %s5 = inlined_call_operand.hbm [shape: f32[32,32], index: 5, kind: input, shape index: {}]
  %s6 = inlined_call_operand.vmem [shape: f32[1,32], index: 6, kind: input, shape index: {}]
  %s7 = inlined_call_operand.hbm [shape: f32[1,32], index: 7, kind: input, shape index: {}]
  %s8 = inlined_call_operand.hbm [shape: f32[32,128], index: 8, kind: input, shape index: {}]
  %s9 = inlined_call_operand.hbm [shape: f32[8,128], index: 9, kind: input, shape index: {}]
  %s10 = inlined_call_operand.vmem [shape: f32[32,128], index: 10, kind: input, shape index: {}]
  %s11 = inlined_call_operand.vmem [shape: f32[1,128], index: 11, kind: input, shape index: {}]
  %s12 = inlined_call_operand.hbm [shape: f32[16,32], index: 12, kind: output, shape index: {0}]
  %s13 = inlined_call_operand.hbm [shape: f32[16,32], index: 13, kind: output, shape index: {1}]
  %s14 = inlined_call_operand.vmem [shape: f32[16,8], index: 14, kind: output, shape index: {2}]
  %15 = xla_tuple %s12, %s13, %s14
  %s16 = sld [smem:[#allocation0]]
  $region129: #{tpu_custom_call.1} parent=0
    _
  %s18 = ssub.s32 1, %s16
  %s19 = scalar_select 0, %s18, %s16
  $region1: #{tpu_custom_call.1} parent=0
    #allocation2 [shape = 'u8[65536]{0}', space=vmem, size = 0x10000, scoped, tag = 'input window, operand 0']
    #allocation3 [shape = 's32[2]{0}', space=sflag, size = 0x8, scoped, tag = 'scoped memory for tpu_custom_call.1']
    #allocation4 [shape = 's32[2]{0}', space=sflag, size = 0x8, scoped, tag = 'scoped memory for tpu_custom_call.1']
    #allocation5 [shape = 'u8[65536]{0}', space=vmem, size = 0x10000, scoped, tag = 'input window, operand 1']
    #allocation6 [shape = 's32[2]{0}', space=sflag, size = 0x8, scoped, tag = 'scoped memory for tpu_custom_call.1']
    #allocation7 [shape = 'u8[8192]{0}', space=vmem, size = 0x2000, scoped, tag = 'input window, operand 2']
    #allocation8 [shape = 'u8[8192]{0}', space=vmem, size = 0x2000, scoped, tag = 'input window, operand 3']
    #allocation9 [shape = 's32[2]{0}', space=sflag, size = 0x8, scoped, tag = 'scoped memory for tpu_custom_call.1']
    #allocation10 [shape = 'u8[16384]{0}', space=vmem, size = 0x4000, scoped, tag = 'input window, operand 5, single buffered']
    #allocation11 [shape = 'u8[512]{0}', space=vmem, size = 0x400, scoped, tag = 'input window, operand 7, single buffered']
    #allocation12 [shape = 's32[1]{0}', space=sflag, size = 0x4, scoped, tag = 'scoped memory for tpu_custom_call.1']
    #allocation13 [shape = 'u8[16384]{0}', space=vmem, size = 0x4000, scoped, tag = 'input window, operand 8, single buffered']
    #allocation14 [shape = 'u8[4096]{0}', space=vmem, size = 0x1000, scoped, tag = 'input window, operand 9, single buffered']
    #allocation15 [shape = 's32[1]{0}', space=sflag, size = 0x4, scoped, tag = 'scoped memory for tpu_custom_call.1']
    #allocation16 [shape = 'u8[8192]{0}', space=vmem, size = 0x2000, scoped, tag = 'output window, operand 0']
    #allocation17 [shape = 'u8[8192]{0}', space=vmem, size = 0x2000, scoped, tag = 'output window, operand 1']
    #allocation18 [shape = 's32[2]{0}', space=sflag, size = 0x8, scoped, tag = 'scoped memory for tpu_custom_call.1']
    %20 = vsyncpa [#allocation3], 0
    %s21 = scalar_lea.sflag [#allocation3], 1
    %22 = vsyncpa %s21, 0
    %23 = vsyncpa [#allocation6], 0
    %s24 = scalar_lea.sflag [#allocation6], 1
    %25 = vsyncpa %s24, 0
    %26 = vsyncpa [#allocation9], 0
    %s27 = scalar_lea.sflag [#allocation9], 1
    %28 = vsyncpa %s27, 0
    %29 = vsyncpa [#allocation12], 0
    %30 = vsyncpa [#allocation15], 0
    %31 = vsyncpa [#allocation4], 0
    %s32 = scalar_lea.sflag [#allocation4], 1
    %33 = vsyncpa %s32, 0
    %34 = vsyncpa [#allocation18], 0
    %s35 = scalar_lea.sflag [#allocation18], 1
    %36 = vsyncpa %s35, 0
    loop: start=0, step=1, limit=4
    $region2: #{tpu_custom_call.1} parent=1 // loop_pre_header
      _
    $region3: #{tpu_custom_call.1} parent=1 // loop_header
      %s38 = sphi 0, %s42
      %p39 = scmp.ge.s32.totalorder %s38, 4
      %s48 = sphi 0, %s50
      %s51 = sphi 0, %s48
      %s52 = sphi 0, %s51
      %s68 = sphi 0, %s52
      %s74 = sphi 0, %s76
      %s77 = sphi 0, %s74
      %s78 = sphi 0, %s77
      %s94 = sphi 0, %s78
      %s100 = sphi 0, %s102
      %s103 = sphi 0, %s100
      %s104 = sphi 0, %s103
      %s120 = sphi 0, %s104
      %s126 = sphi 0, %s128
      %s129 = sphi 0, %s126
      %s130 = sphi 0, %s129
      %s146 = sphi 0, %s130
      %s152 = sphi 0, %s154
      %s155 = sphi 0, %s152
      %s156 = sphi 0, %s155
      %s172 = sphi 0, %s156
      %s176 = sphi 0, %s176
      %s178 = sphi 0, %s176
      %s179 = sphi 0, %s178
      %s193 = sphi 0, %s179
      %s197 = sphi 0, %s197
      %s199 = sphi 0, %s197
      %s200 = sphi 0, %s199
      %s214 = sphi 0, %s200
      %s218 = sphi 0, %s218
      %s220 = sphi 0, %s218
      %s221 = sphi 0, %s220
      %s235 = sphi 0, %s221
      %s239 = sphi 0, %s239
      %s241 = sphi 0, %s239
      %s242 = sphi 0, %s241
      %s256 = sphi 0, %s242
      %s260 = sphi 0, %s260
      %s262 = sphi 0, %s260
      %s263 = sphi 0, %s262
      %s277 = sphi 0, %s263
      %s281 = sphi 0, %s281
      %s283 = sphi 0, %s281
      %s284 = sphi 0, %s283
      %s298 = sphi 0, %s284
      %s302 = sphi 0, %s302
      %s304 = sphi 0, %s302
      %s305 = sphi 0, %s304
      %s319 = sphi 0, %s305
      %s325 = sphi 0, %s327
      %s328 = sphi 0, %s325
      %s329 = sphi 0, %s328
      %s345 = sphi 0, %s329
      %s351 = sphi 0, %s353
      %s354 = sphi 0, %s351
      %s355 = sphi 0, %s354
      %s371 = sphi 0, %s355
      %s377 = sphi 0, %s379
      %s380 = sphi 0, %s377
      %s381 = sphi 0, %s380
      %s397 = sphi 0, %s381
    $region4: #{tpu_custom_call.1} parent=1 // loop_header_branch
      %41 = sbr.rel (%p39) target = $region8
    $region5: #{tpu_custom_call.1} parent=1 // loop_body
      %s43 = ssub.s32 %s38, 1
      %s44 = ssub.s32 %s38, 2
      %s45 = sadd.s32 %s38, 1
      %s46 = ssub.s32 %s38, %s45
      %p47 = scmp.eq.s32.totalorder %s46, 0
      %s49 = sadd.s32 %s48, 1
      %s50 = scalar_select %p47, %s48, %s49
      %p53 = pneg %p47
      %p54 = scmp.eq.s32.totalorder %s38, 1
      %p55 = por %p53, %p54
      %p56 = scmp.ne.s32.totalorder %s48, %s51
      %p57 = scmp.eq.s32.totalorder %s38, 0
      %p58 = por %p56, %p57
      %p59 = scmp.ne.s32.totalorder %s48, %s51
      %p60 = scmp.eq.s32.totalorder %s43, 1
      %p61 = por %p59, %p60
      %p62 = scmp.ne.s32.totalorder %s51, %s52
      %p63 = scmp.eq.s32.totalorder %s43, 0
      %p64 = por %p62, %p63
      %p65 = scmp.ne.s32.totalorder %s51, %s52
      %p66 = scmp.eq.s32.totalorder %s44, 1
      %p67 = por %p65, %p66
      %p69 = scmp.ne.s32.totalorder %s52, %s68
      %p70 = scmp.eq.s32.totalorder %s44, 0
      %p71 = por %p69, %p70
      %s72 = ssub.s32 %s38, %s45
      %p73 = scmp.eq.s32.totalorder %s72, 0
      %s75 = sadd.s32 %s74, 1
      %s76 = scalar_select %p73, %s74, %s75
      %p79 = pneg %p73
      %p80 = scmp.eq.s32.totalorder %s38, 1
      %p81 = por %p79, %p80
      %p82 = scmp.ne.s32.totalorder %s74, %s77
      %p83 = scmp.eq.s32.totalorder %s38, 0
      %p84 = por %p82, %p83
      %p85 = scmp.ne.s32.totalorder %s74, %s77
      %p86 = scmp.eq.s32.totalorder %s43, 1
      %p87 = por %p85, %p86
      %p88 = scmp.ne.s32.totalorder %s77, %s78
      %p89 = scmp.eq.s32.totalorder %s43, 0
      %p90 = por %p88, %p89
      %p91 = scmp.ne.s32.totalorder %s77, %s78
      %p92 = scmp.eq.s32.totalorder %s44, 1
      %p93 = por %p91, %p92
      %p95 = scmp.ne.s32.totalorder %s78, %s94
      %p96 = scmp.eq.s32.totalorder %s44, 0
      %p97 = por %p95, %p96
      %s98 = ssub.s32 %s38, %s45
      %p99 = scmp.eq.s32.totalorder %s98, 0
      %s101 = sadd.s32 %s100, 1
      %s102 = scalar_select %p99, %s100, %s101
      %p105 = pneg %p99
      %p106 = scmp.eq.s32.totalorder %s38, 1
      %p107 = por %p105, %p106
      %p108 = scmp.ne.s32.totalorder %s100, %s103
      %p109 = scmp.eq.s32.totalorder %s38, 0
      %p110 = por %p108, %p109
      %p111 = scmp.ne.s32.totalorder %s100, %s103
      %p112 = scmp.eq.s32.totalorder %s43, 1
      %p113 = por %p111, %p112
      %p114 = scmp.ne.s32.totalorder %s103, %s104
      %p115 = scmp.eq.s32.totalorder %s43, 0
      %p116 = por %p114, %p115
      %p117 = scmp.ne.s32.totalorder %s103, %s104
      %p118 = scmp.eq.s32.totalorder %s44, 1
      %p119 = por %p117, %p118
      %p121 = scmp.ne.s32.totalorder %s104, %s120
      %p122 = scmp.eq.s32.totalorder %s44, 0
      %p123 = por %p121, %p122
      %s124 = ssub.s32 %s38, %s45
      %p125 = scmp.eq.s32.totalorder %s124, 0
      %s127 = sadd.s32 %s126, 1
      %s128 = scalar_select %p125, %s126, %s127
      %p131 = pneg %p125
      %p132 = scmp.eq.s32.totalorder %s38, 1
      %p133 = por %p131, %p132
      %p134 = scmp.ne.s32.totalorder %s126, %s129
      %p135 = scmp.eq.s32.totalorder %s38, 0
      %p136 = por %p134, %p135
      %p137 = scmp.ne.s32.totalorder %s126, %s129
      %p138 = scmp.eq.s32.totalorder %s43, 1
      %p139 = por %p137, %p138
      %p140 = scmp.ne.s32.totalorder %s129, %s130
      %p141 = scmp.eq.s32.totalorder %s43, 0
      %p142 = por %p140, %p141
      %p143 = scmp.ne.s32.totalorder %s129, %s130
      %p144 = scmp.eq.s32.totalorder %s44, 1
      %p145 = por %p143, %p144
      %p147 = scmp.ne.s32.totalorder %s130, %s146
      %p148 = scmp.eq.s32.totalorder %s44, 0
      %p149 = por %p147, %p148
      %s150 = ssub.s32 %s38, %s45
      %p151 = scmp.eq.s32.totalorder %s150, 0
      %s153 = sadd.s32 %s152, 1
      %s154 = scalar_select %p151, %s152, %s153
      %p157 = pneg %p151
      %p158 = scmp.eq.s32.totalorder %s38, 1
      %p159 = por %p157, %p158
      %p160 = scmp.ne.s32.totalorder %s152, %s155
      %p161 = scmp.eq.s32.totalorder %s38, 0
      %p162 = por %p160, %p161
      %p163 = scmp.ne.s32.totalorder %s152, %s155
      %p164 = scmp.eq.s32.totalorder %s43, 1
      %p165 = por %p163, %p164
      %p166 = scmp.ne.s32.totalorder %s155, %s156
      %p167 = scmp.eq.s32.totalorder %s43, 0
      %p168 = por %p166, %p167
      %p169 = scmp.ne.s32.totalorder %s155, %s156
      %p170 = scmp.eq.s32.totalorder %s44, 1
      %p171 = por %p169, %p170
      %p173 = scmp.ne.s32.totalorder %s156, %s172
      %p174 = scmp.eq.s32.totalorder %s44, 0
      %p175 = por %p173, %p174
      %s177 = sadd.s32 %s176, 1
      %p180 = scmp.eq.s32.totalorder %s38, 1
      %p181 = scmp.ne.s32.totalorder %s176, %s178
      %p182 = scmp.eq.s32.totalorder %s38, 0
      %p183 = por %p181, %p182
      %p184 = scmp.ne.s32.totalorder %s176, %s178
      %p185 = scmp.eq.s32.totalorder %s43, 1
      %p186 = por %p184, %p185
      %p187 = scmp.ne.s32.totalorder %s178, %s179
      %p188 = scmp.eq.s32.totalorder %s43, 0
      %p189 = por %p187, %p188
      %p190 = scmp.ne.s32.totalorder %s178, %s179
      %p191 = scmp.eq.s32.totalorder %s44, 1
      %p192 = por %p190, %p191
      %p194 = scmp.ne.s32.totalorder %s179, %s193
      %p195 = scmp.eq.s32.totalorder %s44, 0
      %p196 = por %p194, %p195
      %s198 = sadd.s32 %s197, 1
      %p201 = scmp.eq.s32.totalorder %s38, 1
      %p202 = scmp.ne.s32.totalorder %s197, %s199
      %p203 = scmp.eq.s32.totalorder %s38, 0
      %p204 = por %p202, %p203
      %p205 = scmp.ne.s32.totalorder %s197, %s199
      %p206 = scmp.eq.s32.totalorder %s43, 1
      %p207 = por %p205, %p206
      %p208 = scmp.ne.s32.totalorder %s199, %s200
      %p209 = scmp.eq.s32.totalorder %s43, 0
      %p210 = por %p208, %p209
      %p211 = scmp.ne.s32.totalorder %s199, %s200
      %p212 = scmp.eq.s32.totalorder %s44, 1
      %p213 = por %p211, %p212
      %p215 = scmp.ne.s32.totalorder %s200, %s214
      %p216 = scmp.eq.s32.totalorder %s44, 0
      %p217 = por %p215, %p216
      %s219 = sadd.s32 %s218, 1
      %p222 = scmp.eq.s32.totalorder %s38, 1
      %p223 = scmp.ne.s32.totalorder %s218, %s220
      %p224 = scmp.eq.s32.totalorder %s38, 0
      %p225 = por %p223, %p224
      %p226 = scmp.ne.s32.totalorder %s218, %s220
      %p227 = scmp.eq.s32.totalorder %s43, 1
      %p228 = por %p226, %p227
      %p229 = scmp.ne.s32.totalorder %s220, %s221
      %p230 = scmp.eq.s32.totalorder %s43, 0
      %p231 = por %p229, %p230
      %p232 = scmp.ne.s32.totalorder %s220, %s221
      %p233 = scmp.eq.s32.totalorder %s44, 1
      %p234 = por %p232, %p233
      %p236 = scmp.ne.s32.totalorder %s221, %s235
      %p237 = scmp.eq.s32.totalorder %s44, 0
      %p238 = por %p236, %p237
      %s240 = sadd.s32 %s239, 1
      %p243 = scmp.eq.s32.totalorder %s38, 1
      %p244 = scmp.ne.s32.totalorder %s239, %s241
      %p245 = scmp.eq.s32.totalorder %s38, 0
      %p246 = por %p244, %p245
      %p247 = scmp.ne.s32.totalorder %s239, %s241
      %p248 = scmp.eq.s32.totalorder %s43, 1
      %p249 = por %p247, %p248
      %p250 = scmp.ne.s32.totalorder %s241, %s242
      %p251 = scmp.eq.s32.totalorder %s43, 0
      %p252 = por %p250, %p251
      %p253 = scmp.ne.s32.totalorder %s241, %s242
      %p254 = scmp.eq.s32.totalorder %s44, 1
      %p255 = por %p253, %p254
      %p257 = scmp.ne.s32.totalorder %s242, %s256
      %p258 = scmp.eq.s32.totalorder %s44, 0
      %p259 = por %p257, %p258
      %s261 = sadd.s32 %s260, 1
      %p264 = scmp.eq.s32.totalorder %s38, 1
      %p265 = scmp.ne.s32.totalorder %s260, %s262
      %p266 = scmp.eq.s32.totalorder %s38, 0
      %p267 = por %p265, %p266
      %p268 = scmp.ne.s32.totalorder %s260, %s262
      %p269 = scmp.eq.s32.totalorder %s43, 1
      %p270 = por %p268, %p269
      %p271 = scmp.ne.s32.totalorder %s262, %s263
      %p272 = scmp.eq.s32.totalorder %s43, 0
      %p273 = por %p271, %p272
      %p274 = scmp.ne.s32.totalorder %s262, %s263
      %p275 = scmp.eq.s32.totalorder %s44, 1
      %p276 = por %p274, %p275
      %p278 = scmp.ne.s32.totalorder %s263, %s277
      %p279 = scmp.eq.s32.totalorder %s44, 0
      %p280 = por %p278, %p279
      %s282 = sadd.s32 %s281, 1
      %p285 = scmp.eq.s32.totalorder %s38, 1
      %p286 = scmp.ne.s32.totalorder %s281, %s283
      %p287 = scmp.eq.s32.totalorder %s38, 0
      %p288 = por %p286, %p287
      %p289 = scmp.ne.s32.totalorder %s281, %s283
      %p290 = scmp.eq.s32.totalorder %s43, 1
      %p291 = por %p289, %p290
      %p292 = scmp.ne.s32.totalorder %s283, %s284
      %p293 = scmp.eq.s32.totalorder %s43, 0
      %p294 = por %p292, %p293
      %p295 = scmp.ne.s32.totalorder %s283, %s284
      %p296 = scmp.eq.s32.totalorder %s44, 1
      %p297 = por %p295, %p296
      %p299 = scmp.ne.s32.totalorder %s284, %s298
      %p300 = scmp.eq.s32.totalorder %s44, 0
      %p301 = por %p299, %p300
      %s303 = sadd.s32 %s302, 1
      %p306 = scmp.eq.s32.totalorder %s38, 1
      %p307 = scmp.ne.s32.totalorder %s302, %s304
      %p308 = scmp.eq.s32.totalorder %s38, 0
      %p309 = por %p307, %p308
      %p310 = scmp.ne.s32.totalorder %s302, %s304
      %p311 = scmp.eq.s32.totalorder %s43, 1
      %p312 = por %p310, %p311
      %p313 = scmp.ne.s32.totalorder %s304, %s305
      %p314 = scmp.eq.s32.totalorder %s43, 0
      %p315 = por %p313, %p314
      %p316 = scmp.ne.s32.totalorder %s304, %s305
      %p317 = scmp.eq.s32.totalorder %s44, 1
      %p318 = por %p316, %p317
      %p320 = scmp.ne.s32.totalorder %s305, %s319
      %p321 = scmp.eq.s32.totalorder %s44, 0
      %p322 = por %p320, %p321
      %s323 = ssub.s32 %s38, %s45
      %p324 = scmp.eq.s32.totalorder %s323, 0
      %s326 = sadd.s32 %s325, 1
      %s327 = scalar_select %p324, %s325, %s326
      %p330 = pneg %p324
      %p331 = scmp.eq.s32.totalorder %s38, 1
      %p332 = por %p330, %p331
      %p333 = scmp.ne.s32.totalorder %s325, %s328
      %p334 = scmp.eq.s32.totalorder %s38, 0
      %p335 = por %p333, %p334
      %p336 = scmp.ne.s32.totalorder %s325, %s328
      %p337 = scmp.eq.s32.totalorder %s43, 1
      %p338 = por %p336, %p337
      %p339 = scmp.ne.s32.totalorder %s328, %s329
      %p340 = scmp.eq.s32.totalorder %s43, 0
      %p341 = por %p339, %p340
      %p342 = scmp.ne.s32.totalorder %s328, %s329
      %p343 = scmp.eq.s32.totalorder %s44, 1
      %p344 = por %p342, %p343
      %p346 = scmp.ne.s32.totalorder %s329, %s345
      %p347 = scmp.eq.s32.totalorder %s44, 0
      %p348 = por %p346, %p347
      %s349 = ssub.s32 %s38, %s45
      %p350 = scmp.eq.s32.totalorder %s349, 0
      %s352 = sadd.s32 %s351, 1
      %s353 = scalar_select %p350, %s351, %s352
      %p356 = pneg %p350
      %p357 = scmp.eq.s32.totalorder %s38, 1
      %p358 = por %p356, %p357
      %p359 = scmp.ne.s32.totalorder %s351, %s354
      %p360 = scmp.eq.s32.totalorder %s38, 0
      %p361 = por %p359, %p360
      %p362 = scmp.ne.s32.totalorder %s351, %s354
      %p363 = scmp.eq.s32.totalorder %s43, 1
      %p364 = por %p362, %p363
      %p365 = scmp.ne.s32.totalorder %s354, %s355
      %p366 = scmp.eq.s32.totalorder %s43, 0
      %p367 = por %p365, %p366
      %p368 = scmp.ne.s32.totalorder %s354, %s355
      %p369 = scmp.eq.s32.totalorder %s44, 1
      %p370 = por %p368, %p369
      %p372 = scmp.ne.s32.totalorder %s355, %s371
      %p373 = scmp.eq.s32.totalorder %s44, 0
      %p374 = por %p372, %p373
      %s375 = ssub.s32 %s38, %s45
      %p376 = scmp.eq.s32.totalorder %s375, 0
      %s378 = sadd.s32 %s377, 1
      %s379 = scalar_select %p376, %s377, %s378
      %p382 = pneg %p376
      %p383 = scmp.eq.s32.totalorder %s38, 1
      %p384 = por %p382, %p383
      %p385 = scmp.ne.s32.totalorder %s377, %s380
      %p386 = scmp.eq.s32.totalorder %s38, 0
      %p387 = por %p385, %p386
      %p388 = scmp.ne.s32.totalorder %s377, %s380
      %p389 = scmp.eq.s32.totalorder %s43, 1
      %p390 = por %p388, %p389
      %p391 = scmp.ne.s32.totalorder %s380, %s381
      %p392 = scmp.eq.s32.totalorder %s43, 0
      %p393 = por %p391, %p392
      %p394 = scmp.ne.s32.totalorder %s380, %s381
      %p395 = scmp.eq.s32.totalorder %s44, 1
      %p396 = por %p394, %p395
      %p398 = scmp.ne.s32.totalorder %s381, %s397
      %p399 = scmp.eq.s32.totalorder %s44, 0
      %p400 = por %p398, %p399
      %p401 = scmp.le.s32.totalorder 1, %s38
      %p402 = scmp.lt.s32.totalorder %s38, 3
      %p403 = pnand %p401, %p402
      %p404 = pneg %p403
      // Predicated region
      $region9: #{tpu_custom_call.1} parent=5 // pred_check
        _
      $region10: #{tpu_custom_call.1} parent=5 // pred_check_branch
        %406 = sbr.rel (%p403) target = $region12
      $region11: #{tpu_custom_call.1} parent=5 // pred_region
        %s407 = ssub.s32 %s38, 1
        // Predicated region
        $region13: #{tpu_custom_call.1} parent=11 // pred_check
          %p408 = pneg %p189
        $region14: #{tpu_custom_call.1} parent=11 // pred_check_branch
          %410 = sbr.rel (%p408) target = $region16
        $region15: #{tpu_custom_call.1} parent=11 // pred_region
          %412 = vsyncadd [#allocation9], 0
          %s413 = sshll.u32 %s5, 4
          %s414 = int_to_ptr.hbm [resolvable:$true] %s413
          %s415 = sshll.u32 [#allocation10], 4
          %s416 = int_to_ptr.vmem [resolvable:$true] %s415
          %421 = dma.hbm_to_vmem [thread:$0]  %s414, 512, %s416, [#allocation9], 128, 128, 8
        $region16: #{tpu_custom_call.1} parent=11 // pred_fallthru
          _
        // Predicated region
        $region17: #{tpu_custom_call.1} parent=11 // pred_check
          %p422 = pneg %p210
        $region18: #{tpu_custom_call.1} parent=11 // pred_check_branch
          %424 = sbr.rel (%p422) target = $region20
        $region19: #{tpu_custom_call.1} parent=11 // pred_region
          _
        $region20: #{tpu_custom_call.1} parent=11 // pred_fallthru
          _
        // Predicated region
        $region21: #{tpu_custom_call.1} parent=11 // pred_check
          %p425 = pneg %p231
        $region22: #{tpu_custom_call.1} parent=11 // pred_check_branch
          %427 = sbr.rel (%p425) target = $region24
        $region23: #{tpu_custom_call.1} parent=11 // pred_region
          %429 = vsyncadd [#allocation12], 0
          %s431 = sshll.u32 %s7, 4
          %s432 = int_to_ptr.hbm [resolvable:$true] %s431
          %s433 = sshll.u32 [#allocation11], 4
          %s434 = int_to_ptr.vmem [resolvable:$true] %s433
          %436 = dma.hbm_to_vmem [thread:$0]  %s432, 16, %s434, [#allocation12]
        $region24: #{tpu_custom_call.1} parent=11 // pred_fallthru
          _
        // Predicated region
        $region25: #{tpu_custom_call.1} parent=11 // pred_check
          %p437 = pneg %p252
        $region26: #{tpu_custom_call.1} parent=11 // pred_check_branch
          %439 = sbr.rel (%p437) target = $region28
        $region27: #{tpu_custom_call.1} parent=11 // pred_region
          %441 = vsyncadd [#allocation12], 0
          %s442 = sshll.u32 %s8, 4
          %s443 = int_to_ptr.hbm [resolvable:$true] %s442
          %s444 = sshll.u32 [#allocation13], 4
          %s445 = int_to_ptr.vmem [resolvable:$true] %s444
          %450 = dma.hbm_to_vmem [thread:$0]  %s443, 512, %s445, [#allocation12], 128, 128, 8
        $region28: #{tpu_custom_call.1} parent=11 // pred_fallthru
          _
        // Predicated region
        $region29: #{tpu_custom_call.1} parent=11 // pred_check
          %p451 = pneg %p273
        $region30: #{tpu_custom_call.1} parent=11 // pred_check_branch
          %453 = sbr.rel (%p451) target = $region32
        $region31: #{tpu_custom_call.1} parent=11 // pred_region
          %455 = vsyncadd [#allocation15], 0
          %s457 = sshll.u32 %s9, 4
          %s458 = int_to_ptr.hbm [resolvable:$true] %s457
          %s459 = sshll.u32 [#allocation14], 4
          %s460 = int_to_ptr.vmem [resolvable:$true] %s459
          %462 = dma.hbm_to_vmem [thread:$0]  %s458, 128, %s460, [#allocation15]
        $region32: #{tpu_custom_call.1} parent=11 // pred_fallthru
          _
        // Predicated region
        $region33: #{tpu_custom_call.1} parent=11 // pred_check
          %p463 = pneg %p294
        $region34: #{tpu_custom_call.1} parent=11 // pred_check_branch
          %465 = sbr.rel (%p463) target = $region36
        $region35: #{tpu_custom_call.1} parent=11 // pred_region
          _
        $region36: #{tpu_custom_call.1} parent=11 // pred_fallthru
          _
        // Predicated region
        $region37: #{tpu_custom_call.1} parent=11 // pred_check
          %p466 = pneg %p315
        $region38: #{tpu_custom_call.1} parent=11 // pred_check_branch
          %468 = sbr.rel (%p466) target = $region40
        $region39: #{tpu_custom_call.1} parent=11 // pred_region
          _
        $region40: #{tpu_custom_call.1} parent=11 // pred_fallthru
          _
      $region12: #{tpu_custom_call.1} parent=5 // pred_fallthru
        _
      %p469 = scmp.lt.s32.totalorder %s38, 2
      // Predicated region
      $region41: #{tpu_custom_call.1} parent=5 // pred_check
        %p470 = pneg %p469
      $region42: #{tpu_custom_call.1} parent=5 // pred_check_branch
        %472 = sbr.rel (%p470) target = $region44
      $region43: #{tpu_custom_call.1} parent=5 // pred_region
        // Predicated region
        $region45: #{tpu_custom_call.1} parent=43 // pred_check
          %p473 = pneg %p58
        $region46: #{tpu_custom_call.1} parent=43 // pred_check_branch
          %475 = sbr.rel (%p473) target = $region48
        $region47: #{tpu_custom_call.1} parent=43 // pred_region
          %s476 = sand.u32 %s48, 1
          %s477 = scalar_lea.sflag [#allocation3], %s476
          %s478 = sand.u32 %s48, 1
          %s479 = smul.addr %s478, 64
          %s480 = scalar_lea.vmem [#allocation2], %s479
          %s481 = smul.u32 8, %s38
          %483 = vsyncadd %s477, 0
          %s484 = smul.addr %s481, 8
          %s485 = scalar_lea.hbm %s0, %s484
          %s486 = sshll.u32 %s485, 4
          %s487 = int_to_ptr.hbm [resolvable:$true] %s486
          %s488 = sshll.u32 %s480, 4
          %s489 = int_to_ptr.vmem [resolvable:$true] %s488
          %494 = dma.hbm_to_vmem [thread:$0]  %s487, 1024, %s489, %s477, 128, 128, 8
        $region48: #{tpu_custom_call.1} parent=43 // pred_fallthru
          _
        // Predicated region
        $region49: #{tpu_custom_call.1} parent=43 // pred_check
          %p495 = pneg %p84
        $region50: #{tpu_custom_call.1} parent=43 // pred_check_branch
          %497 = sbr.rel (%p495) target = $region52
        $region51: #{tpu_custom_call.1} parent=43 // pred_region
          %s498 = sand.u32 %s38, 1
          %s499 = scalar_lea.sflag [#allocation6], %s498
          %s500 = sand.u32 %s74, 1
          %s501 = smul.addr %s500, 64
          %s502 = scalar_lea.vmem [#allocation5], %s501
          %s503 = smul.u32 8, %s38
          %505 = vsyncadd %s499, 0
          %s506 = smul.addr %s503, 8
          %s507 = scalar_lea.hbm %s1, %s506
          %s508 = sshll.u32 %s507, 4
          %s509 = int_to_ptr.hbm [resolvable:$true] %s508
          %s510 = sshll.u32 %s502, 4
          %s511 = int_to_ptr.vmem [resolvable:$true] %s510
          %516 = dma.hbm_to_vmem [thread:$0]  %s509, 1024, %s511, %s499, 128, 128, 8
        $region52: #{tpu_custom_call.1} parent=43 // pred_fallthru
          _
        // Predicated region
        $region53: #{tpu_custom_call.1} parent=43 // pred_check
          %p517 = pneg %p110
        $region54: #{tpu_custom_call.1} parent=43 // pred_check_branch
          %519 = sbr.rel (%p517) target = $region56
        $region55: #{tpu_custom_call.1} parent=43 // pred_region
          %s520 = sand.u32 %s38, 1
          %s521 = scalar_lea.sflag [#allocation6], %s520
          %s522 = sand.u32 %s100, 1
          %s523 = smul.addr %s522, 8
          %s524 = scalar_lea.vmem [#allocation7], %s523
          %526 = vsyncadd %s521, 0
          %s527 = smul.addr %s38, 8
          %s528 = scalar_lea.hbm %s2, %s527
          %s530 = sshll.u32 %s528, 4
          %s531 = int_to_ptr.hbm [resolvable:$true] %s530
          %s532 = sshll.u32 %s524, 4
          %s533 = int_to_ptr.vmem [resolvable:$true] %s532
          %535 = dma.hbm_to_vmem [thread:$0]  %s531, 128, %s533, %s521
        $region56: #{tpu_custom_call.1} parent=43 // pred_fallthru
          _
        // Predicated region
        $region57: #{tpu_custom_call.1} parent=43 // pred_check
          %p536 = pneg %p136
        $region58: #{tpu_custom_call.1} parent=43 // pred_check_branch
          %538 = sbr.rel (%p536) target = $region60
        $region59: #{tpu_custom_call.1} parent=43 // pred_region
          %s539 = sand.u32 %s38, 1
          %s540 = scalar_lea.sflag [#allocation9], %s539
          %s541 = sand.u32 %s126, 1
          %s542 = smul.addr %s541, 8
          %s543 = scalar_lea.vmem [#allocation8], %s542
          %545 = vsyncadd %s540, 0
          %s546 = smul.addr %s38, 8
          %s547 = scalar_lea.hbm %s3, %s546
          %s549 = sshll.u32 %s547, 4
          %s550 = int_to_ptr.hbm [resolvable:$true] %s549
          %s551 = sshll.u32 %s543, 4
          %s552 = int_to_ptr.vmem [resolvable:$true] %s551
          %554 = dma.hbm_to_vmem [thread:$0]  %s550, 128, %s552, %s540
        $region60: #{tpu_custom_call.1} parent=43 // pred_fallthru
          _
        // Predicated region
        $region61: #{tpu_custom_call.1} parent=43 // pred_check
          %p555 = pneg %p162
        $region62: #{tpu_custom_call.1} parent=43 // pred_check_branch
          %557 = sbr.rel (%p555) target = $region64
        $region63: #{tpu_custom_call.1} parent=43 // pred_region
          %p558 = scmp.lt.s32.totalorder %s38, 1
          %s559 = scalar_select %p558, %s38, 1
          %s560 = smul.addr %s559, 8
          %s561 = scalar_lea.vmem %s4, %s560
        $region64: #{tpu_custom_call.1} parent=43 // pred_fallthru
          _
      $region44: #{tpu_custom_call.1} parent=5 // pred_fallthru
        _
      %p562 = scmp.le.s32.totalorder 1, %s38
      %p563 = scmp.lt.s32.totalorder %s38, 3
      %p564 = pnand %p562, %p563
      %p565 = pneg %p564
      // Predicated region
      $region65: #{tpu_custom_call.1} parent=5 // pred_check
        _
      $region66: #{tpu_custom_call.1} parent=5 // pred_check_branch
        %567 = sbr.rel (%p564) target = $region68
      $region67: #{tpu_custom_call.1} parent=5 // pred_region
        %s568 = ssub.s32 %s38, 1
        %s569 = sand.u32 %s51, 1
        %s570 = scalar_lea.sflag [#allocation3], %s569
        %s571 = sand.u32 %s51, 1
        %s572 = smul.addr %s571, 64
        %s573 = scalar_lea.vmem [#allocation2], %s572
        // Predicated region
        $region69: #{tpu_custom_call.1} parent=67 // pred_check
          %p574 = pneg %p64
        $region70: #{tpu_custom_call.1} parent=67 // pred_check_branch
          %576 = sbr.rel (%p574) target = $region72
        $region71: #{tpu_custom_call.1} parent=67 // pred_region
          %578 = dma.done %s570, 1024
        $region72: #{tpu_custom_call.1} parent=67 // pred_fallthru
          _
        %s579 = sand.u32 %s43, 1
        %s580 = scalar_lea.sflag [#allocation6], %s579
        %s581 = sand.u32 %s77, 1
        %s582 = smul.addr %s581, 64
        %s583 = scalar_lea.vmem [#allocation5], %s582
        // Predicated region
        $region73: #{tpu_custom_call.1} parent=67 // pred_check
          %p584 = pneg %p90
        $region74: #{tpu_custom_call.1} parent=67 // pred_check_branch
          %586 = sbr.rel (%p584) target = $region76
        $region75: #{tpu_custom_call.1} parent=67 // pred_region
          %588 = dma.done %s580, 1024
        $region76: #{tpu_custom_call.1} parent=67 // pred_fallthru
          _
        %s589 = sand.u32 %s43, 1
        %s590 = scalar_lea.sflag [#allocation6], %s589
        %s591 = sand.u32 %s103, 1
        %s592 = smul.addr %s591, 8
        %s593 = scalar_lea.vmem [#allocation7], %s592
        // Predicated region
        $region77: #{tpu_custom_call.1} parent=67 // pred_check
          %p594 = pneg %p116
        $region78: #{tpu_custom_call.1} parent=67 // pred_check_branch
          %596 = sbr.rel (%p594) target = $region80
        $region79: #{tpu_custom_call.1} parent=67 // pred_region
          %598 = dma.done %s590, 128
        $region80: #{tpu_custom_call.1} parent=67 // pred_fallthru
          _
        %s599 = sand.u32 %s43, 1
        %s600 = scalar_lea.sflag [#allocation9], %s599
        %s601 = sand.u32 %s129, 1
        %s602 = smul.addr %s601, 8
        %s603 = scalar_lea.vmem [#allocation8], %s602
        // Predicated region
        $region81: #{tpu_custom_call.1} parent=67 // pred_check
          %p604 = pneg %p142
        $region82: #{tpu_custom_call.1} parent=67 // pred_check_branch
          %606 = sbr.rel (%p604) target = $region84
        $region83: #{tpu_custom_call.1} parent=67 // pred_region
          %608 = dma.done %s600, 128
        $region84: #{tpu_custom_call.1} parent=67 // pred_fallthru
          _
        // Predicated region
        $region85: #{tpu_custom_call.1} parent=67 // pred_check
          %p609 = pneg %p189
        $region86: #{tpu_custom_call.1} parent=67 // pred_check_branch
          %611 = sbr.rel (%p609) target = $region88
        $region87: #{tpu_custom_call.1} parent=67 // pred_region
          %613 = dma.done [#allocation9], 512
        $region88: #{tpu_custom_call.1} parent=67 // pred_fallthru
          _
        // Predicated region
        $region89: #{tpu_custom_call.1} parent=67 // pred_check
          %p614 = pneg %p231
        $region90: #{tpu_custom_call.1} parent=67 // pred_check_branch
          %616 = sbr.rel (%p614) target = $region92
        $region91: #{tpu_custom_call.1} parent=67 // pred_region
          %618 = dma.done [#allocation12], 16
        $region92: #{tpu_custom_call.1} parent=67 // pred_fallthru
          _
        // Predicated region
        $region93: #{tpu_custom_call.1} parent=67 // pred_check
          %p619 = pneg %p252
        $region94: #{tpu_custom_call.1} parent=67 // pred_check_branch
          %621 = sbr.rel (%p619) target = $region96
        $region95: #{tpu_custom_call.1} parent=67 // pred_region
          %623 = dma.done [#allocation12], 512
        $region96: #{tpu_custom_call.1} parent=67 // pred_fallthru
          _
        // Predicated region
        $region97: #{tpu_custom_call.1} parent=67 // pred_check
          %p624 = pneg %p273
        $region98: #{tpu_custom_call.1} parent=67 // pred_check_branch
          %626 = sbr.rel (%p624) target = $region100
        $region99: #{tpu_custom_call.1} parent=67 // pred_region
          %628 = dma.done [#allocation15], 128
        $region100: #{tpu_custom_call.1} parent=67 // pred_fallthru
          _
        %s629 = sand.u32 %s51, 1
        %s630 = scalar_lea.sflag [#allocation3], %s629
        %s631 = sand.u32 %s51, 1
        %s632 = smul.addr %s631, 64
        %s633 = scalar_lea.vmem [#allocation2], %s632
        %p634 = pneg %p64
        %p635 = pneg %p61
        %s636 = sand.u32 %s43, 1
        %s637 = scalar_lea.sflag [#allocation6], %s636
        %s638 = sand.u32 %s77, 1
        %s639 = smul.addr %s638, 64
        %s640 = scalar_lea.vmem [#allocation5], %s639
        %p641 = pneg %p90
        %p642 = pneg %p87
        %s643 = sand.u32 %s43, 1
        %s644 = scalar_lea.sflag [#allocation6], %s643
        %s645 = sand.u32 %s103, 1
        %s646 = smul.addr %s645, 8
        %s647 = scalar_lea.vmem [#allocation7], %s646
        %p648 = pneg %p116
        %p649 = pneg %p113
        %s650 = sand.u32 %s43, 1
        %s651 = scalar_lea.sflag [#allocation9], %s650
        %s652 = sand.u32 %s129, 1
        %s653 = smul.addr %s652, 8
        %s654 = scalar_lea.vmem [#allocation8], %s653
        %p655 = pneg %p142
        %p656 = pneg %p139
        %p657 = scmp.lt.s32.totalorder %s43, 1
        %s658 = scalar_select %p657, %s43, 1
        %s659 = smul.addr %s658, 8
        %s660 = scalar_lea.vmem %s4, %s659
        %p661 = pneg %p168
        %p662 = pneg %p165
        %p663 = pneg %p189
        %p664 = pneg %p186
        %p665 = pneg %p210
        %p666 = pneg %p207
        %p667 = pneg %p231
        %p668 = pneg %p228
        %p669 = pneg %p252
        %p670 = pneg %p249
        %p671 = pneg %p273
        %p672 = pneg %p270
        %p673 = pneg %p294
        %p674 = pneg %p291
        %p675 = pneg %p315
        %p676 = pneg %p312
        %p677 = pneg %p341
        %p678 = pneg %p338
        %s679 = sand.u32 %s328, 1
        %s680 = scalar_lea.sflag [#allocation4], %s679
        %s681 = sand.u32 %s328, 1
        %s682 = smul.addr %s681, 8
        %s683 = scalar_lea.vmem [#allocation16], %s682
        %p684 = pneg %p367
        %p685 = pneg %p364
        %s686 = sand.u32 %s354, 1
        %s687 = scalar_lea.sflag [#allocation18], %s686
        %s688 = sand.u32 %s354, 1
        %s689 = smul.addr %s688, 8
        %s690 = scalar_lea.vmem [#allocation17], %s689
        %p691 = pneg %p393
        %p692 = pneg %p390
        %p693 = scmp.lt.s32.totalorder %s43, 1
        %s694 = scalar_select %p693, %s43, 1
        %s695 = smul.addr %s694, 8
        %s696 = scalar_lea.vmem %s14, %s695
        %s697 = smul.u32 8, %s43
        %s698 = smul.u32 8, %s43
        %p699 = scmp.lt.s32.totalorder %s43, 1
        %s700 = scalar_select %p699, %s43, 1
        %s701 = smul.addr %s700, 8
        %s702 = scalar_lea.vmem %s4, %s701
        %p703 = scmp.lt.s32.totalorder %s43, 1
        %s704 = scalar_select %p703, %s43, 1
        %s705 = smul.addr %s704, 8
        %s706 = scalar_lea.vmem %s14, %s705
        %v707 = vld [vmem:[%s593] sm:$0xff]
        %v708 = vld [vmem:[%s603] sm:$0xff]
        %v709 = vld [vmem:[#allocation10] sm:$0xff]
        %v710 = vld [vmem:[#allocation10 + $0x8] sm:$0xff]
        %v711 = vld [vmem:[#allocation10 + $0x10] sm:$0xff]
        %v712 = vld [vmem:[#allocation10 + $0x18] sm:$0xff]
        %v713 = vld [vmem:[%s6] sm:$0x1]
        %v715 = vperm.slane %v713, 0
        %vm717 = vcmask 261120
        %v719 = vsel %vm717, %v707, 0
        %721 = vmatpush.msra.mxu0 0.0
        %722 = vmatpush.msra.mxu0 0.0
        %723 = vmatpush.msra.mxu0 0.0
        %724 = vmatpush.msra.mxu0 0.0
        %725 = vmatpush.msra.mxu0 0.0
        %726 = vmatpush.msra.mxu0 0.0
        %727 = vmatpush.msra.mxu0 0.0
        %728 = vmatpush.msra.mxu0 0.0
        %729 = vmatpush.msra.mxu0 0.0
        %730 = vmatpush.msra.mxu0 0.0
        %731 = vmatpush.msra.mxu0 0.0
        %732 = vmatpush.msra.mxu0 0.0
        %733 = vmatpush.msra.mxu0 %v712
        %734 = vmatpush.msra.mxu0 %v711
        %735 = vmatpush.msra.mxu0 %v710
        %736 = vmatpush.msra.mxu0 %v709
        %737 = vmatmul.f32.gmra.mxu0 %v719
        %v738 = vpop.f32.mrf.mxu0
        %v739 = vadd.f32 %v715, %v738
        %740 = vdwg.mxu0
        %v741 = vld [vmem:[%s573] sm:$0xff]
        %v742 = vld [vmem:[%s573 + $0x8] sm:$0xff]
        %v743 = vld [vmem:[%s573 + $0x10] sm:$0xff]
        %v744 = vld [vmem:[%s573 + $0x18] sm:$0xff]
        %v745 = vld [vmem:[%s573 + $0x20] sm:$0xff]
        %v746 = vld [vmem:[%s573 + $0x28] sm:$0xff]
        %v747 = vld [vmem:[%s573 + $0x30] sm:$0xff]
        %v748 = vld [vmem:[%s573 + $0x38] sm:$0xff]
        %v750 = vrot.slane %v739, 1
        %v751 = vrot.slane %v739, 2
        %v752 = vrot.slane %v739, 3
        %v753 = vrot.slane %v739, 4
        %v754 = vrot.slane %v739, 5
        %v755 = vrot.slane %v739, 6
        %v756 = vrot.slane %v739, 7
        %v757 = vperm.slane %v739, 0
        %v758 = vperm.slane %v750, 0
        %v759 = vperm.slane %v751, 0
        %v760 = vperm.slane %v752, 0
        %v761 = vperm.slane %v753, 0
        %v762 = vperm.slane %v754, 0
        %v763 = vperm.slane %v755, 0
        %v764 = vperm.slane %v756, 0
        %v773 = vadd.f32 %v741, %v757
        %v774 = vadd.f32 %v742, %v758
        %v775 = vadd.f32 %v743, %v759
        %v776 = vadd.f32 %v744, %v760
        %v777 = vadd.f32 %v745, %v761
        %v778 = vadd.f32 %v746, %v762
        %v779 = vadd.f32 %v747, %v763
        %v780 = vadd.f32 %v748, %v764
        %v781 = vtanh.pop %v773
        %v782 = vtanh.pop %v774
        %v783 = vtanh.pop %v775
        %v784 = vtanh.pop %v776
        %v785 = vtanh.pop %v777
        %v786 = vtanh.pop %v778
        %v787 = vtanh.pop %v779
        %v788 = vtanh.pop %v780
        %v789 = vld [vmem:[#allocation11] sm:$0x1]
        %v791 = vperm.slane %v789, 0
        %v793 = vmul.f32 %v781, %v791
        %v794 = vmul.f32 %v782, %v791
        %v795 = vmul.f32 %v783, %v791
        %v796 = vmul.f32 %v784, %v791
        %v797 = vmul.f32 %v785, %v791
        %v798 = vmul.f32 %v786, %v791
        %v799 = vmul.f32 %v787, %v791
        %v800 = vmul.f32 %v788, %v791
        %v801 = vsel %vm717, %v793, 0.0
        %802 = vadd.xlane.f32.xlu0 %v801
        %v803 = vpop.xlane.xlu0 %802
        %v804 = vsel %vm717, %v794, 0.0
        %805 = vadd.xlane.f32.xlu0 %v804
        %v806 = vpop.xlane.xlu0 %805
        %v807 = vsel %vm717, %v795, 0.0
        %808 = vadd.xlane.f32.xlu0 %v807
        %v809 = vpop.xlane.xlu0 %808
        %v810 = vsel %vm717, %v796, 0.0
        %811 = vadd.xlane.f32.xlu0 %v810
        %v812 = vpop.xlane.xlu0 %811
        %v813 = vsel %vm717, %v797, 0.0
        %814 = vadd.xlane.f32.xlu0 %v813
        %v815 = vpop.xlane.xlu0 %814
        %v816 = vsel %vm717, %v798, 0.0
        %817 = vadd.xlane.f32.xlu0 %v816
        %v818 = vpop.xlane.xlu0 %817
        %v819 = vsel %vm717, %v799, 0.0
        %820 = vadd.xlane.f32.xlu0 %v819
        %v821 = vpop.xlane.xlu0 %820
        %v822 = vsel %vm717, %v800, 0.0
        %823 = vadd.xlane.f32.xlu0 %v822
        %v824 = vpop.xlane.xlu0 %823
        %v833 = vlaneseq
        %v834 = vand.u32 %v833, 127
        %v835 = vperm.slane %v803, %v834
        %v836 = vperm.slane %v806, %v834
        %v837 = vperm.slane %v809, %v834
        %v838 = vperm.slane %v812, %v834
        %v839 = vperm.slane %v815, %v834
        %v840 = vperm.slane %v818, %v834
        %v841 = vperm.slane %v821, %v834
        %v842 = vperm.slane %v824, %v834
        %vm843 = vcmask 1041409
        %v844 = vsel %vm843, %v836, %v835
        %vm845 = vcmask 1042434
        %v846 = vsel %vm845, %v837, %v844
        %vm847 = vcmask 1043459
        %v848 = vsel %vm847, %v838, %v846
        %vm849 = vcmask 1044484
        %v850 = vsel %vm849, %v839, %v848
        %vm851 = vcmask 1045509
        %v852 = vsel %vm851, %v840, %v850
        %vm853 = vcmask 1046534
        %v854 = vsel %vm853, %v841, %v852
        %vm855 = vcmask 1047559
        %v856 = vsel %vm855, %v842, %v854
        %vm858 = vcmask 64512
        %v859 = vsel %vm858, %v856, -inf
        %860 = vmax.xlane.f32.xlu0 %v859
        %v861 = vpop.xlane.xlu0 %860
        %v863 = vperm.slane %v861, 0
        %v864 = vperm.slane %v861, 1
        %v865 = vperm.slane %v861, 2
        %v866 = vperm.slane %v861, 3
        %v867 = vperm.slane %v861, 4
        %v868 = vperm.slane %v861, 5
        %v869 = vperm.slane %v861, 6
        %v870 = vperm.slane %v861, 7
        %v879 = vsub.f32 %v803, %v863
        %v880 = vsub.f32 %v806, %v864
        %v881 = vsub.f32 %v809, %v865
        %v882 = vsub.f32 %v812, %v866
        %v883 = vsub.f32 %v815, %v867
        %v884 = vsub.f32 %v818, %v868
        %v885 = vsub.f32 %v821, %v869
        %v886 = vsub.f32 %v824, %v870
        %v887 = vmul.f32 %v879, 1.442695
        %v888 = vpow.pop %v887
        %v889 = vmul.f32 %v880, 1.442695
        %v890 = vpow.pop %v889
        %v891 = vmul.f32 %v881, 1.442695
        %v892 = vpow.pop %v891
        %v893 = vmul.f32 %v882, 1.442695
        %v894 = vpow.pop %v893
        %v895 = vmul.f32 %v883, 1.442695
        %v896 = vpow.pop %v895
        %v897 = vmul.f32 %v884, 1.442695
        %v898 = vpow.pop %v897
        %v899 = vmul.f32 %v885, 1.442695
        %v900 = vpow.pop %v899
        %v901 = vmul.f32 %v886, 1.442695
        %v902 = vpow.pop %v901
        %911 = vset.pattern.permute.xlu0 0
        %912 = vperm.xlu0 %911, %v888
        %v913 = vpop.permute.xlu0 %912
        %914 = vset.pattern.permute.xlu0 0
        %915 = vperm.xlu0 %914, %v890
        %v916 = vpop.permute.xlu0 %915
        %917 = vset.pattern.permute.xlu0 0
        %918 = vperm.xlu0 %917, %v892
        %v919 = vpop.permute.xlu0 %918
        %920 = vset.pattern.permute.xlu0 0
        %921 = vperm.xlu0 %920, %v894
        %v922 = vpop.permute.xlu0 %921
        %923 = vset.pattern.permute.xlu0 0
        %924 = vperm.xlu0 %923, %v896
        %v925 = vpop.permute.xlu0 %924
        %926 = vset.pattern.permute.xlu0 0
        %927 = vperm.xlu0 %926, %v898
        %v928 = vpop.permute.xlu0 %927
        %929 = vset.pattern.permute.xlu0 0
        %930 = vperm.xlu0 %929, %v900
        %v931 = vpop.permute.xlu0 %930
        %932 = vset.pattern.permute.xlu0 0
        %933 = vperm.xlu0 %932, %v902
        %v934 = vpop.permute.xlu0 %933
        %v935 = vperm.slane %v913, %v834
        %v936 = vperm.slane %v916, %v834
        %v937 = vperm.slane %v919, %v834
        %v938 = vperm.slane %v922, %v834
        %v939 = vperm.slane %v925, %v834
        %v940 = vperm.slane %v928, %v834
        %v941 = vperm.slane %v931, %v834
        %v942 = vperm.slane %v934, %v834
        %v943 = vsel %vm843, %v936, %v935
        %v944 = vsel %vm845, %v937, %v943
        %v945 = vsel %vm847, %v938, %v944
        %v946 = vsel %vm849, %v939, %v945
        %v947 = vsel %vm851, %v940, %v946
        %v948 = vsel %vm853, %v941, %v947
        %v949 = vsel %vm855, %v942, %v948
        %v951 = vsel %vm858, %v949, 0.0
        %952 = vadd.xlane.f32.xlu0 %v951
        %v953 = vpop.xlane.xlu0 %952
        %v955 = vperm.slane %v953, 0
        %v956 = vperm.slane %v953, 1
        %v957 = vperm.slane %v953, 2
        %v958 = vperm.slane %v953, 3
        %v959 = vperm.slane %v953, 4
        %v960 = vperm.slane %v953, 5
        %v961 = vperm.slane %v953, 6
        %v962 = vperm.slane %v953, 7
        %v971 = vrcp.pop %v955
        %v972 = vmul.f32 %v955, %v971
        %v973 = vsub.f32 1.0, %v972
        %v974 = vmul.f32 %v971, %v973
        %v975 = vadd.f32 %v971, %v974
        %vm976 = vweird.f32 %v955
        %vm977 = vweird.f32 %v971
        %vm978 = vmor %vm976, %vm977
        %v979 = vsel %vm978, %v971, %v975
        %v980 = vand.u32 2147483647, %v955
        %vm981 = vcmp.eq.f32.partialorder %v980, 8.507059e+37
        %v982 = vand.u32 %v955, 2147483648
        %v983 = vor.u32 1.1754944e-38, %v982
        %v984 = vsel %vm981, %v983, %v979
        %v985 = vmul.f32 %v888, %v984
        %v986 = vrcp.pop %v956
        %v987 = vmul.f32 %v956, %v986
        %v988 = vsub.f32 1.0, %v987
        %v989 = vmul.f32 %v986, %v988
        %v990 = vadd.f32 %v986, %v989
        %vm991 = vweird.f32 %v956
        %vm992 = vweird.f32 %v986
        %vm993 = vmor %vm991, %vm992
        %v994 = vsel %vm993, %v986, %v990
        %v995 = vand.u32 2147483647, %v956
        %vm996 = vcmp.eq.f32.partialorder %v995, 8.507059e+37
        %v997 = vand.u32 %v956, 2147483648
        %v998 = vor.u32 1.1754944e-38, %v997
        %v999 = vsel %vm996, %v998, %v994
        %v1000 = vmul.f32 %v890, %v999
        %v1001 = vrcp.pop %v957
        %v1002 = vmul.f32 %v957, %v1001
        %v1003 = vsub.f32 1.0, %v1002
        %v1004 = vmul.f32 %v1001, %v1003
        %v1005 = vadd.f32 %v1001, %v1004
        %vm1006 = vweird.f32 %v957
        %vm1007 = vweird.f32 %v1001
        %vm1008 = vmor %vm1006, %vm1007
        %v1009 = vsel %vm1008, %v1001, %v1005
        %v1010 = vand.u32 2147483647, %v957
        %vm1011 = vcmp.eq.f32.partialorder %v1010, 8.507059e+37
        %v1012 = vand.u32 %v957, 2147483648
        %v1013 = vor.u32 1.1754944e-38, %v1012
        %v1014 = vsel %vm1011, %v1013, %v1009
        %v1015 = vmul.f32 %v892, %v1014
        %v1016 = vrcp.pop %v958
        %v1017 = vmul.f32 %v958, %v1016
        %v1018 = vsub.f32 1.0, %v1017
        %v1019 = vmul.f32 %v1016, %v1018
        %v1020 = vadd.f32 %v1016, %v1019
        %vm1021 = vweird.f32 %v958
        %vm1022 = vweird.f32 %v1016
        %vm1023 = vmor %vm1021, %vm1022
        %v1024 = vsel %vm1023, %v1016, %v1020
        %v1025 = vand.u32 2147483647, %v958
        %vm1026 = vcmp.eq.f32.partialorder %v1025, 8.507059e+37
        %v1027 = vand.u32 %v958, 2147483648
        %v1028 = vor.u32 1.1754944e-38, %v1027
        %v1029 = vsel %vm1026, %v1028, %v1024
        %v1030 = vmul.f32 %v894, %v1029
        %v1031 = vrcp.pop %v959
        %v1032 = vmul.f32 %v959, %v1031
        %v1033 = vsub.f32 1.0, %v1032
        %v1034 = vmul.f32 %v1031, %v1033
        %v1035 = vadd.f32 %v1031, %v1034
        %vm1036 = vweird.f32 %v959
        %vm1037 = vweird.f32 %v1031
        %vm1038 = vmor %vm1036, %vm1037
        %v1039 = vsel %vm1038, %v1031, %v1035
        %v1040 = vand.u32 2147483647, %v959
        %vm1041 = vcmp.eq.f32.partialorder %v1040, 8.507059e+37
        %v1042 = vand.u32 %v959, 2147483648
        %v1043 = vor.u32 1.1754944e-38, %v1042
        %v1044 = vsel %vm1041, %v1043, %v1039
        %v1045 = vmul.f32 %v896, %v1044
        %v1046 = vrcp.pop %v960
        %v1047 = vmul.f32 %v960, %v1046
        %v1048 = vsub.f32 1.0, %v1047
        %v1049 = vmul.f32 %v1046, %v1048
        %v1050 = vadd.f32 %v1046, %v1049
        %vm1051 = vweird.f32 %v960
        %vm1052 = vweird.f32 %v1046
        %vm1053 = vmor %vm1051, %vm1052
        %v1054 = vsel %vm1053, %v1046, %v1050
        %v1055 = vand.u32 2147483647, %v960
        %vm1056 = vcmp.eq.f32.partialorder %v1055, 8.507059e+37
        %v1057 = vand.u32 %v960, 2147483648
        %v1058 = vor.u32 1.1754944e-38, %v1057
        %v1059 = vsel %vm1056, %v1058, %v1054
        %v1060 = vmul.f32 %v898, %v1059
        %v1061 = vrcp.pop %v961
        %v1062 = vmul.f32 %v961, %v1061
        %v1063 = vsub.f32 1.0, %v1062
        %v1064 = vmul.f32 %v1061, %v1063
        %v1065 = vadd.f32 %v1061, %v1064
        %vm1066 = vweird.f32 %v961
        %vm1067 = vweird.f32 %v1061
        %vm1068 = vmor %vm1066, %vm1067
        %v1069 = vsel %vm1068, %v1061, %v1065
        %v1070 = vand.u32 2147483647, %v961
        %vm1071 = vcmp.eq.f32.partialorder %v1070, 8.507059e+37
        %v1072 = vand.u32 %v961, 2147483648
        %v1073 = vor.u32 1.1754944e-38, %v1072
        %v1074 = vsel %vm1071, %v1073, %v1069
        %v1075 = vmul.f32 %v900, %v1074
        %v1076 = vrcp.pop %v962
        %v1077 = vmul.f32 %v962, %v1076
        %v1078 = vsub.f32 1.0, %v1077
        %v1079 = vmul.f32 %v1076, %v1078
        %v1080 = vadd.f32 %v1076, %v1079
        %vm1081 = vweird.f32 %v962
        %vm1082 = vweird.f32 %v1076
        %vm1083 = vmor %vm1081, %vm1082
        %v1084 = vsel %vm1083, %v1076, %v1080
        %v1085 = vand.u32 2147483647, %v962
        %vm1086 = vcmp.eq.f32.partialorder %v1085, 8.507059e+37
        %v1087 = vand.u32 %v962, 2147483648
        %v1088 = vor.u32 1.1754944e-38, %v1087
        %v1089 = vsel %vm1086, %v1088, %v1084
        %v1090 = vmul.f32 %v902, %v1089
        %v1091 = vld [vmem:[%s583] sm:$0xff]
        %v1092 = vld [vmem:[%s583 + $0x8] sm:$0xff]
        %v1093 = vld [vmem:[%s583 + $0x10] sm:$0xff]
        %v1094 = vld [vmem:[%s583 + $0x18] sm:$0xff]
        %v1095 = vld [vmem:[%s583 + $0x20] sm:$0xff]
        %v1096 = vld [vmem:[%s583 + $0x28] sm:$0xff]
        %v1097 = vld [vmem:[%s583 + $0x30] sm:$0xff]
        %v1098 = vld [vmem:[%s583 + $0x38] sm:$0xff]
        %1100 = vset.pattern.permute.xlu0 0
        %1101 = vperm.xlu0 %1100, %v985
        %v1102 = vpop.permute.xlu0 %1101
        %1105 = vset.pattern.permute.xlu0 0
        %1106 = vperm.xlu0 %1105, %v1000
        %v1107 = vpop.permute.xlu0 %1106
        %1110 = vset.pattern.permute.xlu0 0
        %1111 = vperm.xlu0 %1110, %v1015
        %v1112 = vpop.permute.xlu0 %1111
        %1115 = vset.pattern.permute.xlu0 0
        %1116 = vperm.xlu0 %1115, %v1030
        %v1117 = vpop.permute.xlu0 %1116
        %1120 = vset.pattern.permute.xlu0 0
        %1121 = vperm.xlu0 %1120, %v1045
        %v1122 = vpop.permute.xlu0 %1121
        %1125 = vset.pattern.permute.xlu0 0
        %1126 = vperm.xlu0 %1125, %v1060
        %v1127 = vpop.permute.xlu0 %1126
        %1130 = vset.pattern.permute.xlu0 0
        %1131 = vperm.xlu0 %1130, %v1075
        %v1132 = vpop.permute.xlu0 %1131
        %1135 = vset.pattern.permute.xlu0 0
        %1136 = vperm.xlu0 %1135, %v1090
        %v1137 = vpop.permute.xlu0 %1136
        %v1139 = vmul.f32 %v1102, %v1091
        %v1140 = vmul.f32 %v1107, %v1092
        %v1141 = vmul.f32 %v1112, %v1093
        %v1142 = vmul.f32 %v1117, %v1094
        %v1143 = vmul.f32 %v1122, %v1095
        %v1144 = vmul.f32 %v1127, %v1096
        %v1145 = vmul.f32 %v1132, %v1097
        %v1146 = vmul.f32 %v1137, %v1098
        %v1147 = vsel %vm717, %v1139, 0.0
        %v1148 = vrot.slane %v1147, 4
        %v1149 = vadd.f32 %v1147, %v1148
        %v1150 = vrot.slane %v1149, 2
        %v1151 = vadd.f32 %v1149, %v1150
        %v1152 = vrot.slane %v1151, 1
        %v1153 = vadd.f32 %v1151, %v1152
        %v1154 = vsel %vm717, %v1140, 0.0
        %v1155 = vrot.slane %v1154, 4
        %v1156 = vadd.f32 %v1154, %v1155
        %v1157 = vrot.slane %v1156, 2
        %v1158 = vadd.f32 %v1156, %v1157
        %v1159 = vrot.slane %v1158, 1
        %v1160 = vadd.f32 %v1158, %v1159
        %v1161 = vsel %vm717, %v1141, 0.0
        %v1162 = vrot.slane %v1161, 4
        %v1163 = vadd.f32 %v1161, %v1162
        %v1164 = vrot.slane %v1163, 2
        %v1165 = vadd.f32 %v1163, %v1164
        %v1166 = vrot.slane %v1165, 1
        %v1167 = vadd.f32 %v1165, %v1166
        %v1168 = vsel %vm717, %v1142, 0.0
        %v1169 = vrot.slane %v1168, 4
        %v1170 = vadd.f32 %v1168, %v1169
        %v1171 = vrot.slane %v1170, 2
        %v1172 = vadd.f32 %v1170, %v1171
        %v1173 = vrot.slane %v1172, 1
        %v1174 = vadd.f32 %v1172, %v1173
        %v1175 = vsel %vm717, %v1143, 0.0
        %v1176 = vrot.slane %v1175, 4
        %v1177 = vadd.f32 %v1175, %v1176
        %v1178 = vrot.slane %v1177, 2
        %v1179 = vadd.f32 %v1177, %v1178
        %v1180 = vrot.slane %v1179, 1
        %v1181 = vadd.f32 %v1179, %v1180
        %v1182 = vsel %vm717, %v1144, 0.0
        %v1183 = vrot.slane %v1182, 4
        %v1184 = vadd.f32 %v1182, %v1183
        %v1185 = vrot.slane %v1184, 2
        %v1186 = vadd.f32 %v1184, %v1185
        %v1187 = vrot.slane %v1186, 1
        %v1188 = vadd.f32 %v1186, %v1187
        %v1189 = vsel %vm717, %v1145, 0.0
        %v1190 = vrot.slane %v1189, 4
        %v1191 = vadd.f32 %v1189, %v1190
        %v1192 = vrot.slane %v1191, 2
        %v1193 = vadd.f32 %v1191, %v1192
        %v1194 = vrot.slane %v1193, 1
        %v1195 = vadd.f32 %v1193, %v1194
        %v1196 = vsel %vm717, %v1146, 0.0
        %v1197 = vrot.slane %v1196, 4
        %v1198 = vadd.f32 %v1196, %v1197
        %v1199 = vrot.slane %v1198, 2
        %v1200 = vadd.f32 %v1198, %v1199
        %v1201 = vrot.slane %v1200, 1
        %v1202 = vadd.f32 %v1200, %v1201
        %v1203 = vld [vmem:[#allocation13] sm:$0xff]
        %v1204 = vld [vmem:[#allocation13 + $0x8] sm:$0xff]
        %v1205 = vld [vmem:[#allocation13 + $0x10] sm:$0xff]
        %v1206 = vld [vmem:[#allocation13 + $0x18] sm:$0xff]
        %v1207 = vld [vmem:[%s702] sm:$0xff]
        %v1208 = vld [vmem:[#allocation14] sm:$0xff]
        %v1210 = vsel %vm858, %v1207, 0
        %1212 = vmatpush.msra.mxu0 0.0
        %1213 = vmatpush.msra.mxu0 0.0
        %1214 = vmatpush.msra.mxu0 0.0
        %1215 = vmatpush.msra.mxu0 0.0
        %1216 = vmatpush.msra.mxu0 0.0
        %1217 = vmatpush.msra.mxu0 0.0
        %1218 = vmatpush.msra.mxu0 0.0
        %1219 = vmatpush.msra.mxu0 0.0
        %1220 = vmatpush.msra.mxu0 0.0
        %1221 = vmatpush.msra.mxu0 0.0
        %1222 = vmatpush.msra.mxu0 0.0
        %1223 = vmatpush.msra.mxu0 0.0
        %1224 = vmatpush.msra.mxu0 0.0
        %1225 = vmatpush.msra.mxu0 0.0
        %1226 = vmatpush.msra.mxu0 0.0
        %1227 = vmatpush.msra.mxu0 %v1208
        %1228 = vmatmul.f32.gmra.mxu0 %v1210
        %v1229 = vpop.f32.mrf.mxu0
        %v1230 = vadd.f32 0.0, %v1229
        %1231 = vdwg.mxu0
        %v1240 = vsel %vm843, %v1160, %v1153
        %v1241 = vsel %vm845, %v1167, %v1240
        %v1242 = vsel %vm847, %v1174, %v1241
        %v1243 = vsel %vm849, %v1181, %v1242
        %v1244 = vsel %vm851, %v1188, %v1243
        %v1245 = vsel %vm853, %v1195, %v1244
        %v1246 = vsel %vm855, %v1202, %v1245
        %v1247 = vsel %vm717, %v1246, 0
        %1249 = vmatpush.msra.mxu0 0.0
        %1250 = vmatpush.msra.mxu0 0.0
        %1251 = vmatpush.msra.mxu0 0.0
        %1252 = vmatpush.msra.mxu0 0.0
        %1253 = vmatpush.msra.mxu0 0.0
        %1254 = vmatpush.msra.mxu0 0.0
        %1255 = vmatpush.msra.mxu0 0.0
        %1256 = vmatpush.msra.mxu0 0.0
        %1257 = vmatpush.msra.mxu0 0.0
        %1258 = vmatpush.msra.mxu0 0.0
        %1259 = vmatpush.msra.mxu0 0.0
        %1260 = vmatpush.msra.mxu0 0.0
        %1261 = vmatpush.msra.mxu0 %v1206
        %1262 = vmatpush.msra.mxu0 %v1205
        %1263 = vmatpush.msra.mxu0 %v1204
        %1264 = vmatpush.msra.mxu0 %v1203
        %1265 = vmatmul.f32.gmra.mxu0 %v1247
        %v1266 = vpop.f32.mrf.mxu0
        %v1267 = vadd.f32 %v1230, %v1266
        %1268 = vdwg.mxu0
        %v1269 = vld [vmem:[%s10] sm:$0xff]
        %v1270 = vld [vmem:[%s10 + $0x8] sm:$0xff]
        %v1271 = vld [vmem:[%s10 + $0x10] sm:$0xff]
        %v1272 = vld [vmem:[%s10 + $0x18] sm:$0xff]
        %1273 = vmatpush.msra.mxu0 0.0
        %1274 = vmatpush.msra.mxu0 0.0
        %1275 = vmatpush.msra.mxu0 0.0
        %1276 = vmatpush.msra.mxu0 0.0
        %1277 = vmatpush.msra.mxu0 0.0
        %1278 = vmatpush.msra.mxu0 0.0
        %1279 = vmatpush.msra.mxu0 0.0
        %1280 = vmatpush.msra.mxu0 0.0
        %1281 = vmatpush.msra.mxu0 0.0
        %1282 = vmatpush.msra.mxu0 0.0
        %1283 = vmatpush.msra.mxu0 0.0
        %1284 = vmatpush.msra.mxu0 0.0
        %1285 = vmatpush.msra.mxu0 %v1272
        %1286 = vmatpush.msra.mxu0 %v1271
        %1287 = vmatpush.msra.mxu0 %v1270
        %1288 = vmatpush.msra.mxu0 %v1269
        %1289 = vmatmul.f32.gmra.mxu0 %v719
        %v1290 = vpop.f32.mrf.mxu0
        %v1291 = vadd.f32 0.0, %v1290
        %1292 = vdwg.mxu0
        %v1293 = vadd.f32 %v1267, %v1291
        %v1294 = vld [vmem:[%s11] sm:$0x1]
        %v1296 = vperm.slane %v1294, 0
        %v1298 = vadd.f32 %v1293, %v1296
        %v1299 = vxor.u32 %v1298, 2147483648
        %v1300 = vmul.f32 %v1299, 1.442695
        %v1301 = vpow.pop %v1300
        %v1302 = vadd.f32 %v1301, 1.0
        %v1303 = vrcp.pop %v1302
        %v1304 = vmul.f32 %v1302, %v1303
        %v1305 = vsub.f32 1.0, %v1304
        %v1306 = vmul.f32 %v1303, %v1305
        %v1307 = vadd.f32 %v1303, %v1306
        %vm1308 = vweird.f32 %v1302
        %vm1309 = vweird.f32 %v1303
        %vm1310 = vmor %vm1308, %vm1309
        %v1311 = vsel %vm1310, %v1303, %v1307
        %v1312 = vand.u32 2147483647, %v1302
        %vm1313 = vcmp.eq.f32.partialorder %v1312, 8.507059e+37
        %v1314 = vand.u32 %v1302, 2147483648
        %v1315 = vor.u32 1.1754944e-38, %v1314
        %v1316 = vsel %vm1313, %v1315, %v1311
        %v1317 = vmul.f32 1.0, %v1316
        %v1318 = vtanh.pop %v1298
        %1320 = vrot.lane.b32.xlu0 %v708, 32
        %v1321 = vpop.permute.xlu0 %1320
        %v1323 = vmul.f32 %v1317, %v1321
        %1325 = vrot.lane.b32.xlu0 %v1318, 64
        %v1326 = vpop.permute.xlu0 %1325
        %v1328 = vmul.f32 %v1317, %v1326
        %1330 = vrot.lane.b32.xlu0 %v1328, 32
        %v1331 = vpop.permute.xlu0 %1330
        %v1333 = vadd.f32 %v1323, %v1331
        %v1334 = vtanh.pop %v1333
        %1336 = vrot.lane.b32.xlu0 %v1334, 64
        %v1337 = vpop.permute.xlu0 %1336
        %v1339 = vmul.f32 %v1317, %v1337
        %1341 = vrot.lane.b32.xlu0 %v1339, 32
        %v1342 = vpop.permute.xlu0 %1341
        %1344 = vst.msk [vmem:[%s683] sm:$0xff] %vm717, %v1342
        %1346 = vrot.lane.b32.xlu0 %v1333, 96
        %v1347 = vpop.permute.xlu0 %1346
        %1349 = vst.msk [vmem:[%s690] sm:$0xff] %vm717, %v1347
        %v1350 = vperm.slane %v1102, %v834
        %v1351 = vperm.slane %v1107, %v834
        %v1352 = vperm.slane %v1112, %v834
        %v1353 = vperm.slane %v1117, %v834
        %v1354 = vperm.slane %v1122, %v834
        %v1355 = vperm.slane %v1127, %v834
        %v1356 = vperm.slane %v1132, %v834
        %v1357 = vperm.slane %v1137, %v834
        %v1358 = vsel %vm843, %v1351, %v1350
        %v1359 = vsel %vm845, %v1352, %v1358
        %v1360 = vsel %vm847, %v1353, %v1359
        %v1361 = vsel %vm849, %v1354, %v1360
        %v1362 = vsel %vm851, %v1355, %v1361
        %v1363 = vsel %vm853, %v1356, %v1362
        %v1364 = vsel %vm855, %v1357, %v1363
        %1366 = vst.msk [vmem:[%s706] sm:$0xff] %vm858, %v1364
        %s1367 = sand.u32 %s328, 1
        %s1368 = scalar_lea.sflag [#allocation4], %s1367
        %s1369 = sand.u32 %s328, 1
        %s1370 = smul.addr %s1369, 8
        %s1371 = scalar_lea.vmem [#allocation16], %s1370
        %s1372 = sand.u32 %s354, 1
        %s1373 = scalar_lea.sflag [#allocation18], %s1372
        %s1374 = sand.u32 %s354, 1
        %s1375 = smul.addr %s1374, 8
        %s1376 = scalar_lea.vmem [#allocation17], %s1375
        %p1377 = scmp.lt.s32.totalorder %s43, 1
        %s1378 = scalar_select %p1377, %s43, 1
        %s1379 = smul.addr %s1378, 8
        %s1380 = scalar_lea.vmem %s14, %s1379
        // Predicated region
        $region101: #{tpu_custom_call.1} parent=67 // pred_check
          %p1381 = pneg %p338
        $region102: #{tpu_custom_call.1} parent=67 // pred_check_branch
          %1383 = sbr.rel (%p1381) target = $region104
        $region103: #{tpu_custom_call.1} parent=67 // pred_region
          %1385 = vsyncadd %s1368, 0
          %s1386 = smul.addr %s43, 8
          %s1387 = scalar_lea.hbm %s12, %s1386
          %s1389 = sshll.u32 %s1371, 4
          %s1390 = int_to_ptr.vmem [resolvable:$true] %s1389
          %s1391 = sshll.u32 %s1387, 4
          %s1392 = int_to_ptr.hbm [resolvable:$true] %s1391
          %1394 = dma.vmem_to_hbm [thread:$0]  %s1390, 128, %s1392, %s1368
        $region104: #{tpu_custom_call.1} parent=67 // pred_fallthru
          _
        // Predicated region
        $region105: #{tpu_custom_call.1} parent=67 // pred_check
          %p1395 = pneg %p364
        $region106: #{tpu_custom_call.1} parent=67 // pred_check_branch
          %1397 = sbr.rel (%p1395) target = $region108
        $region107: #{tpu_custom_call.1} parent=67 // pred_region
          %1399 = vsyncadd %s1373, 0
          %s1400 = smul.addr %s43, 8
          %s1401 = scalar_lea.hbm %s13, %s1400
          %s1403 = sshll.u32 %s1376, 4
          %s1404 = int_to_ptr.vmem [resolvable:$true] %s1403
          %s1405 = sshll.u32 %s1401, 4
          %s1406 = int_to_ptr.hbm [resolvable:$true] %s1405
          %1408 = dma.vmem_to_hbm [thread:$0]  %s1404, 128, %s1406, %s1373
        $region108: #{tpu_custom_call.1} parent=67 // pred_fallthru
          _
        // Predicated region
        $region109: #{tpu_custom_call.1} parent=67 // pred_check
          %p1409 = pneg %p390
        $region110: #{tpu_custom_call.1} parent=67 // pred_check_branch
          %1411 = sbr.rel (%p1409) target = $region112
        $region111: #{tpu_custom_call.1} parent=67 // pred_region
          _
        $region112: #{tpu_custom_call.1} parent=67 // pred_fallthru
          _
      $region68: #{tpu_custom_call.1} parent=5 // pred_fallthru
        _
      %p1412 = scmp.le.s32.totalorder 2, %s38
      // Predicated region
      $region113: #{tpu_custom_call.1} parent=5 // pred_check
        %p1413 = pneg %p1412
      $region114: #{tpu_custom_call.1} parent=5 // pred_check_branch
        %1415 = sbr.rel (%p1413) target = $region116
      $region115: #{tpu_custom_call.1} parent=5 // pred_region
        %s1416 = ssub.s32 %s38, 2
        // Predicated region
        $region117: #{tpu_custom_call.1} parent=115 // pred_check
          %p1417 = pneg %p344
        $region118: #{tpu_custom_call.1} parent=115 // pred_check_branch
          %1419 = sbr.rel (%p1417) target = $region120
        $region119: #{tpu_custom_call.1} parent=115 // pred_region
          %s1420 = sand.u32 %s329, 1
          %s1421 = scalar_lea.sflag [#allocation4], %s1420
          %s1422 = sand.u32 %s329, 1
          %s1423 = smul.addr %s1422, 8
          %s1424 = scalar_lea.vmem [#allocation16], %s1423
          %1426 = dma.done %s1421, 128
        $region120: #{tpu_custom_call.1} parent=115 // pred_fallthru
          _
        // Predicated region
        $region121: #{tpu_custom_call.1} parent=115 // pred_check
          %p1427 = pneg %p370
        $region122: #{tpu_custom_call.1} parent=115 // pred_check_branch
          %1429 = sbr.rel (%p1427) target = $region124
        $region123: #{tpu_custom_call.1} parent=115 // pred_region
          %s1430 = sand.u32 %s355, 1
          %s1431 = scalar_lea.sflag [#allocation18], %s1430
          %s1432 = sand.u32 %s355, 1
          %s1433 = smul.addr %s1432, 8
          %s1434 = scalar_lea.vmem [#allocation17], %s1433
          %1436 = dma.done %s1431, 128
        $region124: #{tpu_custom_call.1} parent=115 // pred_fallthru
          _
        // Predicated region
        $region125: #{tpu_custom_call.1} parent=115 // pred_check
          %p1437 = pneg %p396
        $region126: #{tpu_custom_call.1} parent=115 // pred_check_branch
          %1439 = sbr.rel (%p1437) target = $region128
        $region127: #{tpu_custom_call.1} parent=115 // pred_region
          %p1440 = scmp.lt.s32.totalorder %s44, 1
          %s1441 = scalar_select %p1440, %s44, 1
          %s1442 = smul.addr %s1441, 8
          %s1443 = scalar_lea.vmem %s14, %s1442
        $region128: #{tpu_custom_call.1} parent=115 // pred_fallthru
          _
      $region116: #{tpu_custom_call.1} parent=5 // pred_fallthru
        _
    $region6: #{tpu_custom_call.1} parent=1 // loop_footer
      %s42 = sadd.s32 1, %s38
    $region7: #{tpu_custom_call.1} parent=1 // loop_footer_branch
      %37 = sbr.rel target = $region3
    $region8: #{tpu_custom_call.1} parent=1 // loop_exit
      _
    %1444 = vsyncpa [#allocation3], 1
    %s1445 = scalar_lea.sflag [#allocation3], 1
    %1446 = vsyncpa %s1445, 1
    %1447 = vsyncpa [#allocation6], 1
    %s1448 = scalar_lea.sflag [#allocation6], 1
    %1449 = vsyncpa %s1448, 1
    %1450 = vsyncpa [#allocation9], 1
    %s1451 = scalar_lea.sflag [#allocation9], 1
    %1452 = vsyncpa %s1451, 1
    %1453 = vsyncpa [#allocation12], 1
    %1454 = vsyncpa [#allocation15], 1
    %1455 = vsyncpa [#allocation4], 1
    %s1456 = scalar_lea.sflag [#allocation4], 1
    %1457 = vsyncpa %s1456, 1
    %1458 = vsyncpa [#allocation18], 1
    %s1459 = scalar_lea.sflag [#allocation18], 1
    %1460 = vsyncpa %s1459, 1

</llo_original>
